<compile_context>
chip_gen: v7x
topology: tpu7x:2x2x1
jax: 0.10.0
libtpu: 0.0.40
codegen_flags: <defaults>
</compile_context>

<pallas_src>
import jax
import jax.numpy as jnp
from jax.experimental import pallas as pl
from jax.experimental.pallas import tpu as pltpu

EPS = 1e-5
LANE = 128
SUB = 8


def _round_up(x, m):
    return (x + m - 1) // m * m


def _cparams():
    return pltpu.CompilerParams(
        dimension_semantics=("parallel",),
        vmem_limit_bytes=40 * 1024 * 1024,
    )


# ----------------------------- in-kernel helpers --------------------------- #

def _accum_taps(src_ref, w_ref, taps, m_run):
    """Sum of shifted tap matmuls: src[off:off+m_run] @ w[tap], f32 accumulate."""
    acc = None
    for i, off in enumerate(taps):
        win = src_ref[off:off + m_run, :]
        part = jnp.dot(win, w_ref[i], preferred_element_type=jnp.float32)
        acc = part if acc is None else acc + part
    return acc


def _write_stats(st_ref, vals_masked, acc):
    """Row 0: per-channel sum, row 1: per-channel sum of squares (valid only)."""
    st_ref[0:1, :] = jnp.sum(vals_masked, axis=0, keepdims=True)
    st_ref[1:2, :] = jnp.sum(vals_masked * acc, axis=0, keepdims=True)


# ------------------------------- Pallas kernels ---------------------------- #

def _make_conv_kernel(taps, m_run, p0):
    """3x3 (stride 1) conv from an input canvas into an output canvas + stats."""
    def kernel(x_ref, mask_ref, w_ref, y_ref, st_ref):
        acc = _accum_taps(x_ref, w_ref, taps, m_run)
        rm = mask_ref[p0:p0 + m_run, :]
        vals = acc * rm                                   # zero pad/garbage cols
        y_ref[...] = jnp.zeros(y_ref.shape, y_ref.dtype)  # canvas border = 0
        y_ref[p0:p0 + m_run, :] = vals.astype(y_ref.dtype)
        _write_stats(st_ref, vals, acc)
    return kernel


def _make_conv_sc_kernel(taps, m_run, p0):
    """Space-to-depth conv1 (stride-2 block) + fused 1x1 stride-2 shortcut conv."""
    def kernel(x_ref, mask_ref, w_ref, scx_ref, scw_ref,
               y_ref, st_ref, scy_ref, scst_ref):
        rm = mask_ref[p0:p0 + m_run, :]
        acc = _accum_taps(x_ref, w_ref, taps, m_run)
        vals = acc * rm
        y_ref[...] = jnp.zeros(y_ref.shape, y_ref.dtype)
        y_ref[p0:p0 + m_run, :] = vals.astype(y_ref.dtype)
        _write_stats(st_ref, vals, acc)
        sc = jnp.dot(scx_ref[...], scw_ref[...],
                     preferred_element_type=jnp.float32)
        scv = sc * rm
        scy_ref[...] = scv.astype(scy_ref.dtype)
        _write_stats(scst_ref, scv, sc)
    return kernel


def _make_conv_affine_kernel(taps, m_run, p0):
    """conv2: BN1-affine + ReLU fused on the raw y1 canvas, then 9 tap matmuls."""
    def kernel(x_ref, mask_ref, w_ref, s_ref, b_ref, y_ref, st_ref, act_ref):
        act = jnp.maximum(
            x_ref[...].astype(jnp.float32) * s_ref[...] + b_ref[...], 0.0)
        # restore exact zeros at canvas border / padded columns (conv2 padding)
        act_ref[...] = (act * mask_ref[...]).astype(act_ref.dtype)
        acc = _accum_taps(act_ref, w_ref, taps, m_run)
        rm = mask_ref[p0:p0 + m_run, :]
        vals = acc * rm
        y_ref[...] = vals.astype(y_ref.dtype)
        _write_stats(st_ref, vals, acc)
    return kernel


def _make_bn_add_relu_kernel(m_run, sc_off):
    """BN2 apply + (affine-normalized) shortcut add + final ReLU."""
    def kernel(y_ref, s2_ref, b2_ref, sc_ref, ss_ref, bs_ref, o_ref):
        y = y_ref[...].astype(jnp.float32) * s2_ref[...] + b2_ref[...]
        sc = (sc_ref[sc_off:sc_off + m_run, :].astype(jnp.float32)
              * ss_ref[...] + bs_ref[...])
        o_ref[...] = jnp.maximum(y + sc, 0.0)
    return kernel


# ----------------------------- pallas_call wrappers ------------------------ #

def _conv_call(x_flat, mask, w, *, taps, m_run, p0, out_rows):
    n, in_rows, kc = x_flat.shape
    t, _, co = w.shape
    flops = 2 * n * m_run * kc * co * t
    bytes_acc = (x_flat.size * 2 + w.size * 2 + mask.size * 4
                 + n * out_rows * co * 2 + n * 2 * co * 4)
    return pl.pallas_call(
        _make_conv_kernel(taps, m_run, p0),
        out_shape=(jax.ShapeDtypeStruct((n, out_rows, co), jnp.bfloat16),
                   jax.ShapeDtypeStruct((n, 2, co), jnp.float32)),
        grid=(n,),
        in_specs=[pl.BlockSpec((None, in_rows, kc), lambda i: (i, 0, 0)),
                  pl.BlockSpec((mask.shape[0], 1), lambda i: (0, 0)),
                  pl.BlockSpec((t, kc, co), lambda i: (0, 0, 0))],
        out_specs=(pl.BlockSpec((None, out_rows, co), lambda i: (i, 0, 0)),
                   pl.BlockSpec((None, 2, co), lambda i: (i, 0, 0))),
        compiler_params=_cparams(),
        cost_estimate=pl.CostEstimate(flops=flops, transcendentals=0,
                                      bytes_accessed=bytes_acc),
    )(x_flat, mask, w)


def _conv_sc_call(x_flat, mask, w, sc_in, sc_w, *, taps, m_run, p0, out_rows):
    n, in_rows, kc = x_flat.shape
    t, _, co = w.shape
    ksc = sc_in.shape[2]
    flops = 2 * n * m_run * (kc * t + ksc) * co
    bytes_acc = (x_flat.size * 2 + w.size * 2 + sc_in.size * 2 + sc_w.size * 2
                 + mask.size * 4 + n * (out_rows + m_run) * co * 2
                 + n * 4 * co * 4)
    return pl.pallas_call(
        _make_conv_sc_kernel(taps, m_run, p0),
        out_shape=(jax.ShapeDtypeStruct((n, out_rows, co), jnp.bfloat16),
                   jax.ShapeDtypeStruct((n, 2, co), jnp.float32),
                   jax.ShapeDtypeStruct((n, m_run, co), jnp.bfloat16),
                   jax.ShapeDtypeStruct((n, 2, co), jnp.float32)),
        grid=(n,),
        in_specs=[pl.BlockSpec((None, in_rows, kc), lambda i: (i, 0, 0)),
                  pl.BlockSpec((mask.shape[0], 1), lambda i: (0, 0)),
                  pl.BlockSpec((t, kc, co), lambda i: (0, 0, 0)),
                  pl.BlockSpec((None, m_run, ksc), lambda i: (i, 0, 0)),
                  pl.BlockSpec((ksc, co), lambda i: (0, 0))],
        out_specs=(pl.BlockSpec((None, out_rows, co), lambda i: (i, 0, 0)),
                   pl.BlockSpec((None, 2, co), lambda i: (i, 0, 0)),
                   pl.BlockSpec((None, m_run, co), lambda i: (i, 0, 0)),
                   pl.BlockSpec((None, 2, co), lambda i: (i, 0, 0))),
        compiler_params=_cparams(),
        cost_estimate=pl.CostEstimate(flops=flops, transcendentals=0,
                                      bytes_accessed=bytes_acc),
    )(x_flat, mask, w, sc_in, sc_w)


def _conv_affine_call(x_can, mask, w, scale, shift, *, taps, m_run, p0):
    n, in_rows, kc = x_can.shape
    t, _, co = w.shape
    flops = 2 * n * m_run * kc * co * t
    bytes_acc = (x_can.size * 2 + w.size * 2 + mask.size * 4
                 + n * m_run * co * 2 + n * 2 * co * 4)
    return pl.pallas_call(
        _make_conv_affine_kernel(taps, m_run, p0),
        out_shape=(jax.ShapeDtypeStruct((n, m_run, co), jnp.bfloat16),
                   jax.ShapeDtypeStruct((n, 2, co), jnp.float32)),
        grid=(n,),
        in_specs=[pl.BlockSpec((None, in_rows, kc), lambda i: (i, 0, 0)),
                  pl.BlockSpec((mask.shape[0], 1), lambda i: (0, 0)),
                  pl.BlockSpec((t, kc, co), lambda i: (0, 0, 0)),
                  pl.BlockSpec((1, kc), lambda i: (0, 0)),
                  pl.BlockSpec((1, kc), lambda i: (0, 0))],
        out_specs=(pl.BlockSpec((None, m_run, co), lambda i: (i, 0, 0)),
                   pl.BlockSpec((None, 2, co), lambda i: (i, 0, 0))),
        scratch_shapes=[pltpu.VMEM((in_rows, kc), jnp.bfloat16)],
        compiler_params=_cparams(),
        cost_estimate=pl.CostEstimate(flops=flops, transcendentals=0,
                                      bytes_accessed=bytes_acc),
    )(x_can, mask, w, scale, shift)


def _bn_add_relu_call(y2, s2, b2, sc, ss, bs, *, m_run, sc_off):
    n, _, co = y2.shape
    sc_rows, sc_c = sc.shape[1], sc.shape[2]
    return pl.pallas_call(
        _make_bn_add_relu_kernel(m_run, sc_off),
        out_shape=jax.ShapeDtypeStruct((n, m_run, co), jnp.float32),
        grid=(n,),
        in_specs=[pl.BlockSpec((None, m_run, co), lambda i: (i, 0, 0)),
                  pl.BlockSpec((1, co), lambda i: (0, 0)),
                  pl.BlockSpec((1, co), lambda i: (0, 0)),
                  pl.BlockSpec((None, sc_rows, sc_c), lambda i: (i, 0, 0)),
                  pl.BlockSpec((1, sc_c), lambda i: (0, 0)),
                  pl.BlockSpec((1, sc_c), lambda i: (0, 0))],
        out_specs=pl.BlockSpec((None, m_run, co), lambda i: (i, 0, 0)),
        compiler_params=_cparams(),
    )(y2, s2, b2, sc, ss, bs)


# ------------------------------- JAX glue ---------------------------------- #

def _pad1(a, n):
    a = a.astype(jnp.float32).reshape(-1)
    return jnp.pad(a, (0, n - a.shape[0]))


def _bn_affine(stats, count, gamma_p, beta_p):
    """Global batch stats from per-image partials; fold BN into scale/shift."""
    tot = stats.sum(axis=0)                      # (2, Cp)
    mu = tot[0] / count
    var = jnp.maximum(tot[1] / count - mu * mu, 0.0)
    scale = gamma_p * jax.lax.rsqrt(var + EPS)
    shift = beta_p - mu * scale
    return scale.reshape(1, -1), shift.reshape(1, -1)


def basic_block_forward(x_nchw, params):
    """Pallas implementation of BasicBlock.forward; input/output are NCHW."""
    x = jnp.transpose(x_nchw, (0, 2, 3, 1)).astype(jnp.float32)   # -> NHWC
    n, h, w, cin = x.shape
    cout = params["w1"].shape[-1]
    stride = cout // cin
    ho = (h + 2 - 3) // stride + 1
    wo = (w + 2 - 3) // stride + 1
    cop = _round_up(cout, LANE)
    cinp = _round_up(cin, LANE)

    # Output-canvas geometry (shared by conv1's output and conv2's input):
    # image of (ho, wo) sits at rows/cols [1:ho+1, 1:wo+1] of an (hc, wc) grid.
    wc = _round_up(wo + 2, SUB)
    hc = ho + 2
    canvas_rows = hc * wc
    p0 = wc + 1                                  # flat index of pixel (0, 0)
    m_run = (ho - 1) * wc + wo                   # contiguous run of outputs
    count = float(n * ho * wo)
    taps3 = [dy * wc + dx for dy in range(3) for dx in range(3)]

    pidx = jnp.arange(canvas_rows, dtype=jnp.int32)
    row, col = pidx // wc, pidx % wc
    mask = (((row >= 1) & (row <= ho) & (col >= 1) & (col <= wo))
            .astype(jnp.float32).reshape(canvas_rows, 1))

    g1 = _pad1(params["g1"], cop)
    b1 = _pad1(params["b1"], cop)
    g2 = _pad1(params["g2"], cop)
    b2 = _pad1(params["b2"], cop)

    if stride == 1:
        # conv1 input canvas == output-canvas geometry (stride 1).
        x_can = jnp.pad(x, ((0, 0), (1, hc - h - 1), (1, wc - w - 1),
                            (0, cinp - cin)))
        x_can = x_can.reshape(n, canvas_rows, cinp).astype(jnp.bfloat16)
        w1 = jnp.pad(params["w1"].reshape(9, cin, cout),
                     ((0, 0), (0, cinp - cin),
                      (0, cop - cout))).astype(jnp.bfloat16)
        y1_can, st1 = _conv_call(x_can, mask, w1, taps=taps3, m_run=m_run,
                                 p0=p0, out_rows=canvas_rows)
        sc_src, sc_off = x_can, p0               # identity shortcut (bf16)
        sc_scale = jnp.ones((1, cop), jnp.float32)
        sc_shift = jnp.zeros((1, cop), jnp.float32)
    else:
        # Space-to-depth: stride-2 3x3 conv == stride-1 2x2 conv on phase stack.
        xp = jnp.pad(x, ((0, 0), (1, 1), (1, 1), (0, 0)))
        hq, wq = ho + 1, wo + 1
        phases = []
        for a in range(2):
            for b in range(2):
                ph = xp[:, a::2, b::2, :]
                ph = jnp.pad(ph, ((0, 0), (0, hq - ph.shape[1]),
                                  (0, wq - ph.shape[2]), (0, 0)))
                phases.append(ph)
        xs = jnp.concatenate(phases, axis=-1)                 # (n, hq, wq, 4cin)
        ks = 4 * cin
        ksp = _round_up(ks, LANE)
        xs = jnp.pad(xs, ((0, 0), (0, 0), (0, wc - wq), (0, ksp - ks)))
        xs = xs.reshape(n, hq * wc, ksp).astype(jnp.bfloat16)
        w1_hwio = params["w1"]
        w1s = jnp.zeros((4, ksp, cop), jnp.float32)
        for i in range(2):
            for j in range(2):
                for a in range(2):
                    for b in range(2):
                        dy, dx = 2 * i + a, 2 * j + b
                        if dy < 3 and dx < 3:
                            blk = (a * 2 + b) * cin
                            w1s = w1s.at[i * 2 + j, blk:blk + cin,
                                         :cout].set(w1_hwio[dy, dx])
        w1s = w1s.astype(jnp.bfloat16)
        taps2 = [i * wc + j for i in range(2) for j in range(2)]
        # 1x1 stride-2 shortcut conv, fused into the conv1 kernel.
        sc_img = x[:, ::2, ::2, :]                            # (n, ho, wo, cin)
        sc_in = jnp.pad(sc_img, ((0, 0), (0, 0), (0, wc - wo),
                                 (0, cinp - cin)))
        sc_in = sc_in.reshape(n, ho * wc, cinp)[:, :m_run, :].astype(
            jnp.bfloat16)
        wd = jnp.pad(params["wd"].reshape(cin, cout),
                     ((0, cinp - cin), (0, cop - cout))).astype(jnp.bfloat16)
        y1_can, st1, sc_run, stsc = _conv_sc_call(
            xs, mask, w1s, sc_in, wd, taps=taps2, m_run=m_run, p0=p0,
            out_rows=canvas_rows)
        sc_scale, sc_shift = _bn_affine(stsc, count, _pad1(params["gd"], cop),
                                        _pad1(params["bd"], cop))
        sc_src, sc_off = sc_run, 0

    scale1, shift1 = _bn_affine(st1, count, g1, b1)

    # conv2 (3x3 stride 1) with fused BN1-affine + ReLU on its input canvas.
    w2 = jnp.pad(params["w2"].reshape(9, cout, cout),
                 ((0, 0), (0, cop - cout),
                  (0, cop - cout))).astype(jnp.bfloat16)
    y2_run, st2 = _conv_affine_call(y1_can, mask, w2, scale1, shift1,
                                    taps=taps3, m_run=m_run, p0=p0)
    scale2, shift2 = _bn_affine(st2, count, g2, b2)

    out_run = _bn_add_relu_call(y2_run, scale2, shift2, sc_src, sc_scale,
                                sc_shift, m_run=m_run, sc_off=sc_off)

    out = jnp.pad(out_run, ((0, 0), (0, ho * wc - m_run), (0, 0)))
    out = out.reshape(n, ho, wc, cop)[:, :, :wo, :cout]
    return jnp.transpose(out, (0, 3, 1, 2))                   # -> NCHW


# ------------------------- deterministic parameters ------------------------ #

def init_params(key, inplanes, outplanes):
    stride = outplanes // inplanes
    ks = jax.random.split(key, 9)
    p = {
        "w1": 0.1 * jax.random.normal(ks[0], (3, 3, inplanes, outplanes),
                                      jnp.float32),
        "g1": 1.0 + 0.1 * jax.random.normal(ks[1], (outplanes,), jnp.float32),
        "b1": 0.1 * jax.random.normal(ks[2], (outplanes,), jnp.float32),
        "w2": 0.1 * jax.random.normal(ks[3], (3, 3, outplanes, outplanes),
                                      jnp.float32),
        "g2": 1.0 + 0.1 * jax.random.normal(ks[4], (outplanes,), jnp.float32),
        "b2": 0.1 * jax.random.normal(ks[5], (outplanes,), jnp.float32),
    }
    if stride == 2:
        p["wd"] = 0.1 * jax.random.normal(ks[6], (1, 1, inplanes, outplanes),
                                          jnp.float32)
        p["gd"] = 1.0 + 0.1 * jax.random.normal(ks[7], (outplanes,),
                                                jnp.float32)
        p["bd"] = 0.1 * jax.random.normal(ks[8], (outplanes,), jnp.float32)
    return p


# ---------------------------- pure-JAX reference --------------------------- #

def reference_forward(x_nchw, params):
    x = jnp.transpose(x_nchw, (0, 2, 3, 1)).astype(jnp.float32)
    cin = x.shape[-1]
    cout = params["w1"].shape[-1]
    stride = cout // cin
    dn = ("NHWC", "HWIO", "NHWC")

    def bn(y, g, b):
        mu = jnp.mean(y, axis=(0, 1, 2), keepdims=True)
        var = jnp.mean((y - mu) ** 2, axis=(0, 1, 2), keepdims=True)
        return ((y - mu) * jax.lax.rsqrt(var + EPS) * g.reshape(1, 1, 1, -1)
                + b.reshape(1, 1, 1, -1))

    y = jax.lax.conv_general_dilated(x, params["w1"], (stride, stride),
                                     ((1, 1), (1, 1)), dimension_numbers=dn)
    y = jnp.maximum(bn(y, params["g1"], params["b1"]), 0.0)
    y2 = jax.lax.conv_general_dilated(y, params["w2"], (1, 1),
                                      ((1, 1), (1, 1)), dimension_numbers=dn)
    y2 = bn(y2, params["g2"], params["b2"])
    if stride == 2:
        sc = jax.lax.conv_general_dilated(x, params["wd"], (2, 2),
                                          ((0, 0), (0, 0)),
                                          dimension_numbers=dn)
        sc = bn(sc, params["gd"], params["bd"])
    else:
        sc = x
    out = jnp.maximum(y2 + sc, 0.0)
    return jnp.transpose(out, (0, 3, 1, 2))


# ----------------------------------- main ----------------------------------- #

if __name__ == "__main__":
    key = jax.random.PRNGKey(0)
    kx, kp, kx2, kp2 = jax.random.split(key, 4)
    fwd = jax.jit(basic_block_forward)

    # Downsample block (stride 2, shortcut = 1x1 conv + BN).
    x = jax.random.normal(kx, (2, 4, 16, 16), jnp.float32)
    params = init_params(kp, 4, 8)
    out = jax.block_until_ready(fwd(x, params))
    assert out.shape == (2, 8, 8, 8), out.shape
    ref = reference_forward(x, params)
    err = float(jnp.max(jnp.abs(out - ref)))
    # bf16 MXU inputs / bf16 intermediates (f32 accumulation) -> loose tol.
    assert err < 1e-1, f"stride-2 mismatch vs reference: max abs err {err}"

    # Identity block (stride 1, identity shortcut).
    x2 = jax.random.normal(kx2, (2, 8, 16, 16), jnp.float32)
    params2 = init_params(kp2, 8, 8)
    out2 = jax.block_until_ready(fwd(x2, params2))
    assert out2.shape == (2, 8, 16, 16), out2.shape
    ref2 = reference_forward(x2, params2)
    err2 = float(jnp.max(jnp.abs(out2 - ref2)))
    assert err2 < 1e-1, f"stride-1 mismatch vs reference: max abs err {err2}"

    print("KERNEL_OK")
</pallas_src>

<mosaic_0001>
module attributes {stable_mosaic.version = 11 : i64} {
  func.func @kernel(%arg0: i32, %arg1: memref<1x144x128xbf16, #tpu.memory_space<vmem>>, %arg2: memref<160x1xf32, #tpu.memory_space<vmem>>, %arg3: memref<4x128x128xbf16, #tpu.memory_space<vmem>>, %arg4: memref<1x120x128xbf16, #tpu.memory_space<vmem>>, %arg5: memref<128x128xbf16, #tpu.memory_space<vmem>>, %arg6: memref<1x160x128xbf16, #tpu.memory_space<vmem>>, %arg7: memref<1x2x128xf32, #tpu.memory_space<vmem>>, %arg8: memref<1x120x128xbf16, #tpu.memory_space<vmem>>, %arg9: memref<1x2x128xf32, #tpu.memory_space<vmem>>) attributes {dimension_semantics = [#tpu.dimension_semantics<parallel>], iteration_bounds = array<i64: 2>, scalar_prefetch = 0 : i64, scratch_operands = 0 : i64, tpu.core_type = #tpu.core_type<tc>, window_params = [{transform_indices = @transform_0, window_bounds = array<i64: 1, 144, 128>}, {pipeline_mode = #tpu.pipeline_mode<synchronous>, transform_indices = @transform_1, window_bounds = array<i64: 160, 1>}, {pipeline_mode = #tpu.pipeline_mode<synchronous>, transform_indices = @transform_2, window_bounds = array<i64: 4, 128, 128>}, {transform_indices = @transform_3, window_bounds = array<i64: 1, 120, 128>}, {pipeline_mode = #tpu.pipeline_mode<synchronous>, transform_indices = @transform_4, window_bounds = array<i64: 128, 128>}, {transform_indices = @transform_5, window_bounds = array<i64: 1, 160, 128>}, {transform_indices = @transform_6, window_bounds = array<i64: 1, 2, 128>}, {transform_indices = @transform_7, window_bounds = array<i64: 1, 120, 128>}, {transform_indices = @transform_8, window_bounds = array<i64: 1, 2, 128>}]} {
    %c17 = arith.constant 17 : index
    %c0 = arith.constant 0 : index
    %0 = vector.load %arg2[%c17, %c0] : memref<160x1xf32, #tpu.memory_space<vmem>>, vector<120x1xf32>
    %c0_0 = arith.constant 0 : index
    %c0_1 = arith.constant 0 : index
    %c0_2 = arith.constant 0 : index
    %1 = vector.load %arg1[%c0_0, %c0_1, %c0_2] : memref<1x144x128xbf16, #tpu.memory_space<vmem>>, vector<1x120x128xbf16>
    %2 = vector.shape_cast %1 : vector<1x120x128xbf16> to vector<120x128xbf16>
    %c0_3 = arith.constant 0 : index
    %c0_4 = arith.constant 0 : index
    %c0_5 = arith.constant 0 : index
    %3 = vector.load %arg3[%c0_3, %c0_4, %c0_5] : memref<4x128x128xbf16, #tpu.memory_space<vmem>>, vector<1x128x128xbf16>
    %4 = vector.shape_cast %3 : vector<1x128x128xbf16> to vector<128x128xbf16>
    %cst = arith.constant dense<0.000000e+00> : vector<120x128xf32>
    %5 = tpu.matmul %2, %4, %cst {dimension_numbers = #tpu.dot_dimension_numbers<[1], [0], [0], [1], [0, 0, 1, 1], [], []>} : vector<120x128xbf16>, vector<128x128xbf16>, vector<120x128xf32> -> vector<120x128xf32>
    %c0_6 = arith.constant 0 : index
    %c1 = arith.constant 1 : index
    %c0_7 = arith.constant 0 : index
    %6 = vector.load %arg1[%c0_6, %c1, %c0_7] : memref<1x144x128xbf16, #tpu.memory_space<vmem>>, vector<1x120x128xbf16>
    %7 = vector.shape_cast %6 : vector<1x120x128xbf16> to vector<120x128xbf16>
    %c1_8 = arith.constant 1 : index
    %c0_9 = arith.constant 0 : index
    %c0_10 = arith.constant 0 : index
    %8 = vector.load %arg3[%c1_8, %c0_9, %c0_10] : memref<4x128x128xbf16, #tpu.memory_space<vmem>>, vector<1x128x128xbf16>
    %9 = vector.shape_cast %8 : vector<1x128x128xbf16> to vector<128x128xbf16>
    %cst_11 = arith.constant dense<0.000000e+00> : vector<120x128xf32>
    %10 = tpu.matmul %7, %9, %cst_11 {dimension_numbers = #tpu.dot_dimension_numbers<[1], [0], [0], [1], [0, 0, 1, 1], [], []>} : vector<120x128xbf16>, vector<128x128xbf16>, vector<120x128xf32> -> vector<120x128xf32>
    %11 = arith.addf %5, %10 : vector<120x128xf32>
    %c0_12 = arith.constant 0 : index
    %c16 = arith.constant 16 : index
    %c0_13 = arith.constant 0 : index
    %12 = vector.load %arg1[%c0_12, %c16, %c0_13] : memref<1x144x128xbf16, #tpu.memory_space<vmem>>, vector<1x120x128xbf16>
    %13 = vector.shape_cast %12 : vector<1x120x128xbf16> to vector<120x128xbf16>
    %c2 = arith.constant 2 : index
    %c0_14 = arith.constant 0 : index
    %c0_15 = arith.constant 0 : index
    %14 = vector.load %arg3[%c2, %c0_14, %c0_15] : memref<4x128x128xbf16, #tpu.memory_space<vmem>>, vector<1x128x128xbf16>
    %15 = vector.shape_cast %14 : vector<1x128x128xbf16> to vector<128x128xbf16>
    %cst_16 = arith.constant dense<0.000000e+00> : vector<120x128xf32>
    %16 = tpu.matmul %13, %15, %cst_16 {dimension_numbers = #tpu.dot_dimension_numbers<[1], [0], [0], [1], [0, 0, 1, 1], [], []>} : vector<120x128xbf16>, vector<128x128xbf16>, vector<120x128xf32> -> vector<120x128xf32>
    %17 = arith.addf %11, %16 : vector<120x128xf32>
    %c0_17 = arith.constant 0 : index
    %c17_18 = arith.constant 17 : index
    %c0_19 = arith.constant 0 : index
    %18 = vector.load %arg1[%c0_17, %c17_18, %c0_19] : memref<1x144x128xbf16, #tpu.memory_space<vmem>>, vector<1x120x128xbf16>
    %19 = vector.shape_cast %18 : vector<1x120x128xbf16> to vector<120x128xbf16>
    %c3 = arith.constant 3 : index
    %c0_20 = arith.constant 0 : index
    %c0_21 = arith.constant 0 : index
    %20 = vector.load %arg3[%c3, %c0_20, %c0_21] : memref<4x128x128xbf16, #tpu.memory_space<vmem>>, vector<1x128x128xbf16>
    %21 = vector.shape_cast %20 : vector<1x128x128xbf16> to vector<128x128xbf16>
    %cst_22 = arith.constant dense<0.000000e+00> : vector<120x128xf32>
    %22 = tpu.matmul %19, %21, %cst_22 {dimension_numbers = #tpu.dot_dimension_numbers<[1], [0], [0], [1], [0, 0, 1, 1], [], []>} : vector<120x128xbf16>, vector<128x128xbf16>, vector<120x128xf32> -> vector<120x128xf32>
    %23 = arith.addf %17, %22 : vector<120x128xf32>
    %24 = vector.broadcast %0 : vector<120x1xf32> to vector<120x128xf32>
    %25 = arith.mulf %23, %24 : vector<120x128xf32>
    %cst_23 = arith.constant 0.000000e+00 : bf16
    %26 = vector.broadcast %cst_23 : bf16 to vector<160x128xbf16>
    %c0_24 = arith.constant 0 : index
    %c0_25 = arith.constant 0 : index
    %c0_26 = arith.constant 0 : index
    %27 = vector.load %arg6[%c0_24, %c0_25, %c0_26] : memref<1x160x128xbf16, #tpu.memory_space<vmem>>, vector<1x160x128xbf16>
    %28 = vector.shape_cast %27 : vector<1x160x128xbf16> to vector<160x128xbf16>
    %29 = vector.shape_cast %26 : vector<160x128xbf16> to vector<1x160x128xbf16>
    tpu.vector_store %arg6[%c0_24, %c0_25, %c0_26], %29 {strides = array<i32>} : memref<1x160x128xbf16, #tpu.memory_space<vmem>>, vector<1x160x128xbf16>,
    %30 = arith.truncf %25 : vector<120x128xf32> to vector<120x128xbf16>
    %c0_27 = arith.constant 0 : index
    %c17_28 = arith.constant 17 : index
    %c0_29 = arith.constant 0 : index
    %31 = vector.load %arg6[%c0_27, %c17_28, %c0_29] : memref<1x160x128xbf16, #tpu.memory_space<vmem>>, vector<1x120x128xbf16>
    %32 = vector.shape_cast %31 : vector<1x120x128xbf16> to vector<120x128xbf16>
    %33 = vector.shape_cast %30 : vector<120x128xbf16> to vector<1x120x128xbf16>
    tpu.vector_store %arg6[%c0_27, %c17_28, %c0_29], %33 {strides = array<i32>} : memref<1x160x128xbf16, #tpu.memory_space<vmem>>, vector<1x120x128xbf16>,
    %cst_30 = arith.constant dense<0.000000e+00> : vector<128xf32>
    %34 = vector.multi_reduction <add>, %25, %cst_30 [0] : vector<120x128xf32> to vector<128xf32>
    %35 = vector.shape_cast %34 : vector<128xf32> to vector<1x128xf32>
    %c0_31 = arith.constant 0 : index
    %c0_32 = arith.constant 0 : index
    %c0_33 = arith.constant 0 : index
    %36 = vector.load %arg7[%c0_31, %c0_32, %c0_33] : memref<1x2x128xf32, #tpu.memory_space<vmem>>, vector<1x1x128xf32>
    %37 = vector.shape_cast %36 : vector<1x1x128xf32> to vector<1x128xf32>
    %38 = vector.shape_cast %35 : vector<1x128xf32> to vector<1x1x128xf32>
    tpu.vector_store %arg7[%c0_31, %c0_32, %c0_33], %38 {strides = array<i32>} : memref<1x2x128xf32, #tpu.memory_space<vmem>>, vector<1x1x128xf32>,
    %39 = arith.mulf %25, %23 : vector<120x128xf32>
    %cst_34 = arith.constant dense<0.000000e+00> : vector<128xf32>
    %40 = vector.multi_reduction <add>, %39, %cst_34 [0] : vector<120x128xf32> to vector<128xf32>
    %41 = vector.shape_cast %40 : vector<128xf32> to vector<1x128xf32>
    %c0_35 = arith.constant 0 : index
    %c1_36 = arith.constant 1 : index
    %c0_37 = arith.constant 0 : index
    %42 = vector.load %arg7[%c0_35, %c1_36, %c0_37] : memref<1x2x128xf32, #tpu.memory_space<vmem>>, vector<1x1x128xf32>
    %43 = vector.shape_cast %42 : vector<1x1x128xf32> to vector<1x128xf32>
    %44 = vector.shape_cast %41 : vector<1x128xf32> to vector<1x1x128xf32>
    tpu.vector_store %arg7[%c0_35, %c1_36, %c0_37], %44 {strides = array<i32>} : memref<1x2x128xf32, #tpu.memory_space<vmem>>, vector<1x1x128xf32>,
    %c0_38 = arith.constant 0 : index
    %c0_39 = arith.constant 0 : index
    %c0_40 = arith.constant 0 : index
    %45 = vector.load %arg4[%c0_38, %c0_39, %c0_40] : memref<1x120x128xbf16, #tpu.memory_space<vmem>>, vector<1x120x128xbf16>
    %46 = vector.shape_cast %45 : vector<1x120x128xbf16> to vector<120x128xbf16>
    %c0_41 = arith.constant 0 : index
    %c0_42 = arith.constant 0 : index
    %47 = vector.load %arg5[%c0_41, %c0_42] : memref<128x128xbf16, #tpu.memory_space<vmem>>, vector<128x128xbf16>
    %cst_43 = arith.constant dense<0.000000e+00> : vector<120x128xf32>
    %48 = tpu.matmul %46, %47, %cst_43 {dimension_numbers = #tpu.dot_dimension_numbers<[1], [0], [0], [1], [0, 0, 1, 1], [], []>} : vector<120x128xbf16>, vector<128x128xbf16>, vector<120x128xf32> -> vector<120x128xf32>
    %49 = vector.broadcast %0 : vector<120x1xf32> to vector<120x128xf32>
    %50 = arith.mulf %48, %49 : vector<120x128xf32>
    %51 = arith.truncf %50 : vector<120x128xf32> to vector<120x128xbf16>
    %c0_44 = arith.constant 0 : index
    %c0_45 = arith.constant 0 : index
    %c0_46 = arith.constant 0 : index
    %52 = vector.load %arg8[%c0_44, %c0_45, %c0_46] : memref<1x120x128xbf16, #tpu.memory_space<vmem>>, vector<1x120x128xbf16>
    %53 = vector.shape_cast %52 : vector<1x120x128xbf16> to vector<120x128xbf16>
    %54 = vector.shape_cast %51 : vector<120x128xbf16> to vector<1x120x128xbf16>
    tpu.vector_store %arg8[%c0_44, %c0_45, %c0_46], %54 {strides = array<i32>} : memref<1x120x128xbf16, #tpu.memory_space<vmem>>, vector<1x120x128xbf16>,
    %cst_47 = arith.constant dense<0.000000e+00> : vector<128xf32>
    %55 = vector.multi_reduction <add>, %50, %cst_47 [0] : vector<120x128xf32> to vector<128xf32>
    %56 = vector.shape_cast %55 : vector<128xf32> to vector<1x128xf32>
    %c0_48 = arith.constant 0 : index
    %c0_49 = arith.constant 0 : index
    %c0_50 = arith.constant 0 : index
    %57 = vector.load %arg9[%c0_48, %c0_49, %c0_50] : memref<1x2x128xf32, #tpu.memory_space<vmem>>, vector<1x1x128xf32>
    %58 = vector.shape_cast %57 : vector<1x1x128xf32> to vector<1x128xf32>
    %59 = vector.shape_cast %56 : vector<1x128xf32> to vector<1x1x128xf32>
    tpu.vector_store %arg9[%c0_48, %c0_49, %c0_50], %59 {strides = array<i32>} : memref<1x2x128xf32, #tpu.memory_space<vmem>>, vector<1x1x128xf32>,
    %60 = arith.mulf %50, %48 : vector<120x128xf32>
    %cst_51 = arith.constant dense<0.000000e+00> : vector<128xf32>
    %61 = vector.multi_reduction <add>, %60, %cst_51 [0] : vector<120x128xf32> to vector<128xf32>
    %62 = vector.shape_cast %61 : vector<128xf32> to vector<1x128xf32>
    %c0_52 = arith.constant 0 : index
    %c1_53 = arith.constant 1 : index
    %c0_54 = arith.constant 0 : index
    %63 = vector.load %arg9[%c0_52, %c1_53, %c0_54] : memref<1x2x128xf32, #tpu.memory_space<vmem>>, vector<1x1x128xf32>
    %64 = vector.shape_cast %63 : vector<1x1x128xf32> to vector<1x128xf32>
    %65 = vector.shape_cast %62 : vector<1x128xf32> to vector<1x1x128xf32>
    tpu.vector_store %arg9[%c0_52, %c1_53, %c0_54], %65 {strides = array<i32>} : memref<1x2x128xf32, #tpu.memory_space<vmem>>, vector<1x1x128xf32>,
    return
  }
  func.func @transform_0(%arg0: i32) -> (i32, i32, i32) {
    %c0_i32 = arith.constant 0 : i32
    %c0_i32_0 = arith.constant 0 : i32
    %c0_i32_1 = arith.constant 0 : i32
    return %arg0, %c0_i32, %c0_i32_0 : i32, i32, i32
  }
  func.func @transform_1(%arg0: i32) -> (i32, i32) {
    %c0_i32 = arith.constant 0 : i32
    %c0_i32_0 = arith.constant 0 : i32
    %c0_i32_1 = arith.constant 0 : i32
    return %c0_i32, %c0_i32_0 : i32, i32
  }
  func.func @transform_2(%arg0: i32) -> (i32, i32, i32) {
    %c0_i32 = arith.constant 0 : i32
    %c0_i32_0 = arith.constant 0 : i32
    %c0_i32_1 = arith.constant 0 : i32
    %c0_i32_2 = arith.constant 0 : i32
    return %c0_i32, %c0_i32_0, %c0_i32_1 : i32, i32, i32
  }
  func.func @transform_3(%arg0: i32) -> (i32, i32, i32) {
    %c0_i32 = arith.constant 0 : i32
    %c0_i32_0 = arith.constant 0 : i32
    %c0_i32_1 = arith.constant 0 : i32
    return %arg0, %c0_i32, %c0_i32_0 : i32, i32, i32
  }
  func.func @transform_4(%arg0: i32) -> (i32, i32) {
    %c0_i32 = arith.constant 0 : i32
    %c0_i32_0 = arith.constant 0 : i32
    %c0_i32_1 = arith.constant 0 : i32
    return %c0_i32, %c0_i32_0 : i32, i32
  }
  func.func @transform_5(%arg0: i32) -> (i32, i32, i32) {
    %c0_i32 = arith.constant 0 : i32
    %c0_i32_0 = arith.constant 0 : i32
    %c0_i32_1 = arith.constant 0 : i32
    return %arg0, %c0_i32, %c0_i32_0 : i32, i32, i32
  }
  func.func @transform_6(%arg0: i32) -> (i32, i32, i32) {
    %c0_i32 = arith.constant 0 : i32
    %c0_i32_0 = arith.constant 0 : i32
    %c0_i32_1 = arith.constant 0 : i32
    return %arg0, %c0_i32, %c0_i32_0 : i32, i32, i32
  }
  func.func @transform_7(%arg0: i32) -> (i32, i32, i32) {
    %c0_i32 = arith.constant 0 : i32
    %c0_i32_0 = arith.constant 0 : i32
    %c0_i32_1 = arith.constant 0 : i32
    return %arg0, %c0_i32, %c0_i32_0 : i32, i32, i32
  }
  func.func @transform_8(%arg0: i32) -> (i32, i32, i32) {
    %c0_i32 = arith.constant 0 : i32
    %c0_i32_0 = arith.constant 0 : i32
    %c0_i32_1 = arith.constant 0 : i32
    return %arg0, %c0_i32, %c0_i32_0 : i32, i32, i32
  }
}

module attributes {stable_mosaic.version = 11 : i64} {
  func.func @kernel(%arg0: i32, %arg1: memref<1x160x128xbf16, #tpu.memory_space<vmem>>, %arg2: memref<160x1xf32, #tpu.memory_space<vmem>>, %arg3: memref<9x128x128xbf16, #tpu.memory_space<vmem>>, %arg4: memref<1x128xf32, #tpu.memory_space<vmem>>, %arg5: memref<1x128xf32, #tpu.memory_space<vmem>>, %arg6: memref<1x120x128xbf16, #tpu.memory_space<vmem>>, %arg7: memref<1x2x128xf32, #tpu.memory_space<vmem>>, %arg8: memref<160x128xbf16, #tpu.memory_space<vmem>>) attributes {dimension_semantics = [#tpu.dimension_semantics<parallel>], iteration_bounds = array<i64: 2>, scalar_prefetch = 0 : i64, scratch_operands = 1 : i64, tpu.core_type = #tpu.core_type<tc>, window_params = [{transform_indices = @transform_0, window_bounds = array<i64: 1, 160, 128>}, {pipeline_mode = #tpu.pipeline_mode<synchronous>, transform_indices = @transform_1, window_bounds = array<i64: 160, 1>}, {pipeline_mode = #tpu.pipeline_mode<synchronous>, transform_indices = @transform_2, window_bounds = array<i64: 9, 128, 128>}, {pipeline_mode = #tpu.pipeline_mode<synchronous>, transform_indices = @transform_3, window_bounds = array<i64: 1, 128>}, {pipeline_mode = #tpu.pipeline_mode<synchronous>, transform_indices = @transform_4, window_bounds = array<i64: 1, 128>}, {transform_indices = @transform_5, window_bounds = array<i64: 1, 120, 128>}, {transform_indices = @transform_6, window_bounds = array<i64: 1, 2, 128>}]} {
    %c0 = arith.constant 0 : index
    %c0_0 = arith.constant 0 : index
    %c0_1 = arith.constant 0 : index
    %0 = vector.load %arg1[%c0, %c0_0, %c0_1] : memref<1x160x128xbf16, #tpu.memory_space<vmem>>, vector<1x160x128xbf16>
    %1 = vector.shape_cast %0 : vector<1x160x128xbf16> to vector<160x128xbf16>
    %2 = arith.extf %1 : vector<160x128xbf16> to vector<160x128xf32>
    %c0_2 = arith.constant 0 : index
    %c0_3 = arith.constant 0 : index
    %3 = vector.load %arg4[%c0_2, %c0_3] : memref<1x128xf32, #tpu.memory_space<vmem>>, vector<1x128xf32>
    %4 = vector.broadcast %3 : vector<1x128xf32> to vector<160x128xf32>
    %5 = arith.mulf %2, %4 : vector<160x128xf32>
    %c0_4 = arith.constant 0 : index
    %c0_5 = arith.constant 0 : index
    %6 = vector.load %arg5[%c0_4, %c0_5] : memref<1x128xf32, #tpu.memory_space<vmem>>, vector<1x128xf32>
    %7 = vector.broadcast %6 : vector<1x128xf32> to vector<160x128xf32>
    %8 = arith.addf %5, %7 : vector<160x128xf32>
    %cst = arith.constant 0.000000e+00 : f32
    %9 = vector.broadcast %cst : f32 to vector<160x128xf32>
    %10 = arith.maximumf %8, %9 : vector<160x128xf32>
    %c0_6 = arith.constant 0 : index
    %c0_7 = arith.constant 0 : index
    %11 = vector.load %arg2[%c0_6, %c0_7] : memref<160x1xf32, #tpu.memory_space<vmem>>, vector<160x1xf32>
    %12 = vector.broadcast %11 : vector<160x1xf32> to vector<160x128xf32>
    %13 = arith.mulf %10, %12 : vector<160x128xf32>
    %14 = arith.truncf %13 : vector<160x128xf32> to vector<160x128xbf16>
    %c0_8 = arith.constant 0 : index
    %c0_9 = arith.constant 0 : index
    %15 = vector.load %arg8[%c0_8, %c0_9] : memref<160x128xbf16, #tpu.memory_space<vmem>>, vector<160x128xbf16>
    tpu.vector_store %arg8[%c0_8, %c0_9], %14 {strides = array<i32>} : memref<160x128xbf16, #tpu.memory_space<vmem>>, vector<160x128xbf16>,
    %c0_10 = arith.constant 0 : index
    %c0_11 = arith.constant 0 : index
    %16 = vector.load %arg8[%c0_10, %c0_11] : memref<160x128xbf16, #tpu.memory_space<vmem>>, vector<120x128xbf16>
    %c0_12 = arith.constant 0 : index
    %c0_13 = arith.constant 0 : index
    %c0_14 = arith.constant 0 : index
    %17 = vector.load %arg3[%c0_12, %c0_13, %c0_14] : memref<9x128x128xbf16, #tpu.memory_space<vmem>>, vector<1x128x128xbf16>
    %18 = vector.shape_cast %17 : vector<1x128x128xbf16> to vector<128x128xbf16>
    %cst_15 = arith.constant dense<0.000000e+00> : vector<120x128xf32>
    %19 = tpu.matmul %16, %18, %cst_15 {dimension_numbers = #tpu.dot_dimension_numbers<[1], [0], [0], [1], [0, 0, 1, 1], [], []>} : vector<120x128xbf16>, vector<128x128xbf16>, vector<120x128xf32> -> vector<120x128xf32>
    %c1 = arith.constant 1 : index
    %c0_16 = arith.constant 0 : index
    %20 = vector.load %arg8[%c1, %c0_16] : memref<160x128xbf16, #tpu.memory_space<vmem>>, vector<120x128xbf16>
    %c1_17 = arith.constant 1 : index
    %c0_18 = arith.constant 0 : index
    %c0_19 = arith.constant 0 : index
    %21 = vector.load %arg3[%c1_17, %c0_18, %c0_19] : memref<9x128x128xbf16, #tpu.memory_space<vmem>>, vector<1x128x128xbf16>
    %22 = vector.shape_cast %21 : vector<1x128x128xbf16> to vector<128x128xbf16>
    %cst_20 = arith.constant dense<0.000000e+00> : vector<120x128xf32>
    %23 = tpu.matmul %20, %22, %cst_20 {dimension_numbers = #tpu.dot_dimension_numbers<[1], [0], [0], [1], [0, 0, 1, 1], [], []>} : vector<120x128xbf16>, vector<128x128xbf16>, vector<120x128xf32> -> vector<120x128xf32>
    %24 = arith.addf %19, %23 : vector<120x128xf32>
    %c2 = arith.constant 2 : index
    %c0_21 = arith.constant 0 : index
    %25 = vector.load %arg8[%c2, %c0_21] : memref<160x128xbf16, #tpu.memory_space<vmem>>, vector<120x128xbf16>
    %c2_22 = arith.constant 2 : index
    %c0_23 = arith.constant 0 : index
    %c0_24 = arith.constant 0 : index
    %26 = vector.load %arg3[%c2_22, %c0_23, %c0_24] : memref<9x128x128xbf16, #tpu.memory_space<vmem>>, vector<1x128x128xbf16>
    %27 = vector.shape_cast %26 : vector<1x128x128xbf16> to vector<128x128xbf16>
    %cst_25 = arith.constant dense<0.000000e+00> : vector<120x128xf32>
    %28 = tpu.matmul %25, %27, %cst_25 {dimension_numbers = #tpu.dot_dimension_numbers<[1], [0], [0], [1], [0, 0, 1, 1], [], []>} : vector<120x128xbf16>, vector<128x128xbf16>, vector<120x128xf32> -> vector<120x128xf32>
    %29 = arith.addf %24, %28 : vector<120x128xf32>
    %c16 = arith.constant 16 : index
    %c0_26 = arith.constant 0 : index
    %30 = vector.load %arg8[%c16, %c0_26] : memref<160x128xbf16, #tpu.memory_space<vmem>>, vector<120x128xbf16>
    %c3 = arith.constant 3 : index
    %c0_27 = arith.constant 0 : index
    %c0_28 = arith.constant 0 : index
    %31 = vector.load %arg3[%c3, %c0_27, %c0_28] : memref<9x128x128xbf16, #tpu.memory_space<vmem>>, vector<1x128x128xbf16>
    %32 = vector.shape_cast %31 : vector<1x128x128xbf16> to vector<128x128xbf16>
    %cst_29 = arith.constant dense<0.000000e+00> : vector<120x128xf32>
    %33 = tpu.matmul %30, %32, %cst_29 {dimension_numbers = #tpu.dot_dimension_numbers<[1], [0], [0], [1], [0, 0, 1, 1], [], []>} : vector<120x128xbf16>, vector<128x128xbf16>, vector<120x128xf32> -> vector<120x128xf32>
    %34 = arith.addf %29, %33 : vector<120x128xf32>
    %c17 = arith.constant 17 : index
    %c0_30 = arith.constant 0 : index
    %35 = vector.load %arg8[%c17, %c0_30] : memref<160x128xbf16, #tpu.memory_space<vmem>>, vector<120x128xbf16>
    %c4 = arith.constant 4 : index
    %c0_31 = arith.constant 0 : index
    %c0_32 = arith.constant 0 : index
    %36 = vector.load %arg3[%c4, %c0_31, %c0_32] : memref<9x128x128xbf16, #tpu.memory_space<vmem>>, vector<1x128x128xbf16>
    %37 = vector.shape_cast %36 : vector<1x128x128xbf16> to vector<128x128xbf16>
    %cst_33 = arith.constant dense<0.000000e+00> : vector<120x128xf32>
    %38 = tpu.matmul %35, %37, %cst_33 {dimension_numbers = #tpu.dot_dimension_numbers<[1], [0], [0], [1], [0, 0, 1, 1], [], []>} : vector<120x128xbf16>, vector<128x128xbf16>, vector<120x128xf32> -> vector<120x128xf32>
    %39 = arith.addf %34, %38 : vector<120x128xf32>
    %c18 = arith.constant 18 : index
    %c0_34 = arith.constant 0 : index
    %40 = vector.load %arg8[%c18, %c0_34] : memref<160x128xbf16, #tpu.memory_space<vmem>>, vector<120x128xbf16>
    %c5 = arith.constant 5 : index
    %c0_35 = arith.constant 0 : index
    %c0_36 = arith.constant 0 : index
    %41 = vector.load %arg3[%c5, %c0_35, %c0_36] : memref<9x128x128xbf16, #tpu.memory_space<vmem>>, vector<1x128x128xbf16>
    %42 = vector.shape_cast %41 : vector<1x128x128xbf16> to vector<128x128xbf16>
    %cst_37 = arith.constant dense<0.000000e+00> : vector<120x128xf32>
    %43 = tpu.matmul %40, %42, %cst_37 {dimension_numbers = #tpu.dot_dimension_numbers<[1], [0], [0], [1], [0, 0, 1, 1], [], []>} : vector<120x128xbf16>, vector<128x128xbf16>, vector<120x128xf32> -> vector<120x128xf32>
    %44 = arith.addf %39, %43 : vector<120x128xf32>
    %c32 = arith.constant 32 : index
    %c0_38 = arith.constant 0 : index
    %45 = vector.load %arg8[%c32, %c0_38] : memref<160x128xbf16, #tpu.memory_space<vmem>>, vector<120x128xbf16>
    %c6 = arith.constant 6 : index
    %c0_39 = arith.constant 0 : index
    %c0_40 = arith.constant 0 : index
    %46 = vector.load %arg3[%c6, %c0_39, %c0_40] : memref<9x128x128xbf16, #tpu.memory_space<vmem>>, vector<1x128x128xbf16>
    %47 = vector.shape_cast %46 : vector<1x128x128xbf16> to vector<128x128xbf16>
    %cst_41 = arith.constant dense<0.000000e+00> : vector<120x128xf32>
    %48 = tpu.matmul %45, %47, %cst_41 {dimension_numbers = #tpu.dot_dimension_numbers<[1], [0], [0], [1], [0, 0, 1, 1], [], []>} : vector<120x128xbf16>, vector<128x128xbf16>, vector<120x128xf32> -> vector<120x128xf32>
    %49 = arith.addf %44, %48 : vector<120x128xf32>
    %c33 = arith.constant 33 : index
    %c0_42 = arith.constant 0 : index
    %50 = vector.load %arg8[%c33, %c0_42] : memref<160x128xbf16, #tpu.memory_space<vmem>>, vector<120x128xbf16>
    %c7 = arith.constant 7 : index
    %c0_43 = arith.constant 0 : index
    %c0_44 = arith.constant 0 : index
    %51 = vector.load %arg3[%c7, %c0_43, %c0_44] : memref<9x128x128xbf16, #tpu.memory_space<vmem>>, vector<1x128x128xbf16>
    %52 = vector.shape_cast %51 : vector<1x128x128xbf16> to vector<128x128xbf16>
    %cst_45 = arith.constant dense<0.000000e+00> : vector<120x128xf32>
    %53 = tpu.matmul %50, %52, %cst_45 {dimension_numbers = #tpu.dot_dimension_numbers<[1], [0], [0], [1], [0, 0, 1, 1], [], []>} : vector<120x128xbf16>, vector<128x128xbf16>, vector<120x128xf32> -> vector<120x128xf32>
    %54 = arith.addf %49, %53 : vector<120x128xf32>
    %c34 = arith.constant 34 : index
    %c0_46 = arith.constant 0 : index
    %55 = vector.load %arg8[%c34, %c0_46] : memref<160x128xbf16, #tpu.memory_space<vmem>>, vector<120x128xbf16>
    %c8 = arith.constant 8 : index
    %c0_47 = arith.constant 0 : index
    %c0_48 = arith.constant 0 : index
    %56 = vector.load %arg3[%c8, %c0_47, %c0_48] : memref<9x128x128xbf16, #tpu.memory_space<vmem>>, vector<1x128x128xbf16>
    %57 = vector.shape_cast %56 : vector<1x128x128xbf16> to vector<128x128xbf16>
    %cst_49 = arith.constant dense<0.000000e+00> : vector<120x128xf32>
    %58 = tpu.matmul %55, %57, %cst_49 {dimension_numbers = #tpu.dot_dimension_numbers<[1], [0], [0], [1], [0, 0, 1, 1], [], []>} : vector<120x128xbf16>, vector<128x128xbf16>, vector<120x128xf32> -> vector<120x128xf32>
    %59 = arith.addf %54, %58 : vector<120x128xf32>
    %c17_50 = arith.constant 17 : index
    %c0_51 = arith.constant 0 : index
    %60 = vector.load %arg2[%c17_50, %c0_51] : memref<160x1xf32, #tpu.memory_space<vmem>>, vector<120x1xf32>
    %61 = vector.broadcast %60 : vector<120x1xf32> to vector<120x128xf32>
    %62 = arith.mulf %59, %61 : vector<120x128xf32>
    %63 = arith.truncf %62 : vector<120x128xf32> to vector<120x128xbf16>
    %c0_52 = arith.constant 0 : index
    %c0_53 = arith.constant 0 : index
    %c0_54 = arith.constant 0 : index
    %64 = vector.load %arg6[%c0_52, %c0_53, %c0_54] : memref<1x120x128xbf16, #tpu.memory_space<vmem>>, vector<1x120x128xbf16>
    %65 = vector.shape_cast %64 : vector<1x120x128xbf16> to vector<120x128xbf16>
    %66 = vector.shape_cast %63 : vector<120x128xbf16> to vector<1x120x128xbf16>
    tpu.vector_store %arg6[%c0_52, %c0_53, %c0_54], %66 {strides = array<i32>} : memref<1x120x128xbf16, #tpu.memory_space<vmem>>, vector<1x120x128xbf16>,
    %cst_55 = arith.constant dense<0.000000e+00> : vector<128xf32>
    %67 = vector.multi_reduction <add>, %62, %cst_55 [0] : vector<120x128xf32> to vector<128xf32>
    %68 = vector.shape_cast %67 : vector<128xf32> to vector<1x128xf32>
    %c0_56 = arith.constant 0 : index
    %c0_57 = arith.constant 0 : index
    %c0_58 = arith.constant 0 : index
    %69 = vector.load %arg7[%c0_56, %c0_57, %c0_58] : memref<1x2x128xf32, #tpu.memory_space<vmem>>, vector<1x1x128xf32>
    %70 = vector.shape_cast %69 : vector<1x1x128xf32> to vector<1x128xf32>
    %71 = vector.shape_cast %68 : vector<1x128xf32> to vector<1x1x128xf32>
    tpu.vector_store %arg7[%c0_56, %c0_57, %c0_58], %71 {strides = array<i32>} : memref<1x2x128xf32, #tpu.memory_space<vmem>>, vector<1x1x128xf32>,
    %72 = arith.mulf %62, %59 : vector<120x128xf32>
    %cst_59 = arith.constant dense<0.000000e+00> : vector<128xf32>
    %73 = vector.multi_reduction <add>, %72, %cst_59 [0] : vector<120x128xf32> to vector<128xf32>
    %74 = vector.shape_cast %73 : vector<128xf32> to vector<1x128xf32>
    %c0_60 = arith.constant 0 : index
    %c1_61 = arith.constant 1 : index
    %c0_62 = arith.constant 0 : index
    %75 = vector.load %arg7[%c0_60, %c1_61, %c0_62] : memref<1x2x128xf32, #tpu.memory_space<vmem>>, vector<1x1x128xf32>
    %76 = vector.shape_cast %75 : vector<1x1x128xf32> to vector<1x128xf32>
    %77 = vector.shape_cast %74 : vector<1x128xf32> to vector<1x1x128xf32>
    tpu.vector_store %arg7[%c0_60, %c1_61, %c0_62], %77 {strides = array<i32>} : memref<1x2x128xf32, #tpu.memory_space<vmem>>, vector<1x1x128xf32>,
    return
  }
  func.func @transform_0(%arg0: i32) -> (i32, i32, i32) {
    %c0_i32 = arith.constant 0 : i32
    %c0_i32_0 = arith.constant 0 : i32
    %c0_i32_1 = arith.constant 0 : i32
    return %arg0, %c0_i32, %c0_i32_0 : i32, i32, i32
  }
  func.func @transform_1(%arg0: i32) -> (i32, i32) {
    %c0_i32 = arith.constant 0 : i32
    %c0_i32_0 = arith.constant 0 : i32
    %c0_i32_1 = arith.constant 0 : i32
    return %c0_i32, %c0_i32_0 : i32, i32
  }
  func.func @transform_2(%arg0: i32) -> (i32, i32, i32) {
    %c0_i32 = arith.constant 0 : i32
    %c0_i32_0 = arith.constant 0 : i32
    %c0_i32_1 = arith.constant 0 : i32
    %c0_i32_2 = arith.constant 0 : i32
    return %c0_i32, %c0_i32_0, %c0_i32_1 : i32, i32, i32
  }
  func.func @transform_3(%arg0: i32) -> (i32, i32) {
    %c0_i32 = arith.constant 0 : i32
    %c0_i32_0 = arith.constant 0 : i32
    %c0_i32_1 = arith.constant 0 : i32
    return %c0_i32, %c0_i32_0 : i32, i32
  }
  func.func @transform_4(%arg0: i32) -> (i32, i32) {
    %c0_i32 = arith.constant 0 : i32
    %c0_i32_0 = arith.constant 0 : i32
    %c0_i32_1 = arith.constant 0 : i32
    return %c0_i32, %c0_i32_0 : i32, i32
  }
  func.func @transform_5(%arg0: i32) -> (i32, i32, i32) {
    %c0_i32 = arith.constant 0 : i32
    %c0_i32_0 = arith.constant 0 : i32
    %c0_i32_1 = arith.constant 0 : i32
    return %arg0, %c0_i32, %c0_i32_0 : i32, i32, i32
  }
  func.func @transform_6(%arg0: i32) -> (i32, i32, i32) {
    %c0_i32 = arith.constant 0 : i32
    %c0_i32_0 = arith.constant 0 : i32
    %c0_i32_1 = arith.constant 0 : i32
    return %arg0, %c0_i32, %c0_i32_0 : i32, i32, i32
  }
}

module attributes {stable_mosaic.version = 11 : i64} {
  func.func @kernel(%arg0: i32, %arg1: memref<1x120x128xbf16, #tpu.memory_space<vmem>>, %arg2: memref<1x128xf32, #tpu.memory_space<vmem>>, %arg3: memref<1x128xf32, #tpu.memory_space<vmem>>, %arg4: memref<1x120x128xbf16, #tpu.memory_space<vmem>>, %arg5: memref<1x128xf32, #tpu.memory_space<vmem>>, %arg6: memref<1x128xf32, #tpu.memory_space<vmem>>, %arg7: memref<1x120x128xf32, #tpu.memory_space<vmem>>) attributes {dimension_semantics = [#tpu.dimension_semantics<parallel>], iteration_bounds = array<i64: 2>, scalar_prefetch = 0 : i64, scratch_operands = 0 : i64, tpu.core_type = #tpu.core_type<tc>, window_params = [{transform_indices = @transform_0, window_bounds = array<i64: 1, 120, 128>}, {pipeline_mode = #tpu.pipeline_mode<synchronous>, transform_indices = @transform_1, window_bounds = array<i64: 1, 128>}, {pipeline_mode = #tpu.pipeline_mode<synchronous>, transform_indices = @transform_2, window_bounds = array<i64: 1, 128>}, {transform_indices = @transform_3, window_bounds = array<i64: 1, 120, 128>}, {pipeline_mode = #tpu.pipeline_mode<synchronous>, transform_indices = @transform_4, window_bounds = array<i64: 1, 128>}, {pipeline_mode = #tpu.pipeline_mode<synchronous>, transform_indices = @transform_5, window_bounds = array<i64: 1, 128>}, {transform_indices = @transform_6, window_bounds = array<i64: 1, 120, 128>}]} {
    %c0 = arith.constant 0 : index
    %c0_0 = arith.constant 0 : index
    %c0_1 = arith.constant 0 : index
    %0 = vector.load %arg1[%c0, %c0_0, %c0_1] : memref<1x120x128xbf16, #tpu.memory_space<vmem>>, vector<1x120x128xbf16>
    %1 = vector.shape_cast %0 : vector<1x120x128xbf16> to vector<120x128xbf16>
    %2 = arith.extf %1 : vector<120x128xbf16> to vector<120x128xf32>
    %c0_2 = arith.constant 0 : index
    %c0_3 = arith.constant 0 : index
    %3 = vector.load %arg2[%c0_2, %c0_3] : memref<1x128xf32, #tpu.memory_space<vmem>>, vector<1x128xf32>
    %4 = vector.broadcast %3 : vector<1x128xf32> to vector<120x128xf32>
    %5 = arith.mulf %2, %4 : vector<120x128xf32>
    %c0_4 = arith.constant 0 : index
    %c0_5 = arith.constant 0 : index
    %6 = vector.load %arg3[%c0_4, %c0_5] : memref<1x128xf32, #tpu.memory_space<vmem>>, vector<1x128xf32>
    %7 = vector.broadcast %6 : vector<1x128xf32> to vector<120x128xf32>
    %8 = arith.addf %5, %7 : vector<120x128xf32>
    %c0_6 = arith.constant 0 : index
    %c0_7 = arith.constant 0 : index
    %c0_8 = arith.constant 0 : index
    %9 = vector.load %arg4[%c0_6, %c0_7, %c0_8] : memref<1x120x128xbf16, #tpu.memory_space<vmem>>, vector<1x120x128xbf16>
    %10 = vector.shape_cast %9 : vector<1x120x128xbf16> to vector<120x128xbf16>
    %11 = arith.extf %10 : vector<120x128xbf16> to vector<120x128xf32>
    %c0_9 = arith.constant 0 : index
    %c0_10 = arith.constant 0 : index
    %12 = vector.load %arg5[%c0_9, %c0_10] : memref<1x128xf32, #tpu.memory_space<vmem>>, vector<1x128xf32>
    %13 = vector.broadcast %12 : vector<1x128xf32> to vector<120x128xf32>
    %14 = arith.mulf %11, %13 : vector<120x128xf32>
    %c0_11 = arith.constant 0 : index
    %c0_12 = arith.constant 0 : index
    %15 = vector.load %arg6[%c0_11, %c0_12] : memref<1x128xf32, #tpu.memory_space<vmem>>, vector<1x128xf32>
    %16 = vector.broadcast %15 : vector<1x128xf32> to vector<120x128xf32>
    %17 = arith.addf %14, %16 : vector<120x128xf32>
    %18 = arith.addf %8, %17 : vector<120x128xf32>
    %cst = arith.constant 0.000000e+00 : f32
    %19 = vector.broadcast %cst : f32 to vector<120x128xf32>
    %20 = arith.maximumf %18, %19 : vector<120x128xf32>
    %c0_13 = arith.constant 0 : index
    %c0_14 = arith.constant 0 : index
    %c0_15 = arith.constant 0 : index
    %21 = vector.load %arg7[%c0_13, %c0_14, %c0_15] : memref<1x120x128xf32, #tpu.memory_space<vmem>>, vector<1x120x128xf32>
    %22 = vector.shape_cast %21 : vector<1x120x128xf32> to vector<120x128xf32>
    %23 = vector.shape_cast %20 : vector<120x128xf32> to vector<1x120x128xf32>
    tpu.vector_store %arg7[%c0_13, %c0_14, %c0_15], %23 {strides = array<i32>} : memref<1x120x128xf32, #tpu.memory_space<vmem>>, vector<1x120x128xf32>,
    return
  }
  func.func @transform_0(%arg0: i32) -> (i32, i32, i32) {
    %c0_i32 = arith.constant 0 : i32
    %c0_i32_0 = arith.constant 0 : i32
    %c0_i32_1 = arith.constant 0 : i32
    return %arg0, %c0_i32, %c0_i32_0 : i32, i32, i32
  }
  func.func @transform_1(%arg0: i32) -> (i32, i32) {
    %c0_i32 = arith.constant 0 : i32
    %c0_i32_0 = arith.constant 0 : i32
    %c0_i32_1 = arith.constant 0 : i32
    return %c0_i32, %c0_i32_0 : i32, i32
  }
  func.func @transform_2(%arg0: i32) -> (i32, i32) {
    %c0_i32 = arith.constant 0 : i32
    %c0_i32_0 = arith.constant 0 : i32
    %c0_i32_1 = arith.constant 0 : i32
    return %c0_i32, %c0_i32_0 : i32, i32
  }
  func.func @transform_3(%arg0: i32) -> (i32, i32, i32) {
    %c0_i32 = arith.constant 0 : i32
    %c0_i32_0 = arith.constant 0 : i32
    %c0_i32_1 = arith.constant 0 : i32
    return %arg0, %c0_i32, %c0_i32_0 : i32, i32, i32
  }
  func.func @transform_4(%arg0: i32) -> (i32, i32) {
    %c0_i32 = arith.constant 0 : i32
    %c0_i32_0 = arith.constant 0 : i32
    %c0_i32_1 = arith.constant 0 : i32
    return %c0_i32, %c0_i32_0 : i32, i32
  }
  func.func @transform_5(%arg0: i32) -> (i32, i32) {
    %c0_i32 = arith.constant 0 : i32
    %c0_i32_0 = arith.constant 0 : i32
    %c0_i32_1 = arith.constant 0 : i32
    return %c0_i32, %c0_i32_0 : i32, i32
  }
  func.func @transform_6(%arg0: i32) -> (i32, i32, i32) {
    %c0_i32 = arith.constant 0 : i32
    %c0_i32_0 = arith.constant 0 : i32
    %c0_i32_1 = arith.constant 0 : i32
    return %arg0, %c0_i32, %c0_i32_0 : i32, i32, i32
  }
}

</mosaic_0001>

<llo_original>
// kernel: basic_block_forward.5
$region0: #{basic_block_forward.5}
  #allocation0 [shape = 'u32[]', space=smem, size = 0x4, offset = 0x4, fixed_abs, tag = 'smem constant byte address 0x4 - core index']
  #allocation1 [shape = 'u32[144,128]{1,0:T(1,128)}', space=vmem, size = 0x12000, scoped, tag = 'internal scratch']
  %s0 = inlined_call_operand.vmem [shape: bf16[2,120,128], index: 0, kind: input, shape index: {}]
  %s1 = inlined_call_operand.vmem [shape: f32[1,128], index: 1, kind: input, shape index: {}]
  %s2 = inlined_call_operand.vmem [shape: f32[1,128], index: 2, kind: input, shape index: {}]
  %s3 = inlined_call_operand.vmem [shape: bf16[2,120,128], index: 3, kind: input, shape index: {}]
  %s4 = inlined_call_operand.vmem [shape: f32[1,128], index: 4, kind: input, shape index: {}]
  %s5 = inlined_call_operand.vmem [shape: f32[1,128], index: 5, kind: input, shape index: {}]
  %s6 = inlined_call_operand.vmem [shape: f32[2,120,128], index: 6, kind: output, shape index: {}]
  %s7 = sld [smem:[#allocation0]]
  $region57: #{basic_block_forward.5} parent=0
    _
  %s9 = ssub.s32 1, %s7
  %s10 = scalar_select 0, %s9, %s7
  loop: start=0, step=1, limit=4
  $region2: #{basic_block_forward.5} parent=0 // loop_pre_header
    _
  $region3: #{basic_block_forward.5} parent=0 // loop_header
    %s12 = sphi 0, %s16
    %p13 = scmp.ge.s32.totalorder %s12, 4
    %s22 = sphi 0, %s24
    %s25 = sphi 0, %s22
    %s26 = sphi 0, %s25
    %s42 = sphi 0, %s26
    %s46 = sphi 0, %s46
    %s48 = sphi 0, %s46
    %s49 = sphi 0, %s48
    %s63 = sphi 0, %s49
    %s67 = sphi 0, %s67
    %s69 = sphi 0, %s67
    %s70 = sphi 0, %s69
    %s84 = sphi 0, %s70
    %s90 = sphi 0, %s92
    %s93 = sphi 0, %s90
    %s94 = sphi 0, %s93
    %s110 = sphi 0, %s94
    %s114 = sphi 0, %s114
    %s116 = sphi 0, %s114
    %s117 = sphi 0, %s116
    %s131 = sphi 0, %s117
    %s135 = sphi 0, %s135
    %s137 = sphi 0, %s135
    %s138 = sphi 0, %s137
    %s152 = sphi 0, %s138
    %s158 = sphi 0, %s160
    %s161 = sphi 0, %s158
    %s162 = sphi 0, %s161
    %s178 = sphi 0, %s162
  $region4: #{basic_block_forward.5} parent=0 // loop_header_branch
    %15 = sbr.rel (%p13) target = $region8
  $region5: #{basic_block_forward.5} parent=0 // loop_body
    %s17 = ssub.s32 %s12, 1
    %s18 = ssub.s32 %s12, 2
    %s19 = sadd.s32 %s12, 1
    %s20 = ssub.s32 %s12, %s19
    %p21 = scmp.eq.s32.totalorder %s20, 0
    %s23 = sadd.s32 %s22, 1
    %s24 = scalar_select %p21, %s22, %s23
    %p27 = pneg %p21
    %p28 = scmp.eq.s32.totalorder %s12, 1
    %p29 = por %p27, %p28
    %p30 = scmp.ne.s32.totalorder %s22, %s25
    %p31 = scmp.eq.s32.totalorder %s12, 0
    %p32 = por %p30, %p31
    %p33 = scmp.ne.s32.totalorder %s22, %s25
    %p34 = scmp.eq.s32.totalorder %s17, 1
    %p35 = por %p33, %p34
    %p36 = scmp.ne.s32.totalorder %s25, %s26
    %p37 = scmp.eq.s32.totalorder %s17, 0
    %p38 = por %p36, %p37
    %p39 = scmp.ne.s32.totalorder %s25, %s26
    %p40 = scmp.eq.s32.totalorder %s18, 1
    %p41 = por %p39, %p40
    %p43 = scmp.ne.s32.totalorder %s26, %s42
    %p44 = scmp.eq.s32.totalorder %s18, 0
    %p45 = por %p43, %p44
    %s47 = sadd.s32 %s46, 1
    %p50 = scmp.eq.s32.totalorder %s12, 1
    %p51 = scmp.ne.s32.totalorder %s46, %s48
    %p52 = scmp.eq.s32.totalorder %s12, 0
    %p53 = por %p51, %p52
    %p54 = scmp.ne.s32.totalorder %s46, %s48
    %p55 = scmp.eq.s32.totalorder %s17, 1
    %p56 = por %p54, %p55
    %p57 = scmp.ne.s32.totalorder %s48, %s49
    %p58 = scmp.eq.s32.totalorder %s17, 0
    %p59 = por %p57, %p58
    %p60 = scmp.ne.s32.totalorder %s48, %s49
    %p61 = scmp.eq.s32.totalorder %s18, 1
    %p62 = por %p60, %p61
    %p64 = scmp.ne.s32.totalorder %s49, %s63
    %p65 = scmp.eq.s32.totalorder %s18, 0
    %p66 = por %p64, %p65
    %s68 = sadd.s32 %s67, 1
    %p71 = scmp.eq.s32.totalorder %s12, 1
    %p72 = scmp.ne.s32.totalorder %s67, %s69
    %p73 = scmp.eq.s32.totalorder %s12, 0
    %p74 = por %p72, %p73
    %p75 = scmp.ne.s32.totalorder %s67, %s69
    %p76 = scmp.eq.s32.totalorder %s17, 1
    %p77 = por %p75, %p76
    %p78 = scmp.ne.s32.totalorder %s69, %s70
    %p79 = scmp.eq.s32.totalorder %s17, 0
    %p80 = por %p78, %p79
    %p81 = scmp.ne.s32.totalorder %s69, %s70
    %p82 = scmp.eq.s32.totalorder %s18, 1
    %p83 = por %p81, %p82
    %p85 = scmp.ne.s32.totalorder %s70, %s84
    %p86 = scmp.eq.s32.totalorder %s18, 0
    %p87 = por %p85, %p86
    %s88 = ssub.s32 %s12, %s19
    %p89 = scmp.eq.s32.totalorder %s88, 0
    %s91 = sadd.s32 %s90, 1
    %s92 = scalar_select %p89, %s90, %s91
    %p95 = pneg %p89
    %p96 = scmp.eq.s32.totalorder %s12, 1
    %p97 = por %p95, %p96
    %p98 = scmp.ne.s32.totalorder %s90, %s93
    %p99 = scmp.eq.s32.totalorder %s12, 0
    %p100 = por %p98, %p99
    %p101 = scmp.ne.s32.totalorder %s90, %s93
    %p102 = scmp.eq.s32.totalorder %s17, 1
    %p103 = por %p101, %p102
    %p104 = scmp.ne.s32.totalorder %s93, %s94
    %p105 = scmp.eq.s32.totalorder %s17, 0
    %p106 = por %p104, %p105
    %p107 = scmp.ne.s32.totalorder %s93, %s94
    %p108 = scmp.eq.s32.totalorder %s18, 1
    %p109 = por %p107, %p108
    %p111 = scmp.ne.s32.totalorder %s94, %s110
    %p112 = scmp.eq.s32.totalorder %s18, 0
    %p113 = por %p111, %p112
    %s115 = sadd.s32 %s114, 1
    %p118 = scmp.eq.s32.totalorder %s12, 1
    %p119 = scmp.ne.s32.totalorder %s114, %s116
    %p120 = scmp.eq.s32.totalorder %s12, 0
    %p121 = por %p119, %p120
    %p122 = scmp.ne.s32.totalorder %s114, %s116
    %p123 = scmp.eq.s32.totalorder %s17, 1
    %p124 = por %p122, %p123
    %p125 = scmp.ne.s32.totalorder %s116, %s117
    %p126 = scmp.eq.s32.totalorder %s17, 0
    %p127 = por %p125, %p126
    %p128 = scmp.ne.s32.totalorder %s116, %s117
    %p129 = scmp.eq.s32.totalorder %s18, 1
    %p130 = por %p128, %p129
    %p132 = scmp.ne.s32.totalorder %s117, %s131
    %p133 = scmp.eq.s32.totalorder %s18, 0
    %p134 = por %p132, %p133
    %s136 = sadd.s32 %s135, 1
    %p139 = scmp.eq.s32.totalorder %s12, 1
    %p140 = scmp.ne.s32.totalorder %s135, %s137
    %p141 = scmp.eq.s32.totalorder %s12, 0
    %p142 = por %p140, %p141
    %p143 = scmp.ne.s32.totalorder %s135, %s137
    %p144 = scmp.eq.s32.totalorder %s17, 1
    %p145 = por %p143, %p144
    %p146 = scmp.ne.s32.totalorder %s137, %s138
    %p147 = scmp.eq.s32.totalorder %s17, 0
    %p148 = por %p146, %p147
    %p149 = scmp.ne.s32.totalorder %s137, %s138
    %p150 = scmp.eq.s32.totalorder %s18, 1
    %p151 = por %p149, %p150
    %p153 = scmp.ne.s32.totalorder %s138, %s152
    %p154 = scmp.eq.s32.totalorder %s18, 0
    %p155 = por %p153, %p154
    %s156 = ssub.s32 %s12, %s19
    %p157 = scmp.eq.s32.totalorder %s156, 0
    %s159 = sadd.s32 %s158, 1
    %s160 = scalar_select %p157, %s158, %s159
    %p163 = pneg %p157
    %p164 = scmp.eq.s32.totalorder %s12, 1
    %p165 = por %p163, %p164
    %p166 = scmp.ne.s32.totalorder %s158, %s161
    %p167 = scmp.eq.s32.totalorder %s12, 0
    %p168 = por %p166, %p167
    %p169 = scmp.ne.s32.totalorder %s158, %s161
    %p170 = scmp.eq.s32.totalorder %s17, 1
    %p171 = por %p169, %p170
    %p172 = scmp.ne.s32.totalorder %s161, %s162
    %p173 = scmp.eq.s32.totalorder %s17, 0
    %p174 = por %p172, %p173
    %p175 = scmp.ne.s32.totalorder %s161, %s162
    %p176 = scmp.eq.s32.totalorder %s18, 1
    %p177 = por %p175, %p176
    %p179 = scmp.ne.s32.totalorder %s162, %s178
    %p180 = scmp.eq.s32.totalorder %s18, 0
    %p181 = por %p179, %p180
    %p182 = scmp.le.s32.totalorder 1, %s12
    %p183 = scmp.lt.s32.totalorder %s12, 3
    %p184 = pnand %p182, %p183
    %p185 = pneg %p184
    // Predicated region
    $region9: #{basic_block_forward.5} parent=5 // pred_check
      _
    $region10: #{basic_block_forward.5} parent=5 // pred_check_branch
      %187 = sbr.rel (%p184) target = $region12
    $region11: #{basic_block_forward.5} parent=5 // pred_region
      %s188 = ssub.s32 %s12, 1
      // Predicated region
      $region13: #{basic_block_forward.5} parent=11 // pred_check
        %p189 = pneg %p59
      $region14: #{basic_block_forward.5} parent=11 // pred_check_branch
        %191 = sbr.rel (%p189) target = $region16
      $region15: #{basic_block_forward.5} parent=11 // pred_region
        _
      $region16: #{basic_block_forward.5} parent=11 // pred_fallthru
        _
      // Predicated region
      $region17: #{basic_block_forward.5} parent=11 // pred_check
        %p192 = pneg %p80
      $region18: #{basic_block_forward.5} parent=11 // pred_check_branch
        %194 = sbr.rel (%p192) target = $region20
      $region19: #{basic_block_forward.5} parent=11 // pred_region
        _
      $region20: #{basic_block_forward.5} parent=11 // pred_fallthru
        _
      // Predicated region
      $region21: #{basic_block_forward.5} parent=11 // pred_check
        %p195 = pneg %p127
      $region22: #{basic_block_forward.5} parent=11 // pred_check_branch
        %197 = sbr.rel (%p195) target = $region24
      $region23: #{basic_block_forward.5} parent=11 // pred_region
        _
      $region24: #{basic_block_forward.5} parent=11 // pred_fallthru
        _
      // Predicated region
      $region25: #{basic_block_forward.5} parent=11 // pred_check
        %p198 = pneg %p148
      $region26: #{basic_block_forward.5} parent=11 // pred_check_branch
        %200 = sbr.rel (%p198) target = $region28
      $region27: #{basic_block_forward.5} parent=11 // pred_region
        _
      $region28: #{basic_block_forward.5} parent=11 // pred_fallthru
        _
    $region12: #{basic_block_forward.5} parent=5 // pred_fallthru
      _
    %p201 = scmp.lt.s32.totalorder %s12, 2
    // Predicated region
    $region29: #{basic_block_forward.5} parent=5 // pred_check
      %p202 = pneg %p201
    $region30: #{basic_block_forward.5} parent=5 // pred_check_branch
      %204 = sbr.rel (%p202) target = $region32
    $region31: #{basic_block_forward.5} parent=5 // pred_region
      // Predicated region
      $region33: #{basic_block_forward.5} parent=31 // pred_check
        %p205 = pneg %p32
      $region34: #{basic_block_forward.5} parent=31 // pred_check_branch
        %207 = sbr.rel (%p205) target = $region36
      $region35: #{basic_block_forward.5} parent=31 // pred_region
        %p208 = scmp.lt.s32.totalorder %s12, 1
        %s209 = scalar_select %p208, %s12, 1
        %s210 = smul.addr %s209, 15
        %s211 = smul.addr %s210, 4
        %s212 = scalar_lea.vmem %s0, %s211
      $region36: #{basic_block_forward.5} parent=31 // pred_fallthru
        _
      // Predicated region
      $region37: #{basic_block_forward.5} parent=31 // pred_check
        %p213 = pneg %p100
      $region38: #{basic_block_forward.5} parent=31 // pred_check_branch
        %215 = sbr.rel (%p213) target = $region40
      $region39: #{basic_block_forward.5} parent=31 // pred_region
        %p216 = scmp.lt.s32.totalorder %s12, 1
        %s217 = scalar_select %p216, %s12, 1
        %s218 = smul.addr %s217, 15
        %s219 = smul.addr %s218, 4
        %s220 = scalar_lea.vmem %s3, %s219
      $region40: #{basic_block_forward.5} parent=31 // pred_fallthru
        _
    $region32: #{basic_block_forward.5} parent=5 // pred_fallthru
      _
    %p221 = scmp.le.s32.totalorder 1, %s12
    %p222 = scmp.lt.s32.totalorder %s12, 3
    %p223 = pnand %p221, %p222
    %p224 = pneg %p223
    // Predicated region
    $region41: #{basic_block_forward.5} parent=5 // pred_check
      _
    $region42: #{basic_block_forward.5} parent=5 // pred_check_branch
      %226 = sbr.rel (%p223) target = $region44
    $region43: #{basic_block_forward.5} parent=5 // pred_region
      %s227 = ssub.s32 %s12, 1
      %p228 = scmp.lt.s32.totalorder %s17, 1
      %s229 = scalar_select %p228, %s17, 1
      %s230 = smul.addr %s229, 15
      %s231 = smul.addr %s230, 4
      %s232 = scalar_lea.vmem %s0, %s231
      %p233 = pneg %p38
      %p234 = pneg %p35
      %p235 = pneg %p59
      %p236 = pneg %p56
      %p237 = pneg %p80
      %p238 = pneg %p77
      %p239 = scmp.lt.s32.totalorder %s17, 1
      %s240 = scalar_select %p239, %s17, 1
      %s241 = smul.addr %s240, 15
      %s242 = smul.addr %s241, 4
      %s243 = scalar_lea.vmem %s3, %s242
      %p244 = pneg %p106
      %p245 = pneg %p103
      %p246 = pneg %p127
      %p247 = pneg %p124
      %p248 = pneg %p148
      %p249 = pneg %p145
      %p250 = pneg %p174
      %p251 = pneg %p171
      %p252 = scmp.lt.s32.totalorder %s17, 1
      %s253 = scalar_select %p252, %s17, 1
      %s254 = smul.addr %s253, 15
      %s255 = smul.addr %s254, 8
      %s256 = scalar_lea.vmem %s6, %s255
      %p257 = scmp.lt.s32.totalorder %s17, 1
      %s258 = scalar_select %p257, %s17, 1
      %s259 = smul.addr %s258, 15
      %s260 = smul.addr %s259, 4
      %s261 = scalar_lea.vmem %s0, %s260
      %p262 = scmp.lt.s32.totalorder %s17, 1
      %s263 = scalar_select %p262, %s17, 1
      %s264 = smul.addr %s263, 15
      %s265 = smul.addr %s264, 4
      %s266 = scalar_lea.vmem %s3, %s265
      %p267 = scmp.lt.s32.totalorder %s17, 1
      %s268 = scalar_select %p267, %s17, 1
      %s269 = smul.addr %s268, 15
      %s270 = smul.addr %s269, 8
      %s271 = scalar_lea.vmem %s6, %s270
      %v272 = vld [vmem:[%s261] sm:$0xf]
      %v273 = vld [vmem:[%s261 + $0x4] sm:$0xf]
      %v274 = vld [vmem:[%s261 + $0x8] sm:$0xf]
      %v275 = vld [vmem:[%s261 + $0xc] sm:$0xf]
      %v276 = vld [vmem:[%s261 + $0x10] sm:$0xf]
      %v277 = vld [vmem:[%s261 + $0x14] sm:$0xf]
      %v278 = vld [vmem:[%s261 + $0x18] sm:$0xf]
      %v279 = vld [vmem:[%s261 + $0x1c] sm:$0xf]
      %v280 = vld [vmem:[%s261 + $0x20] sm:$0xf]
      %v281 = vld [vmem:[%s261 + $0x24] sm:$0xf]
      %v282 = vld [vmem:[%s261 + $0x28] sm:$0xf]
      %v283 = vld [vmem:[%s261 + $0x2c] sm:$0xf]
      %v284 = vld [vmem:[%s261 + $0x30] sm:$0xf]
      %v285 = vld [vmem:[%s261 + $0x34] sm:$0xf]
      %v286 = vld [vmem:[%s261 + $0x38] sm:$0xf]
      %v287 = vunpack.c.l.bf16 %v272
      %v288 = vunpack.c.l.bf16 %v273
      %v289 = vunpack.c.l.bf16 %v274
      %v290 = vunpack.c.l.bf16 %v275
      %v291 = vunpack.c.l.bf16 %v276
      %v292 = vunpack.c.l.bf16 %v277
      %v293 = vunpack.c.l.bf16 %v278
      %v294 = vunpack.c.l.bf16 %v279
      %v295 = vunpack.c.l.bf16 %v280
      %v296 = vunpack.c.l.bf16 %v281
      %v297 = vunpack.c.l.bf16 %v282
      %v298 = vunpack.c.l.bf16 %v283
      %v299 = vunpack.c.l.bf16 %v284
      %v300 = vunpack.c.l.bf16 %v285
      %v301 = vunpack.c.l.bf16 %v286
      %v302 = vld [vmem:[%s1] sm:$0x1]
      %v304 = vlaneseq
      %v305 = vshrl.u32 %v304, 7
      %v306 = vsub.s32 0, %v305
      %v307 = vrot.slane %v302, %v306
      %v309 = vmul.f32 %v287, %v307
      %v310 = vmul.f32 %v288, %v307
      %v311 = vmul.f32 %v289, %v307
      %v312 = vmul.f32 %v290, %v307
      %v313 = vmul.f32 %v291, %v307
      %v314 = vmul.f32 %v292, %v307
      %v315 = vmul.f32 %v293, %v307
      %v316 = vmul.f32 %v294, %v307
      %v317 = vmul.f32 %v295, %v307
      %v318 = vmul.f32 %v296, %v307
      %v319 = vmul.f32 %v297, %v307
      %v320 = vmul.f32 %v298, %v307
      %v321 = vmul.f32 %v299, %v307
      %v322 = vmul.f32 %v300, %v307
      %v323 = vmul.f32 %v301, %v307
      %v324 = vld [vmem:[%s2] sm:$0x1]
      %v326 = vlaneseq
      %v327 = vshrl.u32 %v326, 7
      %v328 = vsub.s32 0, %v327
      %v329 = vrot.slane %v324, %v328
      %v331 = vadd.f32 %v309, %v329
      %v332 = vadd.f32 %v310, %v329
      %v333 = vadd.f32 %v311, %v329
      %v334 = vadd.f32 %v312, %v329
      %v335 = vadd.f32 %v313, %v329
      %v336 = vadd.f32 %v314, %v329
      %v337 = vadd.f32 %v315, %v329
      %v338 = vadd.f32 %v316, %v329
      %v339 = vadd.f32 %v317, %v329
      %v340 = vadd.f32 %v318, %v329
      %v341 = vadd.f32 %v319, %v329
      %v342 = vadd.f32 %v320, %v329
      %v343 = vadd.f32 %v321, %v329
      %v344 = vadd.f32 %v322, %v329
      %v345 = vadd.f32 %v323, %v329
      %v346 = vld [vmem:[%s266] sm:$0xf]
      %v347 = vld [vmem:[%s266 + $0x4] sm:$0xf]
      %v348 = vld [vmem:[%s266 + $0x8] sm:$0xf]
      %v349 = vld [vmem:[%s266 + $0xc] sm:$0xf]
      %v350 = vld [vmem:[%s266 + $0x10] sm:$0xf]
      %v351 = vld [vmem:[%s266 + $0x14] sm:$0xf]
      %v352 = vld [vmem:[%s266 + $0x18] sm:$0xf]
      %v353 = vld [vmem:[%s266 + $0x1c] sm:$0xf]
      %v354 = vld [vmem:[%s266 + $0x20] sm:$0xf]
      %v355 = vld [vmem:[%s266 + $0x24] sm:$0xf]
      %v356 = vld [vmem:[%s266 + $0x28] sm:$0xf]
      %v357 = vld [vmem:[%s266 + $0x2c] sm:$0xf]
      %v358 = vld [vmem:[%s266 + $0x30] sm:$0xf]
      %v359 = vld [vmem:[%s266 + $0x34] sm:$0xf]
      %v360 = vld [vmem:[%s266 + $0x38] sm:$0xf]
      %v361 = vunpack.c.l.bf16 %v346
      %v362 = vunpack.c.l.bf16 %v347
      %v363 = vunpack.c.l.bf16 %v348
      %v364 = vunpack.c.l.bf16 %v349
      %v365 = vunpack.c.l.bf16 %v350
      %v366 = vunpack.c.l.bf16 %v351
      %v367 = vunpack.c.l.bf16 %v352
      %v368 = vunpack.c.l.bf16 %v353
      %v369 = vunpack.c.l.bf16 %v354
      %v370 = vunpack.c.l.bf16 %v355
      %v371 = vunpack.c.l.bf16 %v356
      %v372 = vunpack.c.l.bf16 %v357
      %v373 = vunpack.c.l.bf16 %v358
      %v374 = vunpack.c.l.bf16 %v359
      %v375 = vunpack.c.l.bf16 %v360
      %v376 = vld [vmem:[%s4] sm:$0x1]
      %v378 = vlaneseq
      %v379 = vshrl.u32 %v378, 7
      %v380 = vsub.s32 0, %v379
      %v381 = vrot.slane %v376, %v380
      %v383 = vmul.f32 %v361, %v381
      %v384 = vmul.f32 %v362, %v381
      %v385 = vmul.f32 %v363, %v381
      %v386 = vmul.f32 %v364, %v381
      %v387 = vmul.f32 %v365, %v381
      %v388 = vmul.f32 %v366, %v381
      %v389 = vmul.f32 %v367, %v381
      %v390 = vmul.f32 %v368, %v381
      %v391 = vmul.f32 %v369, %v381
      %v392 = vmul.f32 %v370, %v381
      %v393 = vmul.f32 %v371, %v381
      %v394 = vmul.f32 %v372, %v381
      %v395 = vmul.f32 %v373, %v381
      %v396 = vmul.f32 %v374, %v381
      %v397 = vmul.f32 %v375, %v381
      %v398 = vld [vmem:[%s5] sm:$0x1]
      %v400 = vlaneseq
      %v401 = vshrl.u32 %v400, 7
      %v402 = vsub.s32 0, %v401
      %v403 = vrot.slane %v398, %v402
      %v405 = vadd.f32 %v383, %v403
      %v406 = vadd.f32 %v384, %v403
      %v407 = vadd.f32 %v385, %v403
      %v408 = vadd.f32 %v386, %v403
      %v409 = vadd.f32 %v387, %v403
      %v410 = vadd.f32 %v388, %v403
      %v411 = vadd.f32 %v389, %v403
      %v412 = vadd.f32 %v390, %v403
      %v413 = vadd.f32 %v391, %v403
      %v414 = vadd.f32 %v392, %v403
      %v415 = vadd.f32 %v393, %v403
      %v416 = vadd.f32 %v394, %v403
      %v417 = vadd.f32 %v395, %v403
      %v418 = vadd.f32 %v396, %v403
      %v419 = vadd.f32 %v397, %v403
      %v420 = vadd.f32 %v331, %v405
      %v421 = vadd.f32 %v332, %v406
      %v422 = vadd.f32 %v333, %v407
      %v423 = vadd.f32 %v334, %v408
      %v424 = vadd.f32 %v335, %v409
      %v425 = vadd.f32 %v336, %v410
      %v426 = vadd.f32 %v337, %v411
      %v427 = vadd.f32 %v338, %v412
      %v428 = vadd.f32 %v339, %v413
      %v429 = vadd.f32 %v340, %v414
      %v430 = vadd.f32 %v341, %v415
      %v431 = vadd.f32 %v342, %v416
      %v432 = vadd.f32 %v343, %v417
      %v433 = vadd.f32 %v344, %v418
      %v434 = vadd.f32 %v345, %v419
      %v435 = vmax.f32 %v420, 0.0
      %v436 = vmax.f32 %v421, 0.0
      %v437 = vmax.f32 %v422, 0.0
      %v438 = vmax.f32 %v423, 0.0
      %v439 = vmax.f32 %v424, 0.0
      %v440 = vmax.f32 %v425, 0.0
      %v441 = vmax.f32 %v426, 0.0
      %v442 = vmax.f32 %v427, 0.0
      %v443 = vmax.f32 %v428, 0.0
      %v444 = vmax.f32 %v429, 0.0
      %v445 = vmax.f32 %v430, 0.0
      %v446 = vmax.f32 %v431, 0.0
      %v447 = vmax.f32 %v432, 0.0
      %v448 = vmax.f32 %v433, 0.0
      %v449 = vmax.f32 %v434, 0.0
      %450 = vst [vmem:[%s271] sm:$0xff] %v435
      %451 = vst [vmem:[%s271 + $0x8] sm:$0xff] %v436
      %452 = vst [vmem:[%s271 + $0x10] sm:$0xff] %v437
      %453 = vst [vmem:[%s271 + $0x18] sm:$0xff] %v438
      %454 = vst [vmem:[%s271 + $0x20] sm:$0xff] %v439
      %455 = vst [vmem:[%s271 + $0x28] sm:$0xff] %v440
      %456 = vst [vmem:[%s271 + $0x30] sm:$0xff] %v441
      %457 = vst [vmem:[%s271 + $0x38] sm:$0xff] %v442
      %458 = vst [vmem:[%s271 + $0x40] sm:$0xff] %v443
      %459 = vst [vmem:[%s271 + $0x48] sm:$0xff] %v444
      %460 = vst [vmem:[%s271 + $0x50] sm:$0xff] %v445
      %461 = vst [vmem:[%s271 + $0x58] sm:$0xff] %v446
      %462 = vst [vmem:[%s271 + $0x60] sm:$0xff] %v447
      %463 = vst [vmem:[%s271 + $0x68] sm:$0xff] %v448
      %464 = vst [vmem:[%s271 + $0x70] sm:$0xff] %v449
      %p465 = scmp.lt.s32.totalorder %s17, 1
      %s466 = scalar_select %p465, %s17, 1
      %s467 = smul.addr %s466, 15
      %s468 = smul.addr %s467, 8
      %s469 = scalar_lea.vmem %s6, %s468
      // Predicated region
      $region45: #{basic_block_forward.5} parent=43 // pred_check
        %p470 = pneg %p171
      $region46: #{basic_block_forward.5} parent=43 // pred_check_branch
        %472 = sbr.rel (%p470) target = $region48
      $region47: #{basic_block_forward.5} parent=43 // pred_region
        _
      $region48: #{basic_block_forward.5} parent=43 // pred_fallthru
        _
    $region44: #{basic_block_forward.5} parent=5 // pred_fallthru
      _
    %p473 = scmp.le.s32.totalorder 2, %s12
    // Predicated region
    $region49: #{basic_block_forward.5} parent=5 // pred_check
      %p474 = pneg %p473
    $region50: #{basic_block_forward.5} parent=5 // pred_check_branch
      %476 = sbr.rel (%p474) target = $region52
    $region51: #{basic_block_forward.5} parent=5 // pred_region
      %s477 = ssub.s32 %s12, 2
      // Predicated region
      $region53: #{basic_block_forward.5} parent=51 // pred_check
        %p478 = pneg %p177
      $region54: #{basic_block_forward.5} parent=51 // pred_check_branch
        %480 = sbr.rel (%p478) target = $region56
      $region55: #{basic_block_forward.5} parent=51 // pred_region
        %p481 = scmp.lt.s32.totalorder %s18, 1
        %s482 = scalar_select %p481, %s18, 1
        %s483 = smul.addr %s482, 15
        %s484 = smul.addr %s483, 8
        %s485 = scalar_lea.vmem %s6, %s484
      $region56: #{basic_block_forward.5} parent=51 // pred_fallthru
        _
    $region52: #{basic_block_forward.5} parent=5 // pred_fallthru
      _
  $region6: #{basic_block_forward.5} parent=0 // loop_footer
    %s16 = sadd.s32 1, %s12
  $region7: #{basic_block_forward.5} parent=0 // loop_footer_branch
    %11 = sbr.rel target = $region3
  $region8: #{basic_block_forward.5} parent=0 // loop_exit
    _

// kernel: basic_block_forward.3
$region0: #{basic_block_forward.3}
  #allocation0 [shape = 'u32[]', space=smem, size = 0x4, offset = 0x4, fixed_abs, tag = 'smem constant byte address 0x4 - core index']
  #allocation1 [shape = 'u32[144,128]{1,0:T(1,128)}', space=vmem, size = 0x12000, scoped, tag = 'internal scratch']
  %s0 = inlined_call_operand.vmem [shape: bf16[2,144,128], index: 0, kind: input, shape index: {}]
  %s1 = inlined_call_operand.vmem [shape: f32[160,1], index: 1, kind: input, shape index: {}]
  %s2 = inlined_call_operand.vmem [shape: bf16[4,128,128], index: 2, kind: input, shape index: {}]
  %s3 = inlined_call_operand.vmem [shape: bf16[2,120,128], index: 3, kind: input, shape index: {}]
  %s4 = inlined_call_operand.vmem [shape: bf16[128,128], index: 4, kind: input, shape index: {}]
  %s5 = inlined_call_operand.vmem [shape: bf16[2,160,128], index: 5, kind: output, shape index: {0}]
  %s6 = inlined_call_operand.vmem [shape: f32[2,2,128], index: 6, kind: output, shape index: {1}]
  %s7 = inlined_call_operand.vmem [shape: bf16[2,120,128], index: 7, kind: output, shape index: {2}]
  %s8 = inlined_call_operand.vmem [shape: f32[2,2,128], index: 8, kind: output, shape index: {3}]
  %9 = xla_tuple %s5, %s6, %s7, %s8
  %s10 = sld [smem:[#allocation0]]
  $region77: #{basic_block_forward.3} parent=0
    _
  %s12 = ssub.s32 1, %s10
  %s13 = scalar_select 0, %s12, %s10
  loop: start=0, step=1, limit=4
  $region2: #{basic_block_forward.3} parent=0 // loop_pre_header
    _
  $region3: #{basic_block_forward.3} parent=0 // loop_header
    %s15 = sphi 0, %s19
    %p16 = scmp.ge.s32.totalorder %s15, 4
    %s25 = sphi 0, %s27
    %s28 = sphi 0, %s25
    %s29 = sphi 0, %s28
    %s45 = sphi 0, %s29
    %s49 = sphi 0, %s49
    %s51 = sphi 0, %s49
    %s52 = sphi 0, %s51
    %s66 = sphi 0, %s52
    %s70 = sphi 0, %s70
    %s72 = sphi 0, %s70
    %s73 = sphi 0, %s72
    %s87 = sphi 0, %s73
    %s93 = sphi 0, %s95
    %s96 = sphi 0, %s93
    %s97 = sphi 0, %s96
    %s113 = sphi 0, %s97
    %s117 = sphi 0, %s117
    %s119 = sphi 0, %s117
    %s120 = sphi 0, %s119
    %s134 = sphi 0, %s120
    %s140 = sphi 0, %s142
    %s143 = sphi 0, %s140
    %s144 = sphi 0, %s143
    %s160 = sphi 0, %s144
    %s166 = sphi 0, %s168
    %s169 = sphi 0, %s166
    %s170 = sphi 0, %s169
    %s186 = sphi 0, %s170
    %s192 = sphi 0, %s194
    %s195 = sphi 0, %s192
    %s196 = sphi 0, %s195
    %s212 = sphi 0, %s196
    %s218 = sphi 0, %s220
    %s221 = sphi 0, %s218
    %s222 = sphi 0, %s221
    %s238 = sphi 0, %s222
  $region4: #{basic_block_forward.3} parent=0 // loop_header_branch
    %18 = sbr.rel (%p16) target = $region8
  $region5: #{basic_block_forward.3} parent=0 // loop_body
    %s20 = ssub.s32 %s15, 1
    %s21 = ssub.s32 %s15, 2
    %s22 = sadd.s32 %s15, 1
    %s23 = ssub.s32 %s15, %s22
    %p24 = scmp.eq.s32.totalorder %s23, 0
    %s26 = sadd.s32 %s25, 1
    %s27 = scalar_select %p24, %s25, %s26
    %p30 = pneg %p24
    %p31 = scmp.eq.s32.totalorder %s15, 1
    %p32 = por %p30, %p31
    %p33 = scmp.ne.s32.totalorder %s25, %s28
    %p34 = scmp.eq.s32.totalorder %s15, 0
    %p35 = por %p33, %p34
    %p36 = scmp.ne.s32.totalorder %s25, %s28
    %p37 = scmp.eq.s32.totalorder %s20, 1
    %p38 = por %p36, %p37
    %p39 = scmp.ne.s32.totalorder %s28, %s29
    %p40 = scmp.eq.s32.totalorder %s20, 0
    %p41 = por %p39, %p40
    %p42 = scmp.ne.s32.totalorder %s28, %s29
    %p43 = scmp.eq.s32.totalorder %s21, 1
    %p44 = por %p42, %p43
    %p46 = scmp.ne.s32.totalorder %s29, %s45
    %p47 = scmp.eq.s32.totalorder %s21, 0
    %p48 = por %p46, %p47
    %s50 = sadd.s32 %s49, 1
    %p53 = scmp.eq.s32.totalorder %s15, 1
    %p54 = scmp.ne.s32.totalorder %s49, %s51
    %p55 = scmp.eq.s32.totalorder %s15, 0
    %p56 = por %p54, %p55
    %p57 = scmp.ne.s32.totalorder %s49, %s51
    %p58 = scmp.eq.s32.totalorder %s20, 1
    %p59 = por %p57, %p58
    %p60 = scmp.ne.s32.totalorder %s51, %s52
    %p61 = scmp.eq.s32.totalorder %s20, 0
    %p62 = por %p60, %p61
    %p63 = scmp.ne.s32.totalorder %s51, %s52
    %p64 = scmp.eq.s32.totalorder %s21, 1
    %p65 = por %p63, %p64
    %p67 = scmp.ne.s32.totalorder %s52, %s66
    %p68 = scmp.eq.s32.totalorder %s21, 0
    %p69 = por %p67, %p68
    %s71 = sadd.s32 %s70, 1
    %p74 = scmp.eq.s32.totalorder %s15, 1
    %p75 = scmp.ne.s32.totalorder %s70, %s72
    %p76 = scmp.eq.s32.totalorder %s15, 0
    %p77 = por %p75, %p76
    %p78 = scmp.ne.s32.totalorder %s70, %s72
    %p79 = scmp.eq.s32.totalorder %s20, 1
    %p80 = por %p78, %p79
    %p81 = scmp.ne.s32.totalorder %s72, %s73
    %p82 = scmp.eq.s32.totalorder %s20, 0
    %p83 = por %p81, %p82
    %p84 = scmp.ne.s32.totalorder %s72, %s73
    %p85 = scmp.eq.s32.totalorder %s21, 1
    %p86 = por %p84, %p85
    %p88 = scmp.ne.s32.totalorder %s73, %s87
    %p89 = scmp.eq.s32.totalorder %s21, 0
    %p90 = por %p88, %p89
    %s91 = ssub.s32 %s15, %s22
    %p92 = scmp.eq.s32.totalorder %s91, 0
    %s94 = sadd.s32 %s93, 1
    %s95 = scalar_select %p92, %s93, %s94
    %p98 = pneg %p92
    %p99 = scmp.eq.s32.totalorder %s15, 1
    %p100 = por %p98, %p99
    %p101 = scmp.ne.s32.totalorder %s93, %s96
    %p102 = scmp.eq.s32.totalorder %s15, 0
    %p103 = por %p101, %p102
    %p104 = scmp.ne.s32.totalorder %s93, %s96
    %p105 = scmp.eq.s32.totalorder %s20, 1
    %p106 = por %p104, %p105
    %p107 = scmp.ne.s32.totalorder %s96, %s97
    %p108 = scmp.eq.s32.totalorder %s20, 0
    %p109 = por %p107, %p108
    %p110 = scmp.ne.s32.totalorder %s96, %s97
    %p111 = scmp.eq.s32.totalorder %s21, 1
    %p112 = por %p110, %p111
    %p114 = scmp.ne.s32.totalorder %s97, %s113
    %p115 = scmp.eq.s32.totalorder %s21, 0
    %p116 = por %p114, %p115
    %s118 = sadd.s32 %s117, 1
    %p121 = scmp.eq.s32.totalorder %s15, 1
    %p122 = scmp.ne.s32.totalorder %s117, %s119
    %p123 = scmp.eq.s32.totalorder %s15, 0
    %p124 = por %p122, %p123
    %p125 = scmp.ne.s32.totalorder %s117, %s119
    %p126 = scmp.eq.s32.totalorder %s20, 1
    %p127 = por %p125, %p126
    %p128 = scmp.ne.s32.totalorder %s119, %s120
    %p129 = scmp.eq.s32.totalorder %s20, 0
    %p130 = por %p128, %p129
    %p131 = scmp.ne.s32.totalorder %s119, %s120
    %p132 = scmp.eq.s32.totalorder %s21, 1
    %p133 = por %p131, %p132
    %p135 = scmp.ne.s32.totalorder %s120, %s134
    %p136 = scmp.eq.s32.totalorder %s21, 0
    %p137 = por %p135, %p136
    %s138 = ssub.s32 %s15, %s22
    %p139 = scmp.eq.s32.totalorder %s138, 0
    %s141 = sadd.s32 %s140, 1
    %s142 = scalar_select %p139, %s140, %s141
    %p145 = pneg %p139
    %p146 = scmp.eq.s32.totalorder %s15, 1
    %p147 = por %p145, %p146
    %p148 = scmp.ne.s32.totalorder %s140, %s143
    %p149 = scmp.eq.s32.totalorder %s15, 0
    %p150 = por %p148, %p149
    %p151 = scmp.ne.s32.totalorder %s140, %s143
    %p152 = scmp.eq.s32.totalorder %s20, 1
    %p153 = por %p151, %p152
    %p154 = scmp.ne.s32.totalorder %s143, %s144
    %p155 = scmp.eq.s32.totalorder %s20, 0
    %p156 = por %p154, %p155
    %p157 = scmp.ne.s32.totalorder %s143, %s144
    %p158 = scmp.eq.s32.totalorder %s21, 1
    %p159 = por %p157, %p158
    %p161 = scmp.ne.s32.totalorder %s144, %s160
    %p162 = scmp.eq.s32.totalorder %s21, 0
    %p163 = por %p161, %p162
    %s164 = ssub.s32 %s15, %s22
    %p165 = scmp.eq.s32.totalorder %s164, 0
    %s167 = sadd.s32 %s166, 1
    %s168 = scalar_select %p165, %s166, %s167
    %p171 = pneg %p165
    %p172 = scmp.eq.s32.totalorder %s15, 1
    %p173 = por %p171, %p172
    %p174 = scmp.ne.s32.totalorder %s166, %s169
    %p175 = scmp.eq.s32.totalorder %s15, 0
    %p176 = por %p174, %p175
    %p177 = scmp.ne.s32.totalorder %s166, %s169
    %p178 = scmp.eq.s32.totalorder %s20, 1
    %p179 = por %p177, %p178
    %p180 = scmp.ne.s32.totalorder %s169, %s170
    %p181 = scmp.eq.s32.totalorder %s20, 0
    %p182 = por %p180, %p181
    %p183 = scmp.ne.s32.totalorder %s169, %s170
    %p184 = scmp.eq.s32.totalorder %s21, 1
    %p185 = por %p183, %p184
    %p187 = scmp.ne.s32.totalorder %s170, %s186
    %p188 = scmp.eq.s32.totalorder %s21, 0
    %p189 = por %p187, %p188
    %s190 = ssub.s32 %s15, %s22
    %p191 = scmp.eq.s32.totalorder %s190, 0
    %s193 = sadd.s32 %s192, 1
    %s194 = scalar_select %p191, %s192, %s193
    %p197 = pneg %p191
    %p198 = scmp.eq.s32.totalorder %s15, 1
    %p199 = por %p197, %p198
    %p200 = scmp.ne.s32.totalorder %s192, %s195
    %p201 = scmp.eq.s32.totalorder %s15, 0
    %p202 = por %p200, %p201
    %p203 = scmp.ne.s32.totalorder %s192, %s195
    %p204 = scmp.eq.s32.totalorder %s20, 1
    %p205 = por %p203, %p204
    %p206 = scmp.ne.s32.totalorder %s195, %s196
    %p207 = scmp.eq.s32.totalorder %s20, 0
    %p208 = por %p206, %p207
    %p209 = scmp.ne.s32.totalorder %s195, %s196
    %p210 = scmp.eq.s32.totalorder %s21, 1
    %p211 = por %p209, %p210
    %p213 = scmp.ne.s32.totalorder %s196, %s212
    %p214 = scmp.eq.s32.totalorder %s21, 0
    %p215 = por %p213, %p214
    %s216 = ssub.s32 %s15, %s22
    %p217 = scmp.eq.s32.totalorder %s216, 0
    %s219 = sadd.s32 %s218, 1
    %s220 = scalar_select %p217, %s218, %s219
    %p223 = pneg %p217
    %p224 = scmp.eq.s32.totalorder %s15, 1
    %p225 = por %p223, %p224
    %p226 = scmp.ne.s32.totalorder %s218, %s221
    %p227 = scmp.eq.s32.totalorder %s15, 0
    %p228 = por %p226, %p227
    %p229 = scmp.ne.s32.totalorder %s218, %s221
    %p230 = scmp.eq.s32.totalorder %s20, 1
    %p231 = por %p229, %p230
    %p232 = scmp.ne.s32.totalorder %s221, %s222
    %p233 = scmp.eq.s32.totalorder %s20, 0
    %p234 = por %p232, %p233
    %p235 = scmp.ne.s32.totalorder %s221, %s222
    %p236 = scmp.eq.s32.totalorder %s21, 1
    %p237 = por %p235, %p236
    %p239 = scmp.ne.s32.totalorder %s222, %s238
    %p240 = scmp.eq.s32.totalorder %s21, 0
    %p241 = por %p239, %p240
    %p242 = scmp.le.s32.totalorder 1, %s15
    %p243 = scmp.lt.s32.totalorder %s15, 3
    %p244 = pnand %p242, %p243
    %p245 = pneg %p244
    // Predicated region
    $region9: #{basic_block_forward.3} parent=5 // pred_check
      _
    $region10: #{basic_block_forward.3} parent=5 // pred_check_branch
      %247 = sbr.rel (%p244) target = $region12
    $region11: #{basic_block_forward.3} parent=5 // pred_region
      %s248 = ssub.s32 %s15, 1
      // Predicated region
      $region13: #{basic_block_forward.3} parent=11 // pred_check
        %p249 = pneg %p62
      $region14: #{basic_block_forward.3} parent=11 // pred_check_branch
        %251 = sbr.rel (%p249) target = $region16
      $region15: #{basic_block_forward.3} parent=11 // pred_region
        _
      $region16: #{basic_block_forward.3} parent=11 // pred_fallthru
        _
      // Predicated region
      $region17: #{basic_block_forward.3} parent=11 // pred_check
        %p252 = pneg %p83
      $region18: #{basic_block_forward.3} parent=11 // pred_check_branch
        %254 = sbr.rel (%p252) target = $region20
      $region19: #{basic_block_forward.3} parent=11 // pred_region
        _
      $region20: #{basic_block_forward.3} parent=11 // pred_fallthru
        _
      // Predicated region
      $region21: #{basic_block_forward.3} parent=11 // pred_check
        %p255 = pneg %p130
      $region22: #{basic_block_forward.3} parent=11 // pred_check_branch
        %257 = sbr.rel (%p255) target = $region24
      $region23: #{basic_block_forward.3} parent=11 // pred_region
        _
      $region24: #{basic_block_forward.3} parent=11 // pred_fallthru
        _
    $region12: #{basic_block_forward.3} parent=5 // pred_fallthru
      _
    %p258 = scmp.lt.s32.totalorder %s15, 2
    // Predicated region
    $region25: #{basic_block_forward.3} parent=5 // pred_check
      %p259 = pneg %p258
    $region26: #{basic_block_forward.3} parent=5 // pred_check_branch
      %261 = sbr.rel (%p259) target = $region28
    $region27: #{basic_block_forward.3} parent=5 // pred_region
      // Predicated region
      $region29: #{basic_block_forward.3} parent=27 // pred_check
        %p262 = pneg %p35
      $region30: #{basic_block_forward.3} parent=27 // pred_check_branch
        %264 = sbr.rel (%p262) target = $region32
      $region31: #{basic_block_forward.3} parent=27 // pred_region
        %p265 = scmp.lt.s32.totalorder %s15, 1
        %s266 = scalar_select %p265, %s15, 1
        %s267 = smul.addr %s266, 18
        %s268 = smul.addr %s267, 4
        %s269 = scalar_lea.vmem %s0, %s268
      $region32: #{basic_block_forward.3} parent=27 // pred_fallthru
        _
      // Predicated region
      $region33: #{basic_block_forward.3} parent=27 // pred_check
        %p270 = pneg %p103
      $region34: #{basic_block_forward.3} parent=27 // pred_check_branch
        %272 = sbr.rel (%p270) target = $region36
      $region35: #{basic_block_forward.3} parent=27 // pred_region
        %p273 = scmp.lt.s32.totalorder %s15, 1
        %s274 = scalar_select %p273, %s15, 1
        %s275 = smul.addr %s274, 15
        %s276 = smul.addr %s275, 4
        %s277 = scalar_lea.vmem %s3, %s276
      $region36: #{basic_block_forward.3} parent=27 // pred_fallthru
        _
    $region28: #{basic_block_forward.3} parent=5 // pred_fallthru
      _
    %p278 = scmp.le.s32.totalorder 1, %s15
    %p279 = scmp.lt.s32.totalorder %s15, 3
    %p280 = pnand %p278, %p279
    %p281 = pneg %p280
    // Predicated region
    $region37: #{basic_block_forward.3} parent=5 // pred_check
      _
    $region38: #{basic_block_forward.3} parent=5 // pred_check_branch
      %283 = sbr.rel (%p280) target = $region40
    $region39: #{basic_block_forward.3} parent=5 // pred_region
      %s284 = ssub.s32 %s15, 1
      %p285 = scmp.lt.s32.totalorder %s20, 1
      %s286 = scalar_select %p285, %s20, 1
      %s287 = smul.addr %s286, 18
      %s288 = smul.addr %s287, 4
      %s289 = scalar_lea.vmem %s0, %s288
      %p290 = pneg %p41
      %p291 = pneg %p38
      %p292 = pneg %p62
      %p293 = pneg %p59
      %p294 = pneg %p83
      %p295 = pneg %p80
      %p296 = scmp.lt.s32.totalorder %s20, 1
      %s297 = scalar_select %p296, %s20, 1
      %s298 = smul.addr %s297, 15
      %s299 = smul.addr %s298, 4
      %s300 = scalar_lea.vmem %s3, %s299
      %p301 = pneg %p109
      %p302 = pneg %p106
      %p303 = pneg %p130
      %p304 = pneg %p127
      %p305 = pneg %p156
      %p306 = pneg %p153
      %p307 = scmp.lt.s32.totalorder %s20, 1
      %s308 = scalar_select %p307, %s20, 1
      %s309 = smul.addr %s308, 20
      %s310 = smul.addr %s309, 4
      %s311 = scalar_lea.vmem %s5, %s310
      %p312 = pneg %p182
      %p313 = pneg %p179
      %p314 = scmp.lt.s32.totalorder %s20, 1
      %s315 = scalar_select %p314, %s20, 1
      %s316 = smul.addr %s315, 2
      %s317 = scalar_lea.vmem %s6, %s316
      %p318 = pneg %p208
      %p319 = pneg %p205
      %p320 = scmp.lt.s32.totalorder %s20, 1
      %s321 = scalar_select %p320, %s20, 1
      %s322 = smul.addr %s321, 15
      %s323 = smul.addr %s322, 4
      %s324 = scalar_lea.vmem %s7, %s323
      %p325 = pneg %p234
      %p326 = pneg %p231
      %p327 = scmp.lt.s32.totalorder %s20, 1
      %s328 = scalar_select %p327, %s20, 1
      %s329 = smul.addr %s328, 2
      %s330 = scalar_lea.vmem %s8, %s329
      %p331 = scmp.lt.s32.totalorder %s20, 1
      %s332 = scalar_select %p331, %s20, 1
      %s333 = smul.addr %s332, 18
      %s334 = smul.addr %s333, 4
      %s335 = scalar_lea.vmem %s0, %s334
      %p336 = scmp.lt.s32.totalorder %s20, 1
      %s337 = scalar_select %p336, %s20, 1
      %s338 = smul.addr %s337, 15
      %s339 = smul.addr %s338, 4
      %s340 = scalar_lea.vmem %s3, %s339
      %p341 = scmp.lt.s32.totalorder %s20, 1
      %s342 = scalar_select %p341, %s20, 1
      %s343 = smul.addr %s342, 20
      %s344 = smul.addr %s343, 4
      %s345 = scalar_lea.vmem %s5, %s344
      %p346 = scmp.lt.s32.totalorder %s20, 1
      %s347 = scalar_select %p346, %s20, 1
      %s348 = smul.addr %s347, 2
      %s349 = scalar_lea.vmem %s6, %s348
      %p350 = scmp.lt.s32.totalorder %s20, 1
      %s351 = scalar_select %p350, %s20, 1
      %s352 = smul.addr %s351, 15
      %s353 = smul.addr %s352, 4
      %s354 = scalar_lea.vmem %s7, %s353
      %p355 = scmp.lt.s32.totalorder %s20, 1
      %s356 = scalar_select %p355, %s20, 1
      %s357 = smul.addr %s356, 2
      %s358 = scalar_lea.vmem %s8, %s357
      %v360 = vld [vmem:[%s1 + $0x11] sm:$0xff]
      %v361 = vld [vmem:[%s1 + $0x19] sm:$0xff]
      %v362 = vld [vmem:[%s1 + $0x21] sm:$0xff]
      %v363 = vld [vmem:[%s1 + $0x29] sm:$0xff]
      %v364 = vld [vmem:[%s1 + $0x31] sm:$0xff]
      %v365 = vld [vmem:[%s1 + $0x39] sm:$0xff]
      %v366 = vld [vmem:[%s1 + $0x41] sm:$0xff]
      %v367 = vld [vmem:[%s1 + $0x49] sm:$0xff]
      %v368 = vld [vmem:[%s1 + $0x51] sm:$0xff]
      %v369 = vld [vmem:[%s1 + $0x59] sm:$0xff]
      %v370 = vld [vmem:[%s1 + $0x61] sm:$0xff]
      %v371 = vld [vmem:[%s1 + $0x69] sm:$0xff]
      %v372 = vld [vmem:[%s1 + $0x71] sm:$0xff]
      %v373 = vld [vmem:[%s1 + $0x79] sm:$0xff]
      %v374 = vld [vmem:[%s1 + $0x81] sm:$0xff]
      %v375 = vld [vmem:[%s335] sm:$0xf]
      %v376 = vld [vmem:[%s335 + $0x4] sm:$0xf]
      %v377 = vld [vmem:[%s335 + $0x8] sm:$0xf]
      %v378 = vld [vmem:[%s335 + $0xc] sm:$0xf]
      %v379 = vld [vmem:[%s335 + $0x10] sm:$0xf]
      %v380 = vld [vmem:[%s335 + $0x14] sm:$0xf]
      %v381 = vld [vmem:[%s335 + $0x18] sm:$0xf]
      %v382 = vld [vmem:[%s335 + $0x1c] sm:$0xf]
      %v383 = vld [vmem:[%s335 + $0x20] sm:$0xf]
      %v384 = vld [vmem:[%s335 + $0x24] sm:$0xf]
      %v385 = vld [vmem:[%s335 + $0x28] sm:$0xf]
      %v386 = vld [vmem:[%s335 + $0x2c] sm:$0xf]
      %v387 = vld [vmem:[%s335 + $0x30] sm:$0xf]
      %v388 = vld [vmem:[%s335 + $0x34] sm:$0xf]
      %v389 = vld [vmem:[%s335 + $0x38] sm:$0xf]
      %v390 = vld [vmem:[%s2] sm:$0xf]
      %v391 = vld [vmem:[%s2 + $0x4] sm:$0xf]
      %v392 = vld [vmem:[%s2 + $0x8] sm:$0xf]
      %v393 = vld [vmem:[%s2 + $0xc] sm:$0xf]
      %v394 = vld [vmem:[%s2 + $0x10] sm:$0xf]
      %v395 = vld [vmem:[%s2 + $0x14] sm:$0xf]
      %v396 = vld [vmem:[%s2 + $0x18] sm:$0xf]
      %v397 = vld [vmem:[%s2 + $0x1c] sm:$0xf]
      %v398 = vld [vmem:[%s2 + $0x20] sm:$0xf]
      %v399 = vld [vmem:[%s2 + $0x24] sm:$0xf]
      %v400 = vld [vmem:[%s2 + $0x28] sm:$0xf]
      %v401 = vld [vmem:[%s2 + $0x2c] sm:$0xf]
      %v402 = vld [vmem:[%s2 + $0x30] sm:$0xf]
      %v403 = vld [vmem:[%s2 + $0x34] sm:$0xf]
      %v404 = vld [vmem:[%s2 + $0x38] sm:$0xf]
      %v405 = vld [vmem:[%s2 + $0x3c] sm:$0xf]
      %v406 = vld [vmem:[%s335 + $0x3c] sm:$0x1]
      %s407 = scalar_lea.vmem %s2, 64
      %v408 = vld [vmem:[%s407] sm:$0xf]
      %v409 = vld [vmem:[%s407 + $0x4] sm:$0xf]
      %v410 = vld [vmem:[%s407 + $0x8] sm:$0xf]
      %v411 = vld [vmem:[%s407 + $0xc] sm:$0xf]
      %v412 = vld [vmem:[%s407 + $0x10] sm:$0xf]
      %v413 = vld [vmem:[%s407 + $0x14] sm:$0xf]
      %v414 = vld [vmem:[%s407 + $0x18] sm:$0xf]
      %v415 = vld [vmem:[%s407 + $0x1c] sm:$0xf]
      %v416 = vld [vmem:[%s407 + $0x20] sm:$0xf]
      %v417 = vld [vmem:[%s407 + $0x24] sm:$0xf]
      %v418 = vld [vmem:[%s407 + $0x28] sm:$0xf]
      %v419 = vld [vmem:[%s407 + $0x2c] sm:$0xf]
      %v420 = vld [vmem:[%s407 + $0x30] sm:$0xf]
      %v421 = vld [vmem:[%s407 + $0x34] sm:$0xf]
      %v422 = vld [vmem:[%s407 + $0x38] sm:$0xf]
      %v423 = vld [vmem:[%s407 + $0x3c] sm:$0xf]
      %v440 = vunpack.c.l.b16 %v375
      %v441 = vunpack.c.l.b16 %v376
      %v442 = vunpack.c.l.b16 %v377
      %v443 = vunpack.c.l.b16 %v378
      %v444 = vunpack.c.l.b16 %v379
      %v445 = vunpack.c.l.b16 %v380
      %v446 = vunpack.c.l.b16 %v381
      %v447 = vunpack.c.l.b16 %v382
      %v448 = vunpack.c.l.b16 %v383
      %v449 = vunpack.c.l.b16 %v384
      %v450 = vunpack.c.l.b16 %v385
      %v451 = vunpack.c.l.b16 %v386
      %v452 = vunpack.c.l.b16 %v387
      %v453 = vunpack.c.l.b16 %v388
      %v454 = vunpack.c.l.b16 %v389
      %v455 = vunpack.c.l.b16 %v406
      %v456 = vpack.c.b16 %v441, %v440
      %v457 = vpack.c.b16 %v443, %v442
      %v458 = vpack.c.b16 %v445, %v444
      %v459 = vpack.c.b16 %v447, %v446
      %v460 = vpack.c.b16 %v449, %v448
      %v461 = vpack.c.b16 %v451, %v450
      %v462 = vpack.c.b16 %v453, %v452
      %v463 = vpack.c.b16 %v455, %v454
      %vm464 = vsmask.f32 7424
      %v466 = vshrl.u32 %v456, 16
      %v468 = vshll.u32 %v456, 16
      %v470 = vrot.slane %v468, 1
      %v471 = vor.u32 %v466, %v470
      %v473 = vshll.u32 %v457, 16
      %v475 = vrot.slane %v473, 1
      %v476 = vsel %vm464, %v471, %v475
      %v477 = vshrl.u32 %v457, 16
      %v479 = vor.u32 %v477, %v475
      %v481 = vshll.u32 %v458, 16
      %v483 = vrot.slane %v481, 1
      %v484 = vsel %vm464, %v479, %v483
      %v485 = vshrl.u32 %v458, 16
      %v487 = vor.u32 %v485, %v483
      %v489 = vshll.u32 %v459, 16
      %v491 = vrot.slane %v489, 1
      %v492 = vsel %vm464, %v487, %v491
      %v493 = vshrl.u32 %v459, 16
      %v495 = vor.u32 %v493, %v491
      %v497 = vshll.u32 %v460, 16
      %v499 = vrot.slane %v497, 1
      %v500 = vsel %vm464, %v495, %v499
      %v501 = vshrl.u32 %v460, 16
      %v503 = vor.u32 %v501, %v499
      %v505 = vshll.u32 %v461, 16
      %v507 = vrot.slane %v505, 1
      %v508 = vsel %vm464, %v503, %v507
      %v509 = vshrl.u32 %v461, 16
      %v511 = vor.u32 %v509, %v507
      %v513 = vshll.u32 %v462, 16
      %v515 = vrot.slane %v513, 1
      %v516 = vsel %vm464, %v511, %v515
      %v517 = vshrl.u32 %v462, 16
      %v519 = vor.u32 %v517, %v515
      %v521 = vshll.u32 %v463, 16
      %v523 = vrot.slane %v521, 1
      %v524 = vsel %vm464, %v519, %v523
      %v525 = vshrl.u32 %v463, 16
      %v527 = vor.u32 %v525, %v523
      %v552 = vunpack.c.l.b16 %v408
      %v553 = vunpack.c.l.b16 %v409
      %v554 = vunpack.c.l.b16 %v410
      %v555 = vunpack.c.l.b16 %v411
      %v556 = vunpack.c.l.b16 %v412
      %v557 = vunpack.c.l.b16 %v413
      %v558 = vunpack.c.l.b16 %v414
      %v559 = vunpack.c.l.b16 %v415
      %v560 = vunpack.c.l.b16 %v416
      %v561 = vunpack.c.l.b16 %v417
      %v562 = vunpack.c.l.b16 %v418
      %v563 = vunpack.c.l.b16 %v419
      %v564 = vunpack.c.l.b16 %v420
      %v565 = vunpack.c.l.b16 %v421
      %v566 = vunpack.c.l.b16 %v422
      %v567 = vunpack.c.l.b16 %v423
      %v568 = vpack.c.b16 %v553, %v552
      %v569 = vpack.c.b16 %v555, %v554
      %v570 = vpack.c.b16 %v557, %v556
      %v571 = vpack.c.b16 %v559, %v558
      %v572 = vpack.c.b16 %v561, %v560
      %v573 = vpack.c.b16 %v563, %v562
      %v574 = vpack.c.b16 %v565, %v564
      %v575 = vpack.c.b16 %v567, %v566
      %584 = vmatprep.subr.bf16.mxu0 0
      %585 = vmatpush1.bf16.msra.mxu0 %v568
      %586 = vmatprep.subr.bf16.mxu0 0
      %587 = vmatpush1.bf16.msra.mxu0 %v569
      %588 = vmatprep.subr.bf16.mxu0 0
      %589 = vmatpush1.bf16.msra.mxu0 %v570
      %590 = vmatprep.subr.bf16.mxu0 0
      %591 = vmatpush1.bf16.msra.mxu0 %v571
      %592 = vmatprep.subr.bf16.mxu0 0
      %593 = vmatpush1.bf16.msra.mxu0 %v572
      %594 = vmatprep.subr.bf16.mxu0 0
      %595 = vmatpush1.bf16.msra.mxu0 %v573
      %596 = vmatprep.subr.bf16.mxu0 0
      %597 = vmatpush1.bf16.msra.mxu0 %v574
      %598 = vmatprep.subr.bf16.mxu0 0
      %599 = vmatpush1.bf16.msra.mxu0 %v575
      %600 = vmatprep.subr.bf16.mxu0 0
      %601 = vmatpush1.bf16.msra.mxu0 0
      %602 = vmatprep.subr.bf16.mxu0 0
      %603 = vmatpush1.bf16.msra.mxu0 0
      %604 = vmatprep.subr.bf16.mxu0 0
      %605 = vmatpush1.bf16.msra.mxu0 0
      %606 = vmatprep.subr.bf16.mxu0 0
      %607 = vmatpush1.bf16.msra.mxu0 0
      %608 = vmatprep.subr.bf16.mxu0 0
      %609 = vmatpush1.bf16.msra.mxu0 0
      %610 = vmatprep.subr.bf16.mxu0 0
      %611 = vmatpush1.bf16.msra.mxu0 0
      %612 = vmatprep.subr.bf16.mxu0 0
      %613 = vmatpush1.bf16.msra.mxu0 0
      %614 = vmatprep.subr.bf16.mxu0 0
      %615 = vmatpush1.bf16.msra.mxu0 0
      %616 = vmatprep.mubr.bf16.mxu0 0
      %617 = vmatmul.mubr.bf16.gmra.mrb[0].mxu0 %v476
      %v618 = vpop.f32.mrb[0].mxu0
      %v619 = vadd.f32 0.0, %v618
      %v620 = vpop.f32.mrb[0].mxu0
      %v621 = vpop.f32.mrb[0].mxu0
      %v622 = vadd.f32 0.0, %v621
      %v623 = vpop.f32.mrb[0].mxu0
      %624 = vmatprep.mubr.bf16.mxu0 0
      %625 = vmatmul.mubr.bf16.gmra.mrb[0].mxu0 %v484
      %v626 = vpop.f32.mrb[0].mxu0
      %v627 = vadd.f32 0.0, %v626
      %v628 = vpop.f32.mrb[0].mxu0
      %v629 = vpop.f32.mrb[0].mxu0
      %v630 = vadd.f32 0.0, %v629
      %v631 = vpop.f32.mrb[0].mxu0
      %632 = vmatprep.mubr.bf16.mxu0 0
      %633 = vmatmul.mubr.bf16.gmra.mrb[0].mxu0 %v492
      %v634 = vpop.f32.mrb[0].mxu0
      %v635 = vadd.f32 0.0, %v634
      %v636 = vpop.f32.mrb[0].mxu0
      %v637 = vpop.f32.mrb[0].mxu0
      %v638 = vadd.f32 0.0, %v637
      %v639 = vpop.f32.mrb[0].mxu0
      %640 = vmatprep.mubr.bf16.mxu0 0
      %641 = vmatmul.mubr.bf16.gmra.mrb[0].mxu0 %v500
      %v642 = vpop.f32.mrb[0].mxu0
      %v643 = vadd.f32 0.0, %v642
      %v644 = vpop.f32.mrb[0].mxu0
      %v645 = vpop.f32.mrb[0].mxu0
      %v646 = vadd.f32 0.0, %v645
      %v647 = vpop.f32.mrb[0].mxu0
      %648 = vmatprep.mubr.bf16.mxu0 0
      %649 = vmatmul.mubr.bf16.gmra.mrb[0].mxu0 %v508
      %v650 = vpop.f32.mrb[0].mxu0
      %v651 = vadd.f32 0.0, %v650
      %v652 = vpop.f32.mrb[0].mxu0
      %v653 = vpop.f32.mrb[0].mxu0
      %v654 = vadd.f32 0.0, %v653
      %v655 = vpop.f32.mrb[0].mxu0
      %656 = vmatprep.mubr.bf16.mxu0 0
      %657 = vmatmul.mubr.bf16.gmra.mrb[0].mxu0 %v516
      %v658 = vpop.f32.mrb[0].mxu0
      %v659 = vadd.f32 0.0, %v658
      %v660 = vpop.f32.mrb[0].mxu0
      %v661 = vpop.f32.mrb[0].mxu0
      %v662 = vadd.f32 0.0, %v661
      %v663 = vpop.f32.mrb[0].mxu0
      %664 = vmatprep.mubr.bf16.mxu0 0
      %665 = vmatmul.mubr.bf16.gmra.mrb[0].mxu0 %v524
      %v666 = vpop.f32.mrb[0].mxu0
      %v667 = vadd.f32 0.0, %v666
      %v668 = vpop.f32.mrb[0].mxu0
      %v669 = vpop.f32.mrb[0].mxu0
      %v670 = vadd.f32 0.0, %v669
      %v671 = vpop.f32.mrb[0].mxu0
      %672 = vmatprep.mubr.bf16.mxu0 0
      %673 = vmatmul.mubr.bf16.gmra.mrb[0].mxu0 %v527
      %v674 = vpop.f32.mrb[0].mxu0
      %v675 = vadd.f32 0.0, %v674
      %v676 = vpop.f32.mrb[0].mxu0
      %v677 = vpop.f32.mrb[0].mxu0
      %v678 = vpop.f32.mrb[0].mxu0
      %679 = vdwg.mxu0
      %v680 = vpack.c.b16 %v454, %v454
      %v705 = vunpack.c.l.b16 %v390
      %v706 = vunpack.c.l.b16 %v391
      %v707 = vunpack.c.l.b16 %v392
      %v708 = vunpack.c.l.b16 %v393
      %v709 = vunpack.c.l.b16 %v394
      %v710 = vunpack.c.l.b16 %v395
      %v711 = vunpack.c.l.b16 %v396
      %v712 = vunpack.c.l.b16 %v397
      %v713 = vunpack.c.l.b16 %v398
      %v714 = vunpack.c.l.b16 %v399
      %v715 = vunpack.c.l.b16 %v400
      %v716 = vunpack.c.l.b16 %v401
      %v717 = vunpack.c.l.b16 %v402
      %v718 = vunpack.c.l.b16 %v403
      %v719 = vunpack.c.l.b16 %v404
      %v720 = vunpack.c.l.b16 %v405
      %v721 = vpack.c.b16 %v706, %v705
      %v722 = vpack.c.b16 %v708, %v707
      %v723 = vpack.c.b16 %v710, %v709
      %v724 = vpack.c.b16 %v712, %v711
      %v725 = vpack.c.b16 %v714, %v713
      %v726 = vpack.c.b16 %v716, %v715
      %v727 = vpack.c.b16 %v718, %v717
      %v728 = vpack.c.b16 %v720, %v719
      %737 = vmatprep.subr.bf16.mxu0 0
      %738 = vmatpush1.bf16.msra.mxu0 %v721
      %739 = vmatprep.subr.bf16.mxu0 0
      %740 = vmatpush1.bf16.msra.mxu0 %v722
      %741 = vmatprep.subr.bf16.mxu0 0
      %742 = vmatpush1.bf16.msra.mxu0 %v723
      %743 = vmatprep.subr.bf16.mxu0 0
      %744 = vmatpush1.bf16.msra.mxu0 %v724
      %745 = vmatprep.subr.bf16.mxu0 0
      %746 = vmatpush1.bf16.msra.mxu0 %v725
      %747 = vmatprep.subr.bf16.mxu0 0
      %748 = vmatpush1.bf16.msra.mxu0 %v726
      %749 = vmatprep.subr.bf16.mxu0 0
      %750 = vmatpush1.bf16.msra.mxu0 %v727
      %751 = vmatprep.subr.bf16.mxu0 0
      %752 = vmatpush1.bf16.msra.mxu0 %v728
      %753 = vmatprep.subr.bf16.mxu0 0
      %754 = vmatpush1.bf16.msra.mxu0 0
      %755 = vmatprep.subr.bf16.mxu0 0
      %756 = vmatpush1.bf16.msra.mxu0 0
      %757 = vmatprep.subr.bf16.mxu0 0
      %758 = vmatpush1.bf16.msra.mxu0 0
      %759 = vmatprep.subr.bf16.mxu0 0
      %760 = vmatpush1.bf16.msra.mxu0 0
      %761 = vmatprep.subr.bf16.mxu0 0
      %762 = vmatpush1.bf16.msra.mxu0 0
      %763 = vmatprep.subr.bf16.mxu0 0
      %764 = vmatpush1.bf16.msra.mxu0 0
      %765 = vmatprep.subr.bf16.mxu0 0
      %766 = vmatpush1.bf16.msra.mxu0 0
      %767 = vmatprep.subr.bf16.mxu0 0
      %768 = vmatpush1.bf16.msra.mxu0 0
      %769 = vmatprep.mubr.bf16.mxu0 0
      %770 = vmatmul.mubr.bf16.gmra.mrb[0].mxu0 %v456
      %v771 = vpop.f32.mrb[0].mxu0
      %v772 = vadd.f32 %v619, %v771
      %v773 = vpop.f32.mrb[0].mxu0
      %v774 = vpop.f32.mrb[0].mxu0
      %v775 = vadd.f32 %v622, %v774
      %v776 = vpop.f32.mrb[0].mxu0
      %777 = vmatprep.mubr.bf16.mxu0 0
      %778 = vmatmul.mubr.bf16.gmra.mrb[0].mxu0 %v457
      %v779 = vpop.f32.mrb[0].mxu0
      %v780 = vadd.f32 %v627, %v779
      %v781 = vpop.f32.mrb[0].mxu0
      %v782 = vpop.f32.mrb[0].mxu0
      %v783 = vadd.f32 %v630, %v782
      %v784 = vpop.f32.mrb[0].mxu0
      %785 = vmatprep.mubr.bf16.mxu0 0
      %786 = vmatmul.mubr.bf16.gmra.mrb[0].mxu0 %v458
      %v787 = vpop.f32.mrb[0].mxu0
      %v788 = vadd.f32 %v635, %v787
      %v789 = vpop.f32.mrb[0].mxu0
      %v790 = vpop.f32.mrb[0].mxu0
      %v791 = vadd.f32 %v638, %v790
      %v792 = vpop.f32.mrb[0].mxu0
      %793 = vmatprep.mubr.bf16.mxu0 0
      %794 = vmatmul.mubr.bf16.gmra.mrb[0].mxu0 %v459
      %v795 = vpop.f32.mrb[0].mxu0
      %v796 = vadd.f32 %v643, %v795
      %v797 = vpop.f32.mrb[0].mxu0
      %v798 = vpop.f32.mrb[0].mxu0
      %v799 = vadd.f32 %v646, %v798
      %v800 = vpop.f32.mrb[0].mxu0
      %801 = vmatprep.mubr.bf16.mxu0 0
      %802 = vmatmul.mubr.bf16.gmra.mrb[0].mxu0 %v460
      %v803 = vpop.f32.mrb[0].mxu0
      %v804 = vadd.f32 %v651, %v803
      %v805 = vpop.f32.mrb[0].mxu0
      %v806 = vpop.f32.mrb[0].mxu0
      %v807 = vadd.f32 %v654, %v806
      %v808 = vpop.f32.mrb[0].mxu0
      %809 = vmatprep.mubr.bf16.mxu0 0
      %810 = vmatmul.mubr.bf16.gmra.mrb[0].mxu0 %v461
      %v811 = vpop.f32.mrb[0].mxu0
      %v812 = vadd.f32 %v659, %v811
      %v813 = vpop.f32.mrb[0].mxu0
      %v814 = vpop.f32.mrb[0].mxu0
      %v815 = vadd.f32 %v662, %v814
      %v816 = vpop.f32.mrb[0].mxu0
      %817 = vmatprep.mubr.bf16.mxu0 0
      %818 = vmatmul.mubr.bf16.gmra.mrb[0].mxu0 %v462
      %v819 = vpop.f32.mrb[0].mxu0
      %v820 = vadd.f32 %v667, %v819
      %v821 = vpop.f32.mrb[0].mxu0
      %v822 = vpop.f32.mrb[0].mxu0
      %v823 = vadd.f32 %v670, %v822
      %v824 = vpop.f32.mrb[0].mxu0
      %825 = vmatprep.mubr.bf16.mxu0 0
      %826 = vmatmul.mubr.bf16.gmra.mrb[0].mxu0 %v680
      %v827 = vpop.f32.mrb[0].mxu0
      %v828 = vadd.f32 %v675, %v827
      %v829 = vpop.f32.mrb[0].mxu0
      %v830 = vpop.f32.mrb[0].mxu0
      %v831 = vpop.f32.mrb[0].mxu0
      %832 = vdwg.mxu0
      %v833 = vld [vmem:[%s335 + $0x8] sm:$0xf]
      %v834 = vld [vmem:[%s335 + $0xc] sm:$0xf]
      %v835 = vld [vmem:[%s335 + $0x10] sm:$0xf]
      %v836 = vld [vmem:[%s335 + $0x14] sm:$0xf]
      %v837 = vld [vmem:[%s335 + $0x18] sm:$0xf]
      %v838 = vld [vmem:[%s335 + $0x1c] sm:$0xf]
      %v839 = vld [vmem:[%s335 + $0x20] sm:$0xf]
      %v840 = vld [vmem:[%s335 + $0x24] sm:$0xf]
      %v841 = vld [vmem:[%s335 + $0x28] sm:$0xf]
      %v842 = vld [vmem:[%s335 + $0x2c] sm:$0xf]
      %v843 = vld [vmem:[%s335 + $0x30] sm:$0xf]
      %v844 = vld [vmem:[%s335 + $0x34] sm:$0xf]
      %v845 = vld [vmem:[%s335 + $0x38] sm:$0xf]
      %v846 = vld [vmem:[%s335 + $0x3c] sm:$0xf]
      %v847 = vld [vmem:[%s335 + $0x40] sm:$0xf]
      %s848 = scalar_lea.vmem %s2, 128
      %v849 = vld [vmem:[%s848] sm:$0xf]
      %v850 = vld [vmem:[%s848 + $0x4] sm:$0xf]
      %v851 = vld [vmem:[%s848 + $0x8] sm:$0xf]
      %v852 = vld [vmem:[%s848 + $0xc] sm:$0xf]
      %v853 = vld [vmem:[%s848 + $0x10] sm:$0xf]
      %v854 = vld [vmem:[%s848 + $0x14] sm:$0xf]
      %v855 = vld [vmem:[%s848 + $0x18] sm:$0xf]
      %v856 = vld [vmem:[%s848 + $0x1c] sm:$0xf]
      %v857 = vld [vmem:[%s848 + $0x20] sm:$0xf]
      %v858 = vld [vmem:[%s848 + $0x24] sm:$0xf]
      %v859 = vld [vmem:[%s848 + $0x28] sm:$0xf]
      %v860 = vld [vmem:[%s848 + $0x2c] sm:$0xf]
      %v861 = vld [vmem:[%s848 + $0x30] sm:$0xf]
      %v862 = vld [vmem:[%s848 + $0x34] sm:$0xf]
      %v863 = vld [vmem:[%s848 + $0x38] sm:$0xf]
      %v864 = vld [vmem:[%s848 + $0x3c] sm:$0xf]
      %v880 = vunpack.c.l.b16 %v833
      %v881 = vunpack.c.l.b16 %v834
      %v882 = vunpack.c.l.b16 %v835
      %v883 = vunpack.c.l.b16 %v836
      %v884 = vunpack.c.l.b16 %v837
      %v885 = vunpack.c.l.b16 %v838
      %v886 = vunpack.c.l.b16 %v839
      %v887 = vunpack.c.l.b16 %v840
      %v888 = vunpack.c.l.b16 %v841
      %v889 = vunpack.c.l.b16 %v842
      %v890 = vunpack.c.l.b16 %v843
      %v891 = vunpack.c.l.b16 %v844
      %v892 = vunpack.c.l.b16 %v845
      %v893 = vunpack.c.l.b16 %v846
      %v894 = vunpack.c.l.b16 %v847
      %v895 = vpack.c.b16 %v881, %v880
      %v896 = vpack.c.b16 %v883, %v882
      %v897 = vpack.c.b16 %v885, %v884
      %v898 = vpack.c.b16 %v887, %v886
      %v899 = vpack.c.b16 %v889, %v888
      %v900 = vpack.c.b16 %v891, %v890
      %v901 = vpack.c.b16 %v893, %v892
      %v902 = vpack.c.b16 %v894, %v894
      %v927 = vunpack.c.l.b16 %v849
      %v928 = vunpack.c.l.b16 %v850
      %v929 = vunpack.c.l.b16 %v851
      %v930 = vunpack.c.l.b16 %v852
      %v931 = vunpack.c.l.b16 %v853
      %v932 = vunpack.c.l.b16 %v854
      %v933 = vunpack.c.l.b16 %v855
      %v934 = vunpack.c.l.b16 %v856
      %v935 = vunpack.c.l.b16 %v857
      %v936 = vunpack.c.l.b16 %v858
      %v937 = vunpack.c.l.b16 %v859
      %v938 = vunpack.c.l.b16 %v860
      %v939 = vunpack.c.l.b16 %v861
      %v940 = vunpack.c.l.b16 %v862
      %v941 = vunpack.c.l.b16 %v863
      %v942 = vunpack.c.l.b16 %v864
      %v943 = vpack.c.b16 %v928, %v927
      %v944 = vpack.c.b16 %v930, %v929
      %v945 = vpack.c.b16 %v932, %v931
      %v946 = vpack.c.b16 %v934, %v933
      %v947 = vpack.c.b16 %v936, %v935
      %v948 = vpack.c.b16 %v938, %v937
      %v949 = vpack.c.b16 %v940, %v939
      %v950 = vpack.c.b16 %v942, %v941
      %959 = vmatprep.subr.bf16.mxu0 0
      %960 = vmatpush1.bf16.msra.mxu0 %v943
      %961 = vmatprep.subr.bf16.mxu0 0
      %962 = vmatpush1.bf16.msra.mxu0 %v944
      %963 = vmatprep.subr.bf16.mxu0 0
      %964 = vmatpush1.bf16.msra.mxu0 %v945
      %965 = vmatprep.subr.bf16.mxu0 0
      %966 = vmatpush1.bf16.msra.mxu0 %v946
      %967 = vmatprep.subr.bf16.mxu0 0
      %968 = vmatpush1.bf16.msra.mxu0 %v947
      %969 = vmatprep.subr.bf16.mxu0 0
      %970 = vmatpush1.bf16.msra.mxu0 %v948
      %971 = vmatprep.subr.bf16.mxu0 0
      %972 = vmatpush1.bf16.msra.mxu0 %v949
      %973 = vmatprep.subr.bf16.mxu0 0
      %974 = vmatpush1.bf16.msra.mxu0 %v950
      %975 = vmatprep.subr.bf16.mxu0 0
      %976 = vmatpush1.bf16.msra.mxu0 0
      %977 = vmatprep.subr.bf16.mxu0 0
      %978 = vmatpush1.bf16.msra.mxu0 0
      %979 = vmatprep.subr.bf16.mxu0 0
      %980 = vmatpush1.bf16.msra.mxu0 0
      %981 = vmatprep.subr.bf16.mxu0 0
      %982 = vmatpush1.bf16.msra.mxu0 0
      %983 = vmatprep.subr.bf16.mxu0 0
      %984 = vmatpush1.bf16.msra.mxu0 0
      %985 = vmatprep.subr.bf16.mxu0 0
      %986 = vmatpush1.bf16.msra.mxu0 0
      %987 = vmatprep.subr.bf16.mxu0 0
      %988 = vmatpush1.bf16.msra.mxu0 0
      %989 = vmatprep.subr.bf16.mxu0 0
      %990 = vmatpush1.bf16.msra.mxu0 0
      %991 = vmatprep.mubr.bf16.mxu0 0
      %992 = vmatmul.mubr.bf16.gmra.mrb[0].mxu0 %v895
      %v993 = vpop.f32.mrb[0].mxu0
      %v994 = vadd.f32 0.0, %v993
      %v995 = vpop.f32.mrb[0].mxu0
      %v996 = vpop.f32.mrb[0].mxu0
      %v997 = vadd.f32 0.0, %v996
      %v998 = vpop.f32.mrb[0].mxu0
      %999 = vmatprep.mubr.bf16.mxu0 0
      %1000 = vmatmul.mubr.bf16.gmra.mrb[0].mxu0 %v896
      %v1001 = vpop.f32.mrb[0].mxu0
      %v1002 = vadd.f32 0.0, %v1001
      %v1003 = vpop.f32.mrb[0].mxu0
      %v1004 = vpop.f32.mrb[0].mxu0
      %v1005 = vadd.f32 0.0, %v1004
      %v1006 = vpop.f32.mrb[0].mxu0
      %1007 = vmatprep.mubr.bf16.mxu0 0
      %1008 = vmatmul.mubr.bf16.gmra.mrb[0].mxu0 %v897
      %v1009 = vpop.f32.mrb[0].mxu0
      %v1010 = vadd.f32 0.0, %v1009
      %v1011 = vpop.f32.mrb[0].mxu0
      %v1012 = vpop.f32.mrb[0].mxu0
      %v1013 = vadd.f32 0.0, %v1012
      %v1014 = vpop.f32.mrb[0].mxu0
      %1015 = vmatprep.mubr.bf16.mxu0 0
      %1016 = vmatmul.mubr.bf16.gmra.mrb[0].mxu0 %v898
      %v1017 = vpop.f32.mrb[0].mxu0
      %v1018 = vadd.f32 0.0, %v1017
      %v1019 = vpop.f32.mrb[0].mxu0
      %v1020 = vpop.f32.mrb[0].mxu0
      %v1021 = vadd.f32 0.0, %v1020
      %v1022 = vpop.f32.mrb[0].mxu0
      %1023 = vmatprep.mubr.bf16.mxu0 0
      %1024 = vmatmul.mubr.bf16.gmra.mrb[0].mxu0 %v899
      %v1025 = vpop.f32.mrb[0].mxu0
      %v1026 = vadd.f32 0.0, %v1025
      %v1027 = vpop.f32.mrb[0].mxu0
      %v1028 = vpop.f32.mrb[0].mxu0
      %v1029 = vadd.f32 0.0, %v1028
      %v1030 = vpop.f32.mrb[0].mxu0
      %1031 = vmatprep.mubr.bf16.mxu0 0
      %1032 = vmatmul.mubr.bf16.gmra.mrb[0].mxu0 %v900
      %v1033 = vpop.f32.mrb[0].mxu0
      %v1034 = vadd.f32 0.0, %v1033
      %v1035 = vpop.f32.mrb[0].mxu0
      %v1036 = vpop.f32.mrb[0].mxu0
      %v1037 = vadd.f32 0.0, %v1036
      %v1038 = vpop.f32.mrb[0].mxu0
      %1039 = vmatprep.mubr.bf16.mxu0 0
      %1040 = vmatmul.mubr.bf16.gmra.mrb[0].mxu0 %v901
      %v1041 = vpop.f32.mrb[0].mxu0
      %v1042 = vadd.f32 0.0, %v1041
      %v1043 = vpop.f32.mrb[0].mxu0
      %v1044 = vpop.f32.mrb[0].mxu0
      %v1045 = vadd.f32 0.0, %v1044
      %v1046 = vpop.f32.mrb[0].mxu0
      %1047 = vmatprep.mubr.bf16.mxu0 0
      %1048 = vmatmul.mubr.bf16.gmra.mrb[0].mxu0 %v902
      %v1049 = vpop.f32.mrb[0].mxu0
      %v1050 = vadd.f32 0.0, %v1049
      %v1051 = vpop.f32.mrb[0].mxu0
      %v1052 = vpop.f32.mrb[0].mxu0
      %v1053 = vpop.f32.mrb[0].mxu0
      %1054 = vdwg.mxu0
      %v1055 = vadd.f32 %v772, %v994
      %v1056 = vadd.f32 %v775, %v997
      %v1057 = vadd.f32 %v780, %v1002
      %v1058 = vadd.f32 %v783, %v1005
      %v1059 = vadd.f32 %v788, %v1010
      %v1060 = vadd.f32 %v791, %v1013
      %v1061 = vadd.f32 %v796, %v1018
      %v1062 = vadd.f32 %v799, %v1021
      %v1063 = vadd.f32 %v804, %v1026
      %v1064 = vadd.f32 %v807, %v1029
      %v1065 = vadd.f32 %v812, %v1034
      %v1066 = vadd.f32 %v815, %v1037
      %v1067 = vadd.f32 %v820, %v1042
      %v1068 = vadd.f32 %v823, %v1045
      %v1069 = vadd.f32 %v828, %v1050
      %v1070 = vld [vmem:[%s335 + $0x8] sm:$0xf]
      %v1071 = vld [vmem:[%s335 + $0xc] sm:$0xf]
      %v1072 = vld [vmem:[%s335 + $0x10] sm:$0xf]
      %v1073 = vld [vmem:[%s335 + $0x14] sm:$0xf]
      %v1074 = vld [vmem:[%s335 + $0x18] sm:$0xf]
      %v1075 = vld [vmem:[%s335 + $0x1c] sm:$0xf]
      %v1076 = vld [vmem:[%s335 + $0x20] sm:$0xf]
      %v1077 = vld [vmem:[%s335 + $0x24] sm:$0xf]
      %v1078 = vld [vmem:[%s335 + $0x28] sm:$0xf]
      %v1079 = vld [vmem:[%s335 + $0x2c] sm:$0xf]
      %v1080 = vld [vmem:[%s335 + $0x30] sm:$0xf]
      %v1081 = vld [vmem:[%s335 + $0x34] sm:$0xf]
      %v1082 = vld [vmem:[%s335 + $0x38] sm:$0xf]
      %v1083 = vld [vmem:[%s335 + $0x3c] sm:$0xf]
      %v1084 = vld [vmem:[%s335 + $0x40] sm:$0xf]
      %v1085 = vld [vmem:[%s335 + $0x44] sm:$0x1]
      %s1086 = scalar_lea.vmem %s2, 192
      %v1087 = vld [vmem:[%s1086] sm:$0xf]
      %v1088 = vld [vmem:[%s1086 + $0x4] sm:$0xf]
      %v1089 = vld [vmem:[%s1086 + $0x8] sm:$0xf]
      %v1090 = vld [vmem:[%s1086 + $0xc] sm:$0xf]
      %v1091 = vld [vmem:[%s1086 + $0x10] sm:$0xf]
      %v1092 = vld [vmem:[%s1086 + $0x14] sm:$0xf]
      %v1093 = vld [vmem:[%s1086 + $0x18] sm:$0xf]
      %v1094 = vld [vmem:[%s1086 + $0x1c] sm:$0xf]
      %v1095 = vld [vmem:[%s1086 + $0x20] sm:$0xf]
      %v1096 = vld [vmem:[%s1086 + $0x24] sm:$0xf]
      %v1097 = vld [vmem:[%s1086 + $0x28] sm:$0xf]
      %v1098 = vld [vmem:[%s1086 + $0x2c] sm:$0xf]
      %v1099 = vld [vmem:[%s1086 + $0x30] sm:$0xf]
      %v1100 = vld [vmem:[%s1086 + $0x34] sm:$0xf]
      %v1101 = vld [vmem:[%s1086 + $0x38] sm:$0xf]
      %v1102 = vld [vmem:[%s1086 + $0x3c] sm:$0xf]
      %v1119 = vunpack.c.l.b16 %v1070
      %v1120 = vunpack.c.l.b16 %v1071
      %v1121 = vunpack.c.l.b16 %v1072
      %v1122 = vunpack.c.l.b16 %v1073
      %v1123 = vunpack.c.l.b16 %v1074
      %v1124 = vunpack.c.l.b16 %v1075
      %v1125 = vunpack.c.l.b16 %v1076
      %v1126 = vunpack.c.l.b16 %v1077
      %v1127 = vunpack.c.l.b16 %v1078
      %v1128 = vunpack.c.l.b16 %v1079
      %v1129 = vunpack.c.l.b16 %v1080
      %v1130 = vunpack.c.l.b16 %v1081
      %v1131 = vunpack.c.l.b16 %v1082
      %v1132 = vunpack.c.l.b16 %v1083
      %v1133 = vunpack.c.l.b16 %v1084
      %v1134 = vunpack.c.l.b16 %v1085
      %v1135 = vpack.c.b16 %v1120, %v1119
      %v1136 = vpack.c.b16 %v1122, %v1121
      %v1137 = vpack.c.b16 %v1124, %v1123
      %v1138 = vpack.c.b16 %v1126, %v1125
      %v1139 = vpack.c.b16 %v1128, %v1127
      %v1140 = vpack.c.b16 %v1130, %v1129
      %v1141 = vpack.c.b16 %v1132, %v1131
      %v1142 = vpack.c.b16 %v1134, %v1133
      %v1144 = vshrl.u32 %v1135, 16
      %v1146 = vshll.u32 %v1135, 16
      %v1148 = vrot.slane %v1146, 1
      %v1149 = vor.u32 %v1144, %v1148
      %v1151 = vshll.u32 %v1136, 16
      %v1153 = vrot.slane %v1151, 1
      %v1154 = vsel %vm464, %v1149, %v1153
      %v1155 = vshrl.u32 %v1136, 16
      %v1157 = vor.u32 %v1155, %v1153
      %v1159 = vshll.u32 %v1137, 16
      %v1161 = vrot.slane %v1159, 1
      %v1162 = vsel %vm464, %v1157, %v1161
      %v1163 = vshrl.u32 %v1137, 16
      %v1165 = vor.u32 %v1163, %v1161
      %v1167 = vshll.u32 %v1138, 16
      %v1169 = vrot.slane %v1167, 1
      %v1170 = vsel %vm464, %v1165, %v1169
      %v1171 = vshrl.u32 %v1138, 16
      %v1173 = vor.u32 %v1171, %v1169
      %v1175 = vshll.u32 %v1139, 16
      %v1177 = vrot.slane %v1175, 1
      %v1178 = vsel %vm464, %v1173, %v1177
      %v1179 = vshrl.u32 %v1139, 16
      %v1181 = vor.u32 %v1179, %v1177
      %v1183 = vshll.u32 %v1140, 16
      %v1185 = vrot.slane %v1183, 1
      %v1186 = vsel %vm464, %v1181, %v1185
      %v1187 = vshrl.u32 %v1140, 16
      %v1189 = vor.u32 %v1187, %v1185
      %v1191 = vshll.u32 %v1141, 16
      %v1193 = vrot.slane %v1191, 1
      %v1194 = vsel %vm464, %v1189, %v1193
      %v1195 = vshrl.u32 %v1141, 16
      %v1197 = vor.u32 %v1195, %v1193
      %v1199 = vshll.u32 %v1142, 16
      %v1201 = vrot.slane %v1199, 1
      %v1202 = vsel %vm464, %v1197, %v1201
      %v1203 = vshrl.u32 %v1142, 16
      %v1205 = vor.u32 %v1203, %v1201
      %v1230 = vunpack.c.l.b16 %v1087
      %v1231 = vunpack.c.l.b16 %v1088
      %v1232 = vunpack.c.l.b16 %v1089
      %v1233 = vunpack.c.l.b16 %v1090
      %v1234 = vunpack.c.l.b16 %v1091
      %v1235 = vunpack.c.l.b16 %v1092
      %v1236 = vunpack.c.l.b16 %v1093
      %v1237 = vunpack.c.l.b16 %v1094
      %v1238 = vunpack.c.l.b16 %v1095
      %v1239 = vunpack.c.l.b16 %v1096
      %v1240 = vunpack.c.l.b16 %v1097
      %v1241 = vunpack.c.l.b16 %v1098
      %v1242 = vunpack.c.l.b16 %v1099
      %v1243 = vunpack.c.l.b16 %v1100
      %v1244 = vunpack.c.l.b16 %v1101
      %v1245 = vunpack.c.l.b16 %v1102
      %v1246 = vpack.c.b16 %v1231, %v1230
      %v1247 = vpack.c.b16 %v1233, %v1232
      %v1248 = vpack.c.b16 %v1235, %v1234
      %v1249 = vpack.c.b16 %v1237, %v1236
      %v1250 = vpack.c.b16 %v1239, %v1238
      %v1251 = vpack.c.b16 %v1241, %v1240
      %v1252 = vpack.c.b16 %v1243, %v1242
      %v1253 = vpack.c.b16 %v1245, %v1244
      %1262 = vmatprep.subr.bf16.mxu0 0
      %1263 = vmatpush1.bf16.msra.mxu0 %v1246
      %1264 = vmatprep.subr.bf16.mxu0 0
      %1265 = vmatpush1.bf16.msra.mxu0 %v1247
      %1266 = vmatprep.subr.bf16.mxu0 0
      %1267 = vmatpush1.bf16.msra.mxu0 %v1248
      %1268 = vmatprep.subr.bf16.mxu0 0
      %1269 = vmatpush1.bf16.msra.mxu0 %v1249
      %1270 = vmatprep.subr.bf16.mxu0 0
      %1271 = vmatpush1.bf16.msra.mxu0 %v1250
      %1272 = vmatprep.subr.bf16.mxu0 0
      %1273 = vmatpush1.bf16.msra.mxu0 %v1251
      %1274 = vmatprep.subr.bf16.mxu0 0
      %1275 = vmatpush1.bf16.msra.mxu0 %v1252
      %1276 = vmatprep.subr.bf16.mxu0 0
      %1277 = vmatpush1.bf16.msra.mxu0 %v1253
      %1278 = vmatprep.subr.bf16.mxu0 0
      %1279 = vmatpush1.bf16.msra.mxu0 0
      %1280 = vmatprep.subr.bf16.mxu0 0
      %1281 = vmatpush1.bf16.msra.mxu0 0
      %1282 = vmatprep.subr.bf16.mxu0 0
      %1283 = vmatpush1.bf16.msra.mxu0 0
      %1284 = vmatprep.subr.bf16.mxu0 0
      %1285 = vmatpush1.bf16.msra.mxu0 0
      %1286 = vmatprep.subr.bf16.mxu0 0
      %1287 = vmatpush1.bf16.msra.mxu0 0
      %1288 = vmatprep.subr.bf16.mxu0 0
      %1289 = vmatpush1.bf16.msra.mxu0 0
      %1290 = vmatprep.subr.bf16.mxu0 0
      %1291 = vmatpush1.bf16.msra.mxu0 0
      %1292 = vmatprep.subr.bf16.mxu0 0
      %1293 = vmatpush1.bf16.msra.mxu0 0
      %1294 = vmatprep.mubr.bf16.mxu0 0
      %1295 = vmatmul.mubr.bf16.gmra.mrb[0].mxu0 %v1154
      %v1296 = vpop.f32.mrb[0].mxu0
      %v1297 = vadd.f32 0.0, %v1296
      %v1298 = vpop.f32.mrb[0].mxu0
      %v1299 = vpop.f32.mrb[0].mxu0
      %v1300 = vadd.f32 0.0, %v1299
      %v1301 = vpop.f32.mrb[0].mxu0
      %1302 = vmatprep.mubr.bf16.mxu0 0
      %1303 = vmatmul.mubr.bf16.gmra.mrb[0].mxu0 %v1162
      %v1304 = vpop.f32.mrb[0].mxu0
      %v1305 = vadd.f32 0.0, %v1304
      %v1306 = vpop.f32.mrb[0].mxu0
      %v1307 = vpop.f32.mrb[0].mxu0
      %v1308 = vadd.f32 0.0, %v1307
      %v1309 = vpop.f32.mrb[0].mxu0
      %1310 = vmatprep.mubr.bf16.mxu0 0
      %1311 = vmatmul.mubr.bf16.gmra.mrb[0].mxu0 %v1170
      %v1312 = vpop.f32.mrb[0].mxu0
      %v1313 = vadd.f32 0.0, %v1312
      %v1314 = vpop.f32.mrb[0].mxu0
      %v1315 = vpop.f32.mrb[0].mxu0
      %v1316 = vadd.f32 0.0, %v1315
      %v1317 = vpop.f32.mrb[0].mxu0
      %1318 = vmatprep.mubr.bf16.mxu0 0
      %1319 = vmatmul.mubr.bf16.gmra.mrb[0].mxu0 %v1178
      %v1320 = vpop.f32.mrb[0].mxu0
      %v1321 = vadd.f32 0.0, %v1320
      %v1322 = vpop.f32.mrb[0].mxu0
      %v1323 = vpop.f32.mrb[0].mxu0
      %v1324 = vadd.f32 0.0, %v1323
      %v1325 = vpop.f32.mrb[0].mxu0
      %1326 = vmatprep.mubr.bf16.mxu0 0
      %1327 = vmatmul.mubr.bf16.gmra.mrb[0].mxu0 %v1186
      %v1328 = vpop.f32.mrb[0].mxu0
      %v1329 = vadd.f32 0.0, %v1328
      %v1330 = vpop.f32.mrb[0].mxu0
      %v1331 = vpop.f32.mrb[0].mxu0
      %v1332 = vadd.f32 0.0, %v1331
      %v1333 = vpop.f32.mrb[0].mxu0
      %1334 = vmatprep.mubr.bf16.mxu0 0
      %1335 = vmatmul.mubr.bf16.gmra.mrb[0].mxu0 %v1194
      %v1336 = vpop.f32.mrb[0].mxu0
      %v1337 = vadd.f32 0.0, %v1336
      %v1338 = vpop.f32.mrb[0].mxu0
      %v1339 = vpop.f32.mrb[0].mxu0
      %v1340 = vadd.f32 0.0, %v1339
      %v1341 = vpop.f32.mrb[0].mxu0
      %1342 = vmatprep.mubr.bf16.mxu0 0
      %1343 = vmatmul.mubr.bf16.gmra.mrb[0].mxu0 %v1202
      %v1344 = vpop.f32.mrb[0].mxu0
      %v1345 = vadd.f32 0.0, %v1344
      %v1346 = vpop.f32.mrb[0].mxu0
      %v1347 = vpop.f32.mrb[0].mxu0
      %v1348 = vadd.f32 0.0, %v1347
      %v1349 = vpop.f32.mrb[0].mxu0
      %1350 = vmatprep.mubr.bf16.mxu0 0
      %1351 = vmatmul.mubr.bf16.gmra.mrb[0].mxu0 %v1205
      %v1352 = vpop.f32.mrb[0].mxu0
      %v1353 = vadd.f32 0.0, %v1352
      %v1354 = vpop.f32.mrb[0].mxu0
      %v1355 = vpop.f32.mrb[0].mxu0
      %v1356 = vpop.f32.mrb[0].mxu0
      %1357 = vdwg.mxu0
      %v1358 = vadd.f32 %v1055, %v1297
      %v1359 = vadd.f32 %v1056, %v1300
      %v1360 = vadd.f32 %v1057, %v1305
      %v1361 = vadd.f32 %v1058, %v1308
      %v1362 = vadd.f32 %v1059, %v1313
      %v1363 = vadd.f32 %v1060, %v1316
      %v1364 = vadd.f32 %v1061, %v1321
      %v1365 = vadd.f32 %v1062, %v1324
      %v1366 = vadd.f32 %v1063, %v1329
      %v1367 = vadd.f32 %v1064, %v1332
      %v1368 = vadd.f32 %v1065, %v1337
      %v1369 = vadd.f32 %v1066, %v1340
      %v1370 = vadd.f32 %v1067, %v1345
      %v1371 = vadd.f32 %v1068, %v1348
      %v1372 = vadd.f32 %v1069, %v1353
      %1374 = vset.pattern.permute.xlu0 0
      %1375 = vperm.xlu0 %1374, %v360
      %v1376 = vpop.permute.xlu0 %1375
      %1379 = vset.pattern.permute.xlu0 0
      %1380 = vperm.xlu0 %1379, %v361
      %v1381 = vpop.permute.xlu0 %1380
      %1384 = vset.pattern.permute.xlu0 0
      %1385 = vperm.xlu0 %1384, %v362
      %v1386 = vpop.permute.xlu0 %1385
      %1389 = vset.pattern.permute.xlu0 0
      %1390 = vperm.xlu0 %1389, %v363
      %v1391 = vpop.permute.xlu0 %1390
      %1394 = vset.pattern.permute.xlu0 0
      %1395 = vperm.xlu0 %1394, %v364
      %v1396 = vpop.permute.xlu0 %1395
      %1399 = vset.pattern.permute.xlu0 0
      %1400 = vperm.xlu0 %1399, %v365
      %v1401 = vpop.permute.xlu0 %1400
      %1404 = vset.pattern.permute.xlu0 0
      %1405 = vperm.xlu0 %1404, %v366
      %v1406 = vpop.permute.xlu0 %1405
      %1409 = vset.pattern.permute.xlu0 0
      %1410 = vperm.xlu0 %1409, %v367
      %v1411 = vpop.permute.xlu0 %1410
      %1414 = vset.pattern.permute.xlu0 0
      %1415 = vperm.xlu0 %1414, %v368
      %v1416 = vpop.permute.xlu0 %1415
      %1419 = vset.pattern.permute.xlu0 0
      %1420 = vperm.xlu0 %1419, %v369
      %v1421 = vpop.permute.xlu0 %1420
      %1424 = vset.pattern.permute.xlu0 0
      %1425 = vperm.xlu0 %1424, %v370
      %v1426 = vpop.permute.xlu0 %1425
      %1429 = vset.pattern.permute.xlu0 0
      %1430 = vperm.xlu0 %1429, %v371
      %v1431 = vpop.permute.xlu0 %1430
      %1434 = vset.pattern.permute.xlu0 0
      %1435 = vperm.xlu0 %1434, %v372
      %v1436 = vpop.permute.xlu0 %1435
      %1439 = vset.pattern.permute.xlu0 0
      %1440 = vperm.xlu0 %1439, %v373
      %v1441 = vpop.permute.xlu0 %1440
      %1444 = vset.pattern.permute.xlu0 0
      %1445 = vperm.xlu0 %1444, %v374
      %v1446 = vpop.permute.xlu0 %1445
      %v1448 = vmul.f32 %v1358, %v1376
      %v1449 = vmul.f32 %v1359, %v1381
      %v1450 = vmul.f32 %v1360, %v1386
      %v1451 = vmul.f32 %v1361, %v1391
      %v1452 = vmul.f32 %v1362, %v1396
      %v1453 = vmul.f32 %v1363, %v1401
      %v1454 = vmul.f32 %v1364, %v1406
      %v1455 = vmul.f32 %v1365, %v1411
      %v1456 = vmul.f32 %v1366, %v1416
      %v1457 = vmul.f32 %v1367, %v1421
      %v1458 = vmul.f32 %v1368, %v1426
      %v1459 = vmul.f32 %v1369, %v1431
      %v1460 = vmul.f32 %v1370, %v1436
      %v1461 = vmul.f32 %v1371, %v1441
      %v1462 = vmul.f32 %v1372, %v1446
      %1463 = vst [vmem:[%s345] sm:$0xf] 0
      %1464 = vst [vmem:[%s345 + $0x4] sm:$0xf] 0
      %1465 = vst [vmem:[%s345 + $0x8] sm:$0xf] 0
      %1466 = vst [vmem:[%s345 + $0xc] sm:$0xf] 0
      %1467 = vst [vmem:[%s345 + $0x10] sm:$0xf] 0
      %1468 = vst [vmem:[%s345 + $0x14] sm:$0xf] 0
      %1469 = vst [vmem:[%s345 + $0x18] sm:$0xf] 0
      %1470 = vst [vmem:[%s345 + $0x1c] sm:$0xf] 0
      %1471 = vst [vmem:[%s345 + $0x20] sm:$0xf] 0
      %1472 = vst [vmem:[%s345 + $0x24] sm:$0xf] 0
      %1473 = vst [vmem:[%s345 + $0x28] sm:$0xf] 0
      %1474 = vst [vmem:[%s345 + $0x2c] sm:$0xf] 0
      %1475 = vst [vmem:[%s345 + $0x30] sm:$0xf] 0
      %1476 = vst [vmem:[%s345 + $0x34] sm:$0xf] 0
      %1477 = vst [vmem:[%s345 + $0x38] sm:$0xf] 0
      %1478 = vst [vmem:[%s345 + $0x3c] sm:$0xf] 0
      %1479 = vst [vmem:[%s345 + $0x40] sm:$0xf] 0
      %1480 = vst [vmem:[%s345 + $0x44] sm:$0xf] 0
      %1481 = vst [vmem:[%s345 + $0x48] sm:$0xf] 0
      %1482 = vst [vmem:[%s345 + $0x4c] sm:$0xf] 0
      %v1483 = vpack.c.bf16 %v1449, %v1448
      %v1484 = vpack.c.bf16 %v1451, %v1450
      %v1485 = vpack.c.bf16 %v1453, %v1452
      %v1486 = vpack.c.bf16 %v1455, %v1454
      %v1487 = vpack.c.bf16 %v1457, %v1456
      %v1488 = vpack.c.bf16 %v1459, %v1458
      %v1489 = vpack.c.bf16 %v1461, %v1460
      %v1490 = vpack.c.bf16 %v1462, %v1462
      %v1499 = vunpack.c.l.b16 %v1483
      %v1500 = vunpack.c.h.b16 %v1483
      %v1501 = vunpack.c.l.b16 %v1484
      %v1502 = vunpack.c.h.b16 %v1484
      %v1503 = vunpack.c.l.b16 %v1485
      %v1504 = vunpack.c.h.b16 %v1485
      %v1505 = vunpack.c.l.b16 %v1486
      %v1506 = vunpack.c.h.b16 %v1486
      %v1507 = vunpack.c.l.b16 %v1487
      %v1508 = vunpack.c.h.b16 %v1487
      %v1509 = vunpack.c.l.b16 %v1488
      %v1510 = vunpack.c.h.b16 %v1488
      %v1511 = vunpack.c.l.b16 %v1489
      %v1512 = vunpack.c.h.b16 %v1489
      %v1513 = vunpack.c.l.b16 %v1490
      %v1514 = vpack.c.b16 %v1499, %v1499
      %v1515 = vpack.c.b16 %v1500, %v1500
      %v1516 = vpack.c.b16 %v1501, %v1501
      %v1517 = vpack.c.b16 %v1502, %v1502
      %v1518 = vpack.c.b16 %v1503, %v1503
      %v1519 = vpack.c.b16 %v1504, %v1504
      %v1520 = vpack.c.b16 %v1505, %v1505
      %v1521 = vpack.c.b16 %v1506, %v1506
      %v1522 = vpack.c.b16 %v1507, %v1507
      %v1523 = vpack.c.b16 %v1508, %v1508
      %v1524 = vpack.c.b16 %v1509, %v1509
      %v1525 = vpack.c.b16 %v1510, %v1510
      %v1526 = vpack.c.b16 %v1511, %v1511
      %v1527 = vpack.c.b16 %v1512, %v1512
      %v1528 = vpack.c.b16 %v1513, %v1513
      %vm1529 = vsmask.f32 256
      %vm1530 = vsmask.f32 4368
      %vm1531 = vmor %vm1529, %vm1530
      %v1533 = vshrl.u32 %v1514, 16
      %v1535 = vrot.slane %v1533, 7
      %v1536 = vshll.u32 %v1514, 16
      %v1538 = vor.u32 %v1535, %v1536
      %v1539 = vrot.slane %v1535, 4
      %v1541 = vshrl.u32 %v1515, 16
      %v1543 = vrot.slane %v1541, 7
      %v1544 = vshll.u32 %v1515, 16
      %v1546 = vor.u32 %v1543, %v1544
      %v1547 = vsel %vm1531, %v1539, %v1546
      %v1548 = vrot.slane %v1543, 4
      %v1550 = vshrl.u32 %v1516, 16
      %v1552 = vrot.slane %v1550, 7
      %v1553 = vshll.u32 %v1516, 16
      %v1555 = vor.u32 %v1552, %v1553
      %v1556 = vsel %vm1531, %v1548, %v1555
      %v1557 = vrot.slane %v1552, 4
      %v1559 = vshrl.u32 %v1517, 16
      %v1561 = vrot.slane %v1559, 7
      %v1562 = vshll.u32 %v1517, 16
      %v1564 = vor.u32 %v1561, %v1562
      %v1565 = vsel %vm1531, %v1557, %v1564
      %v1566 = vrot.slane %v1561, 4
      %v1568 = vshrl.u32 %v1518, 16
      %v1570 = vrot.slane %v1568, 7
      %v1571 = vshll.u32 %v1518, 16
      %v1573 = vor.u32 %v1570, %v1571
      %v1574 = vsel %vm1531, %v1566, %v1573
      %v1575 = vrot.slane %v1570, 4
      %v1577 = vshrl.u32 %v1519, 16
      %v1579 = vrot.slane %v1577, 7
      %v1580 = vshll.u32 %v1519, 16
      %v1582 = vor.u32 %v1579, %v1580
      %v1583 = vsel %vm1531, %v1575, %v1582
      %v1584 = vrot.slane %v1579, 4
      %v1586 = vshrl.u32 %v1520, 16
      %v1588 = vrot.slane %v1586, 7
      %v1589 = vshll.u32 %v1520, 16
      %v1591 = vor.u32 %v1588, %v1589
      %v1592 = vsel %vm1531, %v1584, %v1591
      %v1593 = vrot.slane %v1588, 4
      %v1595 = vshrl.u32 %v1521, 16
      %v1597 = vrot.slane %v1595, 7
      %v1598 = vshll.u32 %v1521, 16
      %v1600 = vor.u32 %v1597, %v1598
      %v1601 = vsel %vm1531, %v1593, %v1600
      %v1602 = vrot.slane %v1597, 4
      %v1604 = vshrl.u32 %v1522, 16
      %v1606 = vrot.slane %v1604, 7
      %v1607 = vshll.u32 %v1522, 16
      %v1609 = vor.u32 %v1606, %v1607
      %v1610 = vsel %vm1531, %v1602, %v1609
      %v1611 = vrot.slane %v1606, 4
      %v1613 = vshrl.u32 %v1523, 16
      %v1615 = vrot.slane %v1613, 7
      %v1616 = vshll.u32 %v1523, 16
      %v1618 = vor.u32 %v1615, %v1616
      %v1619 = vsel %vm1531, %v1611, %v1618
      %v1620 = vrot.slane %v1615, 4
      %v1622 = vshrl.u32 %v1524, 16
      %v1624 = vrot.slane %v1622, 7
      %v1625 = vshll.u32 %v1524, 16
      %v1627 = vor.u32 %v1624, %v1625
      %v1628 = vsel %vm1531, %v1620, %v1627
      %v1629 = vrot.slane %v1624, 4
      %v1631 = vshrl.u32 %v1525, 16
      %v1633 = vrot.slane %v1631, 7
      %v1634 = vshll.u32 %v1525, 16
      %v1636 = vor.u32 %v1633, %v1634
      %v1637 = vsel %vm1531, %v1629, %v1636
      %v1638 = vrot.slane %v1633, 4
      %v1640 = vshrl.u32 %v1526, 16
      %v1642 = vrot.slane %v1640, 7
      %v1643 = vshll.u32 %v1526, 16
      %v1645 = vor.u32 %v1642, %v1643
      %v1646 = vsel %vm1531, %v1638, %v1645
      %v1647 = vrot.slane %v1642, 4
      %v1649 = vshrl.u32 %v1527, 16
      %v1651 = vrot.slane %v1649, 7
      %v1652 = vshll.u32 %v1527, 16
      %v1654 = vor.u32 %v1651, %v1652
      %v1655 = vsel %vm1531, %v1647, %v1654
      %v1656 = vrot.slane %v1651, 4
      %v1658 = vshrl.u32 %v1528, 16
      %v1660 = vrot.slane %v1658, 7
      %v1661 = vshll.u32 %v1528, 16
      %v1663 = vor.u32 %v1660, %v1661
      %v1664 = vsel %vm1531, %v1656, %v1663
      %v1665 = vrot.slane %v1660, 4
      %vm1682 = vcmask 1043456
      %vm1683 = vsmask.f32 7938
      %vm1684 = vmand %vm1682, %vm1683
      %v1685 = vld [vmem:[%s345 + $0x8] sm:$0xf]
      %v1686 = vsel %vm1684, %v1538, %v1685
      %1687 = vst [vmem:[%s345 + $0x8] sm:$0xf] %v1686
      %1688 = vst [vmem:[%s345 + $0xc] sm:$0xf] %v1547
      %1689 = vst [vmem:[%s345 + $0x10] sm:$0xf] %v1556
      %1690 = vst [vmem:[%s345 + $0x14] sm:$0xf] %v1565
      %1691 = vst [vmem:[%s345 + $0x18] sm:$0xf] %v1574
      %1692 = vst [vmem:[%s345 + $0x1c] sm:$0xf] %v1583
      %1693 = vst [vmem:[%s345 + $0x20] sm:$0xf] %v1592
      %1694 = vst [vmem:[%s345 + $0x24] sm:$0xf] %v1601
      %1695 = vst [vmem:[%s345 + $0x28] sm:$0xf] %v1610
      %1696 = vst [vmem:[%s345 + $0x2c] sm:$0xf] %v1619
      %1697 = vst [vmem:[%s345 + $0x30] sm:$0xf] %v1628
      %1698 = vst [vmem:[%s345 + $0x34] sm:$0xf] %v1637
      %1699 = vst [vmem:[%s345 + $0x38] sm:$0xf] %v1646
      %1700 = vst [vmem:[%s345 + $0x3c] sm:$0xf] %v1655
      %1701 = vst [vmem:[%s345 + $0x40] sm:$0xf] %v1664
      %vm1702 = vcmask 1040384
      %vm1703 = vmand %vm1702, %vm1529
      %v1704 = vld [vmem:[%s345 + $0x44] sm:$0x1]
      %v1705 = vsel %vm1703, %v1665, %v1704
      %1706 = vst [vmem:[%s345 + $0x44] sm:$0x1] %v1705
      %v1707 = vadd.f32 %v1448, %v1449
      %v1708 = vadd.f32 %v1707, %v1450
      %v1709 = vadd.f32 %v1708, %v1451
      %v1710 = vadd.f32 %v1709, %v1452
      %v1711 = vadd.f32 %v1710, %v1453
      %v1712 = vadd.f32 %v1711, %v1454
      %v1713 = vadd.f32 %v1712, %v1455
      %v1714 = vadd.f32 %v1713, %v1456
      %v1715 = vadd.f32 %v1714, %v1457
      %v1716 = vadd.f32 %v1715, %v1458
      %v1717 = vadd.f32 %v1716, %v1459
      %v1718 = vadd.f32 %v1717, %v1460
      %v1719 = vadd.f32 %v1718, %v1461
      %v1720 = vadd.f32 %v1719, %v1462
      %v1721 = vrot.slane %v1720, 4
      %v1722 = vadd.f32 %v1720, %v1721
      %v1723 = vrot.slane %v1722, 2
      %v1724 = vadd.f32 %v1722, %v1723
      %v1725 = vrot.slane %v1724, 1
      %v1726 = vadd.f32 %v1724, %v1725
      %1727 = vst [vmem:[%s349] sm:$0x1] %v1726
      %v1728 = vmul.f32 %v1448, %v1358
      %v1729 = vmul.f32 %v1449, %v1359
      %v1730 = vmul.f32 %v1450, %v1360
      %v1731 = vmul.f32 %v1451, %v1361
      %v1732 = vmul.f32 %v1452, %v1362
      %v1733 = vmul.f32 %v1453, %v1363
      %v1734 = vmul.f32 %v1454, %v1364
      %v1735 = vmul.f32 %v1455, %v1365
      %v1736 = vmul.f32 %v1456, %v1366
      %v1737 = vmul.f32 %v1457, %v1367
      %v1738 = vmul.f32 %v1458, %v1368
      %v1739 = vmul.f32 %v1459, %v1369
      %v1740 = vmul.f32 %v1460, %v1370
      %v1741 = vmul.f32 %v1461, %v1371
      %v1742 = vmul.f32 %v1462, %v1372
      %v1743 = vadd.f32 %v1728, %v1729
      %v1744 = vadd.f32 %v1743, %v1730
      %v1745 = vadd.f32 %v1744, %v1731
      %v1746 = vadd.f32 %v1745, %v1732
      %v1747 = vadd.f32 %v1746, %v1733
      %v1748 = vadd.f32 %v1747, %v1734
      %v1749 = vadd.f32 %v1748, %v1735
      %v1750 = vadd.f32 %v1749, %v1736
      %v1751 = vadd.f32 %v1750, %v1737
      %v1752 = vadd.f32 %v1751, %v1738
      %v1753 = vadd.f32 %v1752, %v1739
      %v1754 = vadd.f32 %v1753, %v1740
      %v1755 = vadd.f32 %v1754, %v1741
      %v1756 = vadd.f32 %v1755, %v1742
      %v1757 = vrot.slane %v1756, 4
      %v1758 = vadd.f32 %v1756, %v1757
      %v1759 = vrot.slane %v1758, 2
      %v1760 = vadd.f32 %v1758, %v1759
      %v1761 = vrot.slane %v1760, 1
      %v1762 = vadd.f32 %v1760, %v1761
      %1763 = vst [vmem:[%s349 + $0x1] sm:$0x1] %v1762
      %v1764 = vld [vmem:[%s340] sm:$0xf]
      %v1765 = vld [vmem:[%s340 + $0x4] sm:$0xf]
      %v1766 = vld [vmem:[%s340 + $0x8] sm:$0xf]
      %v1767 = vld [vmem:[%s340 + $0xc] sm:$0xf]
      %v1768 = vld [vmem:[%s340 + $0x10] sm:$0xf]
      %v1769 = vld [vmem:[%s340 + $0x14] sm:$0xf]
      %v1770 = vld [vmem:[%s340 + $0x18] sm:$0xf]
      %v1771 = vld [vmem:[%s340 + $0x1c] sm:$0xf]
      %v1772 = vld [vmem:[%s340 + $0x20] sm:$0xf]
      %v1773 = vld [vmem:[%s340 + $0x24] sm:$0xf]
      %v1774 = vld [vmem:[%s340 + $0x28] sm:$0xf]
      %v1775 = vld [vmem:[%s340 + $0x2c] sm:$0xf]
      %v1776 = vld [vmem:[%s340 + $0x30] sm:$0xf]
      %v1777 = vld [vmem:[%s340 + $0x34] sm:$0xf]
      %v1778 = vld [vmem:[%s340 + $0x38] sm:$0xf]
      %v1779 = vld [vmem:[%s4] sm:$0xf]
      %v1780 = vld [vmem:[%s4 + $0x4] sm:$0xf]
      %v1781 = vld [vmem:[%s4 + $0x8] sm:$0xf]
      %v1782 = vld [vmem:[%s4 + $0xc] sm:$0xf]
      %v1783 = vld [vmem:[%s4 + $0x10] sm:$0xf]
      %v1784 = vld [vmem:[%s4 + $0x14] sm:$0xf]
      %v1785 = vld [vmem:[%s4 + $0x18] sm:$0xf]
      %v1786 = vld [vmem:[%s4 + $0x1c] sm:$0xf]
      %v1787 = vld [vmem:[%s4 + $0x20] sm:$0xf]
      %v1788 = vld [vmem:[%s4 + $0x24] sm:$0xf]
      %v1789 = vld [vmem:[%s4 + $0x28] sm:$0xf]
      %v1790 = vld [vmem:[%s4 + $0x2c] sm:$0xf]
      %v1791 = vld [vmem:[%s4 + $0x30] sm:$0xf]
      %v1792 = vld [vmem:[%s4 + $0x34] sm:$0xf]
      %v1793 = vld [vmem:[%s4 + $0x38] sm:$0xf]
      %v1794 = vld [vmem:[%s4 + $0x3c] sm:$0xf]
      %v1810 = vunpack.c.l.b16 %v1764
      %v1811 = vunpack.c.l.b16 %v1765
      %v1812 = vunpack.c.l.b16 %v1766
      %v1813 = vunpack.c.l.b16 %v1767
      %v1814 = vunpack.c.l.b16 %v1768
      %v1815 = vunpack.c.l.b16 %v1769
      %v1816 = vunpack.c.l.b16 %v1770
      %v1817 = vunpack.c.l.b16 %v1771
      %v1818 = vunpack.c.l.b16 %v1772
      %v1819 = vunpack.c.l.b16 %v1773
      %v1820 = vunpack.c.l.b16 %v1774
      %v1821 = vunpack.c.l.b16 %v1775
      %v1822 = vunpack.c.l.b16 %v1776
      %v1823 = vunpack.c.l.b16 %v1777
      %v1824 = vunpack.c.l.b16 %v1778
      %v1825 = vpack.c.b16 %v1811, %v1810
      %v1826 = vpack.c.b16 %v1813, %v1812
      %v1827 = vpack.c.b16 %v1815, %v1814
      %v1828 = vpack.c.b16 %v1817, %v1816
      %v1829 = vpack.c.b16 %v1819, %v1818
      %v1830 = vpack.c.b16 %v1821, %v1820
      %v1831 = vpack.c.b16 %v1823, %v1822
      %v1832 = vpack.c.b16 %v1824, %v1824
      %v1857 = vunpack.c.l.b16 %v1779
      %v1858 = vunpack.c.l.b16 %v1780
      %v1859 = vunpack.c.l.b16 %v1781
      %v1860 = vunpack.c.l.b16 %v1782
      %v1861 = vunpack.c.l.b16 %v1783
      %v1862 = vunpack.c.l.b16 %v1784
      %v1863 = vunpack.c.l.b16 %v1785
      %v1864 = vunpack.c.l.b16 %v1786
      %v1865 = vunpack.c.l.b16 %v1787
      %v1866 = vunpack.c.l.b16 %v1788
      %v1867 = vunpack.c.l.b16 %v1789
      %v1868 = vunpack.c.l.b16 %v1790
      %v1869 = vunpack.c.l.b16 %v1791
      %v1870 = vunpack.c.l.b16 %v1792
      %v1871 = vunpack.c.l.b16 %v1793
      %v1872 = vunpack.c.l.b16 %v1794
      %v1873 = vpack.c.b16 %v1858, %v1857
      %v1874 = vpack.c.b16 %v1860, %v1859
      %v1875 = vpack.c.b16 %v1862, %v1861
      %v1876 = vpack.c.b16 %v1864, %v1863
      %v1877 = vpack.c.b16 %v1866, %v1865
      %v1878 = vpack.c.b16 %v1868, %v1867
      %v1879 = vpack.c.b16 %v1870, %v1869
      %v1880 = vpack.c.b16 %v1872, %v1871
      %1889 = vmatprep.subr.bf16.mxu0 0
      %1890 = vmatpush1.bf16.msra.mxu0 %v1873
      %1891 = vmatprep.subr.bf16.mxu0 0
      %1892 = vmatpush1.bf16.msra.mxu0 %v1874
      %1893 = vmatprep.subr.bf16.mxu0 0
      %1894 = vmatpush1.bf16.msra.mxu0 %v1875
      %1895 = vmatprep.subr.bf16.mxu0 0
      %1896 = vmatpush1.bf16.msra.mxu0 %v1876
      %1897 = vmatprep.subr.bf16.mxu0 0
      %1898 = vmatpush1.bf16.msra.mxu0 %v1877
      %1899 = vmatprep.subr.bf16.mxu0 0
      %1900 = vmatpush1.bf16.msra.mxu0 %v1878
      %1901 = vmatprep.subr.bf16.mxu0 0
      %1902 = vmatpush1.bf16.msra.mxu0 %v1879
      %1903 = vmatprep.subr.bf16.mxu0 0
      %1904 = vmatpush1.bf16.msra.mxu0 %v1880
      %1905 = vmatprep.subr.bf16.mxu0 0
      %1906 = vmatpush1.bf16.msra.mxu0 0
      %1907 = vmatprep.subr.bf16.mxu0 0
      %1908 = vmatpush1.bf16.msra.mxu0 0
      %1909 = vmatprep.subr.bf16.mxu0 0
      %1910 = vmatpush1.bf16.msra.mxu0 0
      %1911 = vmatprep.subr.bf16.mxu0 0
      %1912 = vmatpush1.bf16.msra.mxu0 0
      %1913 = vmatprep.subr.bf16.mxu0 0
      %1914 = vmatpush1.bf16.msra.mxu0 0
      %1915 = vmatprep.subr.bf16.mxu0 0
      %1916 = vmatpush1.bf16.msra.mxu0 0
      %1917 = vmatprep.subr.bf16.mxu0 0
      %1918 = vmatpush1.bf16.msra.mxu0 0
      %1919 = vmatprep.subr.bf16.mxu0 0
      %1920 = vmatpush1.bf16.msra.mxu0 0
      %1921 = vmatprep.mubr.bf16.mxu0 0
      %1922 = vmatmul.mubr.bf16.gmra.mrb[0].mxu0 %v1825
      %v1923 = vpop.f32.mrb[0].mxu0
      %v1924 = vadd.f32 0.0, %v1923
      %v1925 = vpop.f32.mrb[0].mxu0
      %v1926 = vpop.f32.mrb[0].mxu0
      %v1927 = vadd.f32 0.0, %v1926
      %v1928 = vpop.f32.mrb[0].mxu0
      %1929 = vmatprep.mubr.bf16.mxu0 0
      %1930 = vmatmul.mubr.bf16.gmra.mrb[0].mxu0 %v1826
      %v1931 = vpop.f32.mrb[0].mxu0
      %v1932 = vadd.f32 0.0, %v1931
      %v1933 = vpop.f32.mrb[0].mxu0
      %v1934 = vpop.f32.mrb[0].mxu0
      %v1935 = vadd.f32 0.0, %v1934
      %v1936 = vpop.f32.mrb[0].mxu0
      %1937 = vmatprep.mubr.bf16.mxu0 0
      %1938 = vmatmul.mubr.bf16.gmra.mrb[0].mxu0 %v1827
      %v1939 = vpop.f32.mrb[0].mxu0
      %v1940 = vadd.f32 0.0, %v1939
      %v1941 = vpop.f32.mrb[0].mxu0
      %v1942 = vpop.f32.mrb[0].mxu0
      %v1943 = vadd.f32 0.0, %v1942
      %v1944 = vpop.f32.mrb[0].mxu0
      %1945 = vmatprep.mubr.bf16.mxu0 0
      %1946 = vmatmul.mubr.bf16.gmra.mrb[0].mxu0 %v1828
      %v1947 = vpop.f32.mrb[0].mxu0
      %v1948 = vadd.f32 0.0, %v1947
      %v1949 = vpop.f32.mrb[0].mxu0
      %v1950 = vpop.f32.mrb[0].mxu0
      %v1951 = vadd.f32 0.0, %v1950
      %v1952 = vpop.f32.mrb[0].mxu0
      %1953 = vmatprep.mubr.bf16.mxu0 0
      %1954 = vmatmul.mubr.bf16.gmra.mrb[0].mxu0 %v1829
      %v1955 = vpop.f32.mrb[0].mxu0
      %v1956 = vadd.f32 0.0, %v1955
      %v1957 = vpop.f32.mrb[0].mxu0
      %v1958 = vpop.f32.mrb[0].mxu0
      %v1959 = vadd.f32 0.0, %v1958
      %v1960 = vpop.f32.mrb[0].mxu0
      %1961 = vmatprep.mubr.bf16.mxu0 0
      %1962 = vmatmul.mubr.bf16.gmra.mrb[0].mxu0 %v1830
      %v1963 = vpop.f32.mrb[0].mxu0
      %v1964 = vadd.f32 0.0, %v1963
      %v1965 = vpop.f32.mrb[0].mxu0
      %v1966 = vpop.f32.mrb[0].mxu0
      %v1967 = vadd.f32 0.0, %v1966
      %v1968 = vpop.f32.mrb[0].mxu0
      %1969 = vmatprep.mubr.bf16.mxu0 0
      %1970 = vmatmul.mubr.bf16.gmra.mrb[0].mxu0 %v1831
      %v1971 = vpop.f32.mrb[0].mxu0
      %v1972 = vadd.f32 0.0, %v1971
      %v1973 = vpop.f32.mrb[0].mxu0
      %v1974 = vpop.f32.mrb[0].mxu0
      %v1975 = vadd.f32 0.0, %v1974
      %v1976 = vpop.f32.mrb[0].mxu0
      %1977 = vmatprep.mubr.bf16.mxu0 0
      %1978 = vmatmul.mubr.bf16.gmra.mrb[0].mxu0 %v1832
      %v1979 = vpop.f32.mrb[0].mxu0
      %v1980 = vadd.f32 0.0, %v1979
      %v1981 = vpop.f32.mrb[0].mxu0
      %v1982 = vpop.f32.mrb[0].mxu0
      %v1983 = vpop.f32.mrb[0].mxu0
      %1984 = vdwg.mxu0
      %v1985 = vmul.f32 %v1924, %v1376
      %v1986 = vmul.f32 %v1927, %v1381
      %v1987 = vmul.f32 %v1932, %v1386
      %v1988 = vmul.f32 %v1935, %v1391
      %v1989 = vmul.f32 %v1940, %v1396
      %v1990 = vmul.f32 %v1943, %v1401
      %v1991 = vmul.f32 %v1948, %v1406
      %v1992 = vmul.f32 %v1951, %v1411
      %v1993 = vmul.f32 %v1956, %v1416
      %v1994 = vmul.f32 %v1959, %v1421
      %v1995 = vmul.f32 %v1964, %v1426
      %v1996 = vmul.f32 %v1967, %v1431
      %v1997 = vmul.f32 %v1972, %v1436
      %v1998 = vmul.f32 %v1975, %v1441
      %v1999 = vmul.f32 %v1980, %v1446
      %v2000 = vpack.c.bf16 %v1986, %v1985
      %v2001 = vpack.c.bf16 %v1988, %v1987
      %v2002 = vpack.c.bf16 %v1990, %v1989
      %v2003 = vpack.c.bf16 %v1992, %v1991
      %v2004 = vpack.c.bf16 %v1994, %v1993
      %v2005 = vpack.c.bf16 %v1996, %v1995
      %v2006 = vpack.c.bf16 %v1998, %v1997
      %v2007 = vpack.c.bf16 %v1999, %v1999
      %v2016 = vunpack.c.l.b16 %v2000
      %v2017 = vunpack.c.h.b16 %v2000
      %v2018 = vunpack.c.l.b16 %v2001
      %v2019 = vunpack.c.h.b16 %v2001
      %v2020 = vunpack.c.l.b16 %v2002
      %v2021 = vunpack.c.h.b16 %v2002
      %v2022 = vunpack.c.l.b16 %v2003
      %v2023 = vunpack.c.h.b16 %v2003
      %v2024 = vunpack.c.l.b16 %v2004
      %v2025 = vunpack.c.h.b16 %v2004
      %v2026 = vunpack.c.l.b16 %v2005
      %v2027 = vunpack.c.h.b16 %v2005
      %v2028 = vunpack.c.l.b16 %v2006
      %v2029 = vunpack.c.h.b16 %v2006
      %v2030 = vunpack.c.l.b16 %v2007
      %v2031 = vpack.c.b16 %v2016, %v2016
      %v2032 = vpack.c.b16 %v2017, %v2017
      %v2033 = vpack.c.b16 %v2018, %v2018
      %v2034 = vpack.c.b16 %v2019, %v2019
      %v2035 = vpack.c.b16 %v2020, %v2020
      %v2036 = vpack.c.b16 %v2021, %v2021
      %v2037 = vpack.c.b16 %v2022, %v2022
      %v2038 = vpack.c.b16 %v2023, %v2023
      %v2039 = vpack.c.b16 %v2024, %v2024
      %v2040 = vpack.c.b16 %v2025, %v2025
      %v2041 = vpack.c.b16 %v2026, %v2026
      %v2042 = vpack.c.b16 %v2027, %v2027
      %v2043 = vpack.c.b16 %v2028, %v2028
      %v2044 = vpack.c.b16 %v2029, %v2029
      %v2045 = vpack.c.b16 %v2030, %v2030
      %2061 = vst [vmem:[%s354] sm:$0xf] %v2031
      %2062 = vst [vmem:[%s354 + $0x4] sm:$0xf] %v2032
      %2063 = vst [vmem:[%s354 + $0x8] sm:$0xf] %v2033
      %2064 = vst [vmem:[%s354 + $0xc] sm:$0xf] %v2034
      %2065 = vst [vmem:[%s354 + $0x10] sm:$0xf] %v2035
      %2066 = vst [vmem:[%s354 + $0x14] sm:$0xf] %v2036
      %2067 = vst [vmem:[%s354 + $0x18] sm:$0xf] %v2037
      %2068 = vst [vmem:[%s354 + $0x1c] sm:$0xf] %v2038
      %2069 = vst [vmem:[%s354 + $0x20] sm:$0xf] %v2039
      %2070 = vst [vmem:[%s354 + $0x24] sm:$0xf] %v2040
      %2071 = vst [vmem:[%s354 + $0x28] sm:$0xf] %v2041
      %2072 = vst [vmem:[%s354 + $0x2c] sm:$0xf] %v2042
      %2073 = vst [vmem:[%s354 + $0x30] sm:$0xf] %v2043
      %2074 = vst [vmem:[%s354 + $0x34] sm:$0xf] %v2044
      %2075 = vst [vmem:[%s354 + $0x38] sm:$0xf] %v2045
      %v2076 = vadd.f32 %v1985, %v1986
      %v2077 = vadd.f32 %v2076, %v1987
      %v2078 = vadd.f32 %v2077, %v1988
      %v2079 = vadd.f32 %v2078, %v1989
      %v2080 = vadd.f32 %v2079, %v1990
      %v2081 = vadd.f32 %v2080, %v1991
      %v2082 = vadd.f32 %v2081, %v1992
      %v2083 = vadd.f32 %v2082, %v1993
      %v2084 = vadd.f32 %v2083, %v1994
      %v2085 = vadd.f32 %v2084, %v1995
      %v2086 = vadd.f32 %v2085, %v1996
      %v2087 = vadd.f32 %v2086, %v1997
      %v2088 = vadd.f32 %v2087, %v1998
      %v2089 = vadd.f32 %v2088, %v1999
      %v2090 = vrot.slane %v2089, 4
      %v2091 = vadd.f32 %v2089, %v2090
      %v2092 = vrot.slane %v2091, 2
      %v2093 = vadd.f32 %v2091, %v2092
      %v2094 = vrot.slane %v2093, 1
      %v2095 = vadd.f32 %v2093, %v2094
      %2096 = vst [vmem:[%s358] sm:$0x1] %v2095
      %v2097 = vmul.f32 %v1985, %v1924
      %v2098 = vmul.f32 %v1986, %v1927
      %v2099 = vmul.f32 %v1987, %v1932
      %v2100 = vmul.f32 %v1988, %v1935
      %v2101 = vmul.f32 %v1989, %v1940
      %v2102 = vmul.f32 %v1990, %v1943
      %v2103 = vmul.f32 %v1991, %v1948
      %v2104 = vmul.f32 %v1992, %v1951
      %v2105 = vmul.f32 %v1993, %v1956
      %v2106 = vmul.f32 %v1994, %v1959
      %v2107 = vmul.f32 %v1995, %v1964
      %v2108 = vmul.f32 %v1996, %v1967
      %v2109 = vmul.f32 %v1997, %v1972
      %v2110 = vmul.f32 %v1998, %v1975
      %v2111 = vmul.f32 %v1999, %v1980
      %v2112 = vadd.f32 %v2097, %v2098
      %v2113 = vadd.f32 %v2112, %v2099
      %v2114 = vadd.f32 %v2113, %v2100
      %v2115 = vadd.f32 %v2114, %v2101
      %v2116 = vadd.f32 %v2115, %v2102
      %v2117 = vadd.f32 %v2116, %v2103
      %v2118 = vadd.f32 %v2117, %v2104
      %v2119 = vadd.f32 %v2118, %v2105
      %v2120 = vadd.f32 %v2119, %v2106
      %v2121 = vadd.f32 %v2120, %v2107
      %v2122 = vadd.f32 %v2121, %v2108
      %v2123 = vadd.f32 %v2122, %v2109
      %v2124 = vadd.f32 %v2123, %v2110
      %v2125 = vadd.f32 %v2124, %v2111
      %v2126 = vrot.slane %v2125, 4
      %v2127 = vadd.f32 %v2125, %v2126
      %v2128 = vrot.slane %v2127, 2
      %v2129 = vadd.f32 %v2127, %v2128
      %v2130 = vrot.slane %v2129, 1
      %v2131 = vadd.f32 %v2129, %v2130
      %2132 = vst [vmem:[%s358 + $0x1] sm:$0x1] %v2131
      %p2133 = scmp.lt.s32.totalorder %s20, 1
      %s2134 = scalar_select %p2133, %s20, 1
      %s2135 = smul.addr %s2134, 20
      %s2136 = smul.addr %s2135, 4
      %s2137 = scalar_lea.vmem %s5, %s2136
      %p2138 = scmp.lt.s32.totalorder %s20, 1
      %s2139 = scalar_select %p2138, %s20, 1
      %s2140 = smul.addr %s2139, 2
      %s2141 = scalar_lea.vmem %s6, %s2140
      %p2142 = scmp.lt.s32.totalorder %s20, 1
      %s2143 = scalar_select %p2142, %s20, 1
      %s2144 = smul.addr %s2143, 15
      %s2145 = smul.addr %s2144, 4
      %s2146 = scalar_lea.vmem %s7, %s2145
      %p2147 = scmp.lt.s32.totalorder %s20, 1
      %s2148 = scalar_select %p2147, %s20, 1
      %s2149 = smul.addr %s2148, 2
      %s2150 = scalar_lea.vmem %s8, %s2149
      // Predicated region
      $region41: #{basic_block_forward.3} parent=39 // pred_check
        %p2151 = pneg %p153
      $region42: #{basic_block_forward.3} parent=39 // pred_check_branch
        %2153 = sbr.rel (%p2151) target = $region44
      $region43: #{basic_block_forward.3} parent=39 // pred_region
        _
      $region44: #{basic_block_forward.3} parent=39 // pred_fallthru
        _
      // Predicated region
      $region45: #{basic_block_forward.3} parent=39 // pred_check
        %p2154 = pneg %p179
      $region46: #{basic_block_forward.3} parent=39 // pred_check_branch
        %2156 = sbr.rel (%p2154) target = $region48
      $region47: #{basic_block_forward.3} parent=39 // pred_region
        _
      $region48: #{basic_block_forward.3} parent=39 // pred_fallthru
        _
      // Predicated region
      $region49: #{basic_block_forward.3} parent=39 // pred_check
        %p2157 = pneg %p205
      $region50: #{basic_block_forward.3} parent=39 // pred_check_branch
        %2159 = sbr.rel (%p2157) target = $region52
      $region51: #{basic_block_forward.3} parent=39 // pred_region
        _
      $region52: #{basic_block_forward.3} parent=39 // pred_fallthru
        _
      // Predicated region
      $region53: #{basic_block_forward.3} parent=39 // pred_check
        %p2160 = pneg %p231
      $region54: #{basic_block_forward.3} parent=39 // pred_check_branch
        %2162 = sbr.rel (%p2160) target = $region56
      $region55: #{basic_block_forward.3} parent=39 // pred_region
        _
      $region56: #{basic_block_forward.3} parent=39 // pred_fallthru
        _
    $region40: #{basic_block_forward.3} parent=5 // pred_fallthru
      _
    %p2163 = scmp.le.s32.totalorder 2, %s15
    // Predicated region
    $region57: #{basic_block_forward.3} parent=5 // pred_check
      %p2164 = pneg %p2163
    $region58: #{basic_block_forward.3} parent=5 // pred_check_branch
      %2166 = sbr.rel (%p2164) target = $region60
    $region59: #{basic_block_forward.3} parent=5 // pred_region
      %s2167 = ssub.s32 %s15, 2
      // Predicated region
      $region61: #{basic_block_forward.3} parent=59 // pred_check
        %p2168 = pneg %p159
      $region62: #{basic_block_forward.3} parent=59 // pred_check_branch
        %2170 = sbr.rel (%p2168) target = $region64
      $region63: #{basic_block_forward.3} parent=59 // pred_region
        %p2171 = scmp.lt.s32.totalorder %s21, 1
        %s2172 = scalar_select %p2171, %s21, 1
        %s2173 = smul.addr %s2172, 20
        %s2174 = smul.addr %s2173, 4
        %s2175 = scalar_lea.vmem %s5, %s2174
      $region64: #{basic_block_forward.3} parent=59 // pred_fallthru
        _
      // Predicated region
      $region65: #{basic_block_forward.3} parent=59 // pred_check
        %p2176 = pneg %p185
      $region66: #{basic_block_forward.3} parent=59 // pred_check_branch
        %2178 = sbr.rel (%p2176) target = $region68
      $region67: #{basic_block_forward.3} parent=59 // pred_region
        %p2179 = scmp.lt.s32.totalorder %s21, 1
        %s2180 = scalar_select %p2179, %s21, 1
        %s2181 = smul.addr %s2180, 2
        %s2182 = scalar_lea.vmem %s6, %s2181
      $region68: #{basic_block_forward.3} parent=59 // pred_fallthru
        _
      // Predicated region
      $region69: #{basic_block_forward.3} parent=59 // pred_check
        %p2183 = pneg %p211
      $region70: #{basic_block_forward.3} parent=59 // pred_check_branch
        %2185 = sbr.rel (%p2183) target = $region72
      $region71: #{basic_block_forward.3} parent=59 // pred_region
        %p2186 = scmp.lt.s32.totalorder %s21, 1
        %s2187 = scalar_select %p2186, %s21, 1
        %s2188 = smul.addr %s2187, 15
        %s2189 = smul.addr %s2188, 4
        %s2190 = scalar_lea.vmem %s7, %s2189
      $region72: #{basic_block_forward.3} parent=59 // pred_fallthru
        _
      // Predicated region
      $region73: #{basic_block_forward.3} parent=59 // pred_check
        %p2191 = pneg %p237
      $region74: #{basic_block_forward.3} parent=59 // pred_check_branch
        %2193 = sbr.rel (%p2191) target = $region76
      $region75: #{basic_block_forward.3} parent=59 // pred_region
        %p2194 = scmp.lt.s32.totalorder %s21, 1
        %s2195 = scalar_select %p2194, %s21, 1
        %s2196 = smul.addr %s2195, 2
        %s2197 = scalar_lea.vmem %s8, %s2196
      $region76: #{basic_block_forward.3} parent=59 // pred_fallthru
        _
    $region60: #{basic_block_forward.3} parent=5 // pred_fallthru
      _
  $region6: #{basic_block_forward.3} parent=0 // loop_footer
    %s19 = sadd.s32 1, %s15
  $region7: #{basic_block_forward.3} parent=0 // loop_footer_branch
    %14 = sbr.rel target = $region3
  $region8: #{basic_block_forward.3} parent=0 // loop_exit
    _

// kernel: basic_block_forward.4
$region0: #{basic_block_forward.4}
  #allocation0 [shape = 'u32[]', space=smem, size = 0x4, offset = 0x4, fixed_abs, tag = 'smem constant byte address 0x4 - core index']
  #allocation1 [shape = 'u32[144,128]{1,0:T(1,128)}', space=vmem, size = 0x12000, scoped, tag = 'internal scratch']
  #allocation2 [shape = 'bf16[160,128]{1,0:T(16,128)(2,1)}', space=vmem, size = 0xa000, scoped, tag = 'scratch operand']
  %s0 = inlined_call_operand.vmem [shape: bf16[2,160,128], index: 0, kind: input, shape index: {}]
  %s1 = inlined_call_operand.vmem [shape: f32[160,1], index: 1, kind: input, shape index: {}]
  %s2 = inlined_call_operand.vmem [shape: bf16[9,128,128], index: 2, kind: input, shape index: {}]
  %s3 = inlined_call_operand.vmem [shape: f32[1,128], index: 3, kind: input, shape index: {}]
  %s4 = inlined_call_operand.vmem [shape: f32[1,128], index: 4, kind: input, shape index: {}]
  %s5 = inlined_call_operand.vmem [shape: bf16[2,120,128], index: 5, kind: output, shape index: {0}]
  %s6 = inlined_call_operand.vmem [shape: f32[2,2,128], index: 6, kind: output, shape index: {1}]
  %7 = xla_tuple %s5, %s6
  %s8 = sld [smem:[#allocation0]]
  $region61: #{basic_block_forward.4} parent=0
    _
  %s10 = ssub.s32 1, %s8
  %s11 = scalar_select 0, %s10, %s8
  loop: start=0, step=1, limit=4
  $region2: #{basic_block_forward.4} parent=0 // loop_pre_header
    _
  $region3: #{basic_block_forward.4} parent=0 // loop_header
    %s13 = sphi 0, %s17
    %p14 = scmp.ge.s32.totalorder %s13, 4
    %s23 = sphi 0, %s25
    %s26 = sphi 0, %s23
    %s27 = sphi 0, %s26
    %s43 = sphi 0, %s27
    %s47 = sphi 0, %s47
    %s49 = sphi 0, %s47
    %s50 = sphi 0, %s49
    %s64 = sphi 0, %s50
    %s68 = sphi 0, %s68
    %s70 = sphi 0, %s68
    %s71 = sphi 0, %s70
    %s85 = sphi 0, %s71
    %s89 = sphi 0, %s89
    %s91 = sphi 0, %s89
    %s92 = sphi 0, %s91
    %s106 = sphi 0, %s92
    %s110 = sphi 0, %s110
    %s112 = sphi 0, %s110
    %s113 = sphi 0, %s112
    %s127 = sphi 0, %s113
    %s133 = sphi 0, %s135
    %s136 = sphi 0, %s133
    %s137 = sphi 0, %s136
    %s153 = sphi 0, %s137
    %s159 = sphi 0, %s161
    %s162 = sphi 0, %s159
    %s163 = sphi 0, %s162
    %s179 = sphi 0, %s163
  $region4: #{basic_block_forward.4} parent=0 // loop_header_branch
    %16 = sbr.rel (%p14) target = $region8
  $region5: #{basic_block_forward.4} parent=0 // loop_body
    %s18 = ssub.s32 %s13, 1
    %s19 = ssub.s32 %s13, 2
    %s20 = sadd.s32 %s13, 1
    %s21 = ssub.s32 %s13, %s20
    %p22 = scmp.eq.s32.totalorder %s21, 0
    %s24 = sadd.s32 %s23, 1
    %s25 = scalar_select %p22, %s23, %s24
    %p28 = pneg %p22
    %p29 = scmp.eq.s32.totalorder %s13, 1
    %p30 = por %p28, %p29
    %p31 = scmp.ne.s32.totalorder %s23, %s26
    %p32 = scmp.eq.s32.totalorder %s13, 0
    %p33 = por %p31, %p32
    %p34 = scmp.ne.s32.totalorder %s23, %s26
    %p35 = scmp.eq.s32.totalorder %s18, 1
    %p36 = por %p34, %p35
    %p37 = scmp.ne.s32.totalorder %s26, %s27
    %p38 = scmp.eq.s32.totalorder %s18, 0
    %p39 = por %p37, %p38
    %p40 = scmp.ne.s32.totalorder %s26, %s27
    %p41 = scmp.eq.s32.totalorder %s19, 1
    %p42 = por %p40, %p41
    %p44 = scmp.ne.s32.totalorder %s27, %s43
    %p45 = scmp.eq.s32.totalorder %s19, 0
    %p46 = por %p44, %p45
    %s48 = sadd.s32 %s47, 1
    %p51 = scmp.eq.s32.totalorder %s13, 1
    %p52 = scmp.ne.s32.totalorder %s47, %s49
    %p53 = scmp.eq.s32.totalorder %s13, 0
    %p54 = por %p52, %p53
    %p55 = scmp.ne.s32.totalorder %s47, %s49
    %p56 = scmp.eq.s32.totalorder %s18, 1
    %p57 = por %p55, %p56
    %p58 = scmp.ne.s32.totalorder %s49, %s50
    %p59 = scmp.eq.s32.totalorder %s18, 0
    %p60 = por %p58, %p59
    %p61 = scmp.ne.s32.totalorder %s49, %s50
    %p62 = scmp.eq.s32.totalorder %s19, 1
    %p63 = por %p61, %p62
    %p65 = scmp.ne.s32.totalorder %s50, %s64
    %p66 = scmp.eq.s32.totalorder %s19, 0
    %p67 = por %p65, %p66
    %s69 = sadd.s32 %s68, 1
    %p72 = scmp.eq.s32.totalorder %s13, 1
    %p73 = scmp.ne.s32.totalorder %s68, %s70
    %p74 = scmp.eq.s32.totalorder %s13, 0
    %p75 = por %p73, %p74
    %p76 = scmp.ne.s32.totalorder %s68, %s70
    %p77 = scmp.eq.s32.totalorder %s18, 1
    %p78 = por %p76, %p77
    %p79 = scmp.ne.s32.totalorder %s70, %s71
    %p80 = scmp.eq.s32.totalorder %s18, 0
    %p81 = por %p79, %p80
    %p82 = scmp.ne.s32.totalorder %s70, %s71
    %p83 = scmp.eq.s32.totalorder %s19, 1
    %p84 = por %p82, %p83
    %p86 = scmp.ne.s32.totalorder %s71, %s85
    %p87 = scmp.eq.s32.totalorder %s19, 0
    %p88 = por %p86, %p87
    %s90 = sadd.s32 %s89, 1
    %p93 = scmp.eq.s32.totalorder %s13, 1
    %p94 = scmp.ne.s32.totalorder %s89, %s91
    %p95 = scmp.eq.s32.totalorder %s13, 0
    %p96 = por %p94, %p95
    %p97 = scmp.ne.s32.totalorder %s89, %s91
    %p98 = scmp.eq.s32.totalorder %s18, 1
    %p99 = por %p97, %p98
    %p100 = scmp.ne.s32.totalorder %s91, %s92
    %p101 = scmp.eq.s32.totalorder %s18, 0
    %p102 = por %p100, %p101
    %p103 = scmp.ne.s32.totalorder %s91, %s92
    %p104 = scmp.eq.s32.totalorder %s19, 1
    %p105 = por %p103, %p104
    %p107 = scmp.ne.s32.totalorder %s92, %s106
    %p108 = scmp.eq.s32.totalorder %s19, 0
    %p109 = por %p107, %p108
    %s111 = sadd.s32 %s110, 1
    %p114 = scmp.eq.s32.totalorder %s13, 1
    %p115 = scmp.ne.s32.totalorder %s110, %s112
    %p116 = scmp.eq.s32.totalorder %s13, 0
    %p117 = por %p115, %p116
    %p118 = scmp.ne.s32.totalorder %s110, %s112
    %p119 = scmp.eq.s32.totalorder %s18, 1
    %p120 = por %p118, %p119
    %p121 = scmp.ne.s32.totalorder %s112, %s113
    %p122 = scmp.eq.s32.totalorder %s18, 0
    %p123 = por %p121, %p122
    %p124 = scmp.ne.s32.totalorder %s112, %s113
    %p125 = scmp.eq.s32.totalorder %s19, 1
    %p126 = por %p124, %p125
    %p128 = scmp.ne.s32.totalorder %s113, %s127
    %p129 = scmp.eq.s32.totalorder %s19, 0
    %p130 = por %p128, %p129
    %s131 = ssub.s32 %s13, %s20
    %p132 = scmp.eq.s32.totalorder %s131, 0
    %s134 = sadd.s32 %s133, 1
    %s135 = scalar_select %p132, %s133, %s134
    %p138 = pneg %p132
    %p139 = scmp.eq.s32.totalorder %s13, 1
    %p140 = por %p138, %p139
    %p141 = scmp.ne.s32.totalorder %s133, %s136
    %p142 = scmp.eq.s32.totalorder %s13, 0
    %p143 = por %p141, %p142
    %p144 = scmp.ne.s32.totalorder %s133, %s136
    %p145 = scmp.eq.s32.totalorder %s18, 1
    %p146 = por %p144, %p145
    %p147 = scmp.ne.s32.totalorder %s136, %s137
    %p148 = scmp.eq.s32.totalorder %s18, 0
    %p149 = por %p147, %p148
    %p150 = scmp.ne.s32.totalorder %s136, %s137
    %p151 = scmp.eq.s32.totalorder %s19, 1
    %p152 = por %p150, %p151
    %p154 = scmp.ne.s32.totalorder %s137, %s153
    %p155 = scmp.eq.s32.totalorder %s19, 0
    %p156 = por %p154, %p155
    %s157 = ssub.s32 %s13, %s20
    %p158 = scmp.eq.s32.totalorder %s157, 0
    %s160 = sadd.s32 %s159, 1
    %s161 = scalar_select %p158, %s159, %s160
    %p164 = pneg %p158
    %p165 = scmp.eq.s32.totalorder %s13, 1
    %p166 = por %p164, %p165
    %p167 = scmp.ne.s32.totalorder %s159, %s162
    %p168 = scmp.eq.s32.totalorder %s13, 0
    %p169 = por %p167, %p168
    %p170 = scmp.ne.s32.totalorder %s159, %s162
    %p171 = scmp.eq.s32.totalorder %s18, 1
    %p172 = por %p170, %p171
    %p173 = scmp.ne.s32.totalorder %s162, %s163
    %p174 = scmp.eq.s32.totalorder %s18, 0
    %p175 = por %p173, %p174
    %p176 = scmp.ne.s32.totalorder %s162, %s163
    %p177 = scmp.eq.s32.totalorder %s19, 1
    %p178 = por %p176, %p177
    %p180 = scmp.ne.s32.totalorder %s163, %s179
    %p181 = scmp.eq.s32.totalorder %s19, 0
    %p182 = por %p180, %p181
    %p183 = scmp.le.s32.totalorder 1, %s13
    %p184 = scmp.lt.s32.totalorder %s13, 3
    %p185 = pnand %p183, %p184
    %p186 = pneg %p185
    // Predicated region
    $region9: #{basic_block_forward.4} parent=5 // pred_check
      _
    $region10: #{basic_block_forward.4} parent=5 // pred_check_branch
      %188 = sbr.rel (%p185) target = $region12
    $region11: #{basic_block_forward.4} parent=5 // pred_region
      %s189 = ssub.s32 %s13, 1
      // Predicated region
      $region13: #{basic_block_forward.4} parent=11 // pred_check
        %p190 = pneg %p60
      $region14: #{basic_block_forward.4} parent=11 // pred_check_branch
        %192 = sbr.rel (%p190) target = $region16
      $region15: #{basic_block_forward.4} parent=11 // pred_region
        _
      $region16: #{basic_block_forward.4} parent=11 // pred_fallthru
        _
      // Predicated region
      $region17: #{basic_block_forward.4} parent=11 // pred_check
        %p193 = pneg %p81
      $region18: #{basic_block_forward.4} parent=11 // pred_check_branch
        %195 = sbr.rel (%p193) target = $region20
      $region19: #{basic_block_forward.4} parent=11 // pred_region
        _
      $region20: #{basic_block_forward.4} parent=11 // pred_fallthru
        _
      // Predicated region
      $region21: #{basic_block_forward.4} parent=11 // pred_check
        %p196 = pneg %p102
      $region22: #{basic_block_forward.4} parent=11 // pred_check_branch
        %198 = sbr.rel (%p196) target = $region24
      $region23: #{basic_block_forward.4} parent=11 // pred_region
        _
      $region24: #{basic_block_forward.4} parent=11 // pred_fallthru
        _
      // Predicated region
      $region25: #{basic_block_forward.4} parent=11 // pred_check
        %p199 = pneg %p123
      $region26: #{basic_block_forward.4} parent=11 // pred_check_branch
        %201 = sbr.rel (%p199) target = $region28
      $region27: #{basic_block_forward.4} parent=11 // pred_region
        _
      $region28: #{basic_block_forward.4} parent=11 // pred_fallthru
        _
    $region12: #{basic_block_forward.4} parent=5 // pred_fallthru
      _
    %p202 = scmp.lt.s32.totalorder %s13, 2
    // Predicated region
    $region29: #{basic_block_forward.4} parent=5 // pred_check
      %p203 = pneg %p202
    $region30: #{basic_block_forward.4} parent=5 // pred_check_branch
      %205 = sbr.rel (%p203) target = $region32
    $region31: #{basic_block_forward.4} parent=5 // pred_region
      // Predicated region
      $region33: #{basic_block_forward.4} parent=31 // pred_check
        %p206 = pneg %p33
      $region34: #{basic_block_forward.4} parent=31 // pred_check_branch
        %208 = sbr.rel (%p206) target = $region36
      $region35: #{basic_block_forward.4} parent=31 // pred_region
        %p209 = scmp.lt.s32.totalorder %s13, 1
        %s210 = scalar_select %p209, %s13, 1
        %s211 = smul.addr %s210, 20
        %s212 = smul.addr %s211, 4
        %s213 = scalar_lea.vmem %s0, %s212
      $region36: #{basic_block_forward.4} parent=31 // pred_fallthru
        _
    $region32: #{basic_block_forward.4} parent=5 // pred_fallthru
      _
    %p214 = scmp.le.s32.totalorder 1, %s13
    %p215 = scmp.lt.s32.totalorder %s13, 3
    %p216 = pnand %p214, %p215
    %p217 = pneg %p216
    // Predicated region
    $region37: #{basic_block_forward.4} parent=5 // pred_check
      _
    $region38: #{basic_block_forward.4} parent=5 // pred_check_branch
      %219 = sbr.rel (%p216) target = $region40
    $region39: #{basic_block_forward.4} parent=5 // pred_region
      %s220 = ssub.s32 %s13, 1
      %p221 = scmp.lt.s32.totalorder %s18, 1
      %s222 = scalar_select %p221, %s18, 1
      %s223 = smul.addr %s222, 20
      %s224 = smul.addr %s223, 4
      %s225 = scalar_lea.vmem %s0, %s224
      %p226 = pneg %p39
      %p227 = pneg %p36
      %p228 = pneg %p60
      %p229 = pneg %p57
      %p230 = pneg %p81
      %p231 = pneg %p78
      %p232 = pneg %p102
      %p233 = pneg %p99
      %p234 = pneg %p123
      %p235 = pneg %p120
      %p236 = pneg %p149
      %p237 = pneg %p146
      %p238 = scmp.lt.s32.totalorder %s18, 1
      %s239 = scalar_select %p238, %s18, 1
      %s240 = smul.addr %s239, 15
      %s241 = smul.addr %s240, 4
      %s242 = scalar_lea.vmem %s5, %s241
      %p243 = pneg %p175
      %p244 = pneg %p172
      %p245 = scmp.lt.s32.totalorder %s18, 1
      %s246 = scalar_select %p245, %s18, 1
      %s247 = smul.addr %s246, 2
      %s248 = scalar_lea.vmem %s6, %s247
      %p249 = scmp.lt.s32.totalorder %s18, 1
      %s250 = scalar_select %p249, %s18, 1
      %s251 = smul.addr %s250, 20
      %s252 = smul.addr %s251, 4
      %s253 = scalar_lea.vmem %s0, %s252
      %p254 = scmp.lt.s32.totalorder %s18, 1
      %s255 = scalar_select %p254, %s18, 1
      %s256 = smul.addr %s255, 15
      %s257 = smul.addr %s256, 4
      %s258 = scalar_lea.vmem %s5, %s257
      %p259 = scmp.lt.s32.totalorder %s18, 1
      %s260 = scalar_select %p259, %s18, 1
      %s261 = smul.addr %s260, 2
      %s262 = scalar_lea.vmem %s6, %s261
      %v264 = vld [vmem:[%s253] sm:$0xf]
      %v265 = vld [vmem:[%s253 + $0x4] sm:$0xf]
      %v266 = vld [vmem:[%s253 + $0x8] sm:$0xf]
      %v267 = vld [vmem:[%s253 + $0xc] sm:$0xf]
      %v268 = vld [vmem:[%s253 + $0x10] sm:$0xf]
      %v269 = vld [vmem:[%s253 + $0x14] sm:$0xf]
      %v270 = vld [vmem:[%s253 + $0x18] sm:$0xf]
      %v271 = vld [vmem:[%s253 + $0x1c] sm:$0xf]
      %v272 = vld [vmem:[%s253 + $0x20] sm:$0xf]
      %v273 = vld [vmem:[%s253 + $0x24] sm:$0xf]
      %v274 = vld [vmem:[%s253 + $0x28] sm:$0xf]
      %v275 = vld [vmem:[%s253 + $0x2c] sm:$0xf]
      %v276 = vld [vmem:[%s253 + $0x30] sm:$0xf]
      %v277 = vld [vmem:[%s253 + $0x34] sm:$0xf]
      %v278 = vld [vmem:[%s253 + $0x38] sm:$0xf]
      %v279 = vld [vmem:[%s253 + $0x3c] sm:$0xf]
      %v280 = vld [vmem:[%s253 + $0x40] sm:$0xf]
      %v281 = vld [vmem:[%s253 + $0x44] sm:$0xf]
      %v282 = vld [vmem:[%s253 + $0x48] sm:$0xf]
      %v283 = vld [vmem:[%s253 + $0x4c] sm:$0xf]
      %v284 = vunpack.c.l.bf16 %v264
      %v285 = vunpack.c.l.bf16 %v265
      %v286 = vunpack.c.l.bf16 %v266
      %v287 = vunpack.c.l.bf16 %v267
      %v288 = vunpack.c.l.bf16 %v268
      %v289 = vunpack.c.l.bf16 %v269
      %v290 = vunpack.c.l.bf16 %v270
      %v291 = vunpack.c.l.bf16 %v271
      %v292 = vunpack.c.l.bf16 %v272
      %v293 = vunpack.c.l.bf16 %v273
      %v294 = vunpack.c.l.bf16 %v274
      %v295 = vunpack.c.l.bf16 %v275
      %v296 = vunpack.c.l.bf16 %v276
      %v297 = vunpack.c.l.bf16 %v277
      %v298 = vunpack.c.l.bf16 %v278
      %v299 = vunpack.c.l.bf16 %v279
      %v300 = vunpack.c.l.bf16 %v280
      %v301 = vunpack.c.l.bf16 %v281
      %v302 = vunpack.c.l.bf16 %v282
      %v303 = vunpack.c.l.bf16 %v283
      %v304 = vld [vmem:[%s3] sm:$0x1]
      %v306 = vlaneseq
      %v307 = vshrl.u32 %v306, 7
      %v308 = vsub.s32 0, %v307
      %v309 = vrot.slane %v304, %v308
      %v311 = vmul.f32 %v284, %v309
      %v312 = vmul.f32 %v285, %v309
      %v313 = vmul.f32 %v286, %v309
      %v314 = vmul.f32 %v287, %v309
      %v315 = vmul.f32 %v288, %v309
      %v316 = vmul.f32 %v289, %v309
      %v317 = vmul.f32 %v290, %v309
      %v318 = vmul.f32 %v291, %v309
      %v319 = vmul.f32 %v292, %v309
      %v320 = vmul.f32 %v293, %v309
      %v321 = vmul.f32 %v294, %v309
      %v322 = vmul.f32 %v295, %v309
      %v323 = vmul.f32 %v296, %v309
      %v324 = vmul.f32 %v297, %v309
      %v325 = vmul.f32 %v298, %v309
      %v326 = vmul.f32 %v299, %v309
      %v327 = vmul.f32 %v300, %v309
      %v328 = vmul.f32 %v301, %v309
      %v329 = vmul.f32 %v302, %v309
      %v330 = vmul.f32 %v303, %v309
      %v331 = vld [vmem:[%s4] sm:$0x1]
      %v333 = vlaneseq
      %v334 = vshrl.u32 %v333, 7
      %v335 = vsub.s32 0, %v334
      %v336 = vrot.slane %v331, %v335
      %v338 = vadd.f32 %v311, %v336
      %v339 = vadd.f32 %v312, %v336
      %v340 = vadd.f32 %v313, %v336
      %v341 = vadd.f32 %v314, %v336
      %v342 = vadd.f32 %v315, %v336
      %v343 = vadd.f32 %v316, %v336
      %v344 = vadd.f32 %v317, %v336
      %v345 = vadd.f32 %v318, %v336
      %v346 = vadd.f32 %v319, %v336
      %v347 = vadd.f32 %v320, %v336
      %v348 = vadd.f32 %v321, %v336
      %v349 = vadd.f32 %v322, %v336
      %v350 = vadd.f32 %v323, %v336
      %v351 = vadd.f32 %v324, %v336
      %v352 = vadd.f32 %v325, %v336
      %v353 = vadd.f32 %v326, %v336
      %v354 = vadd.f32 %v327, %v336
      %v355 = vadd.f32 %v328, %v336
      %v356 = vadd.f32 %v329, %v336
      %v357 = vadd.f32 %v330, %v336
      %v358 = vmax.f32 %v338, 0.0
      %v359 = vmax.f32 %v339, 0.0
      %v360 = vmax.f32 %v340, 0.0
      %v361 = vmax.f32 %v341, 0.0
      %v362 = vmax.f32 %v342, 0.0
      %v363 = vmax.f32 %v343, 0.0
      %v364 = vmax.f32 %v344, 0.0
      %v365 = vmax.f32 %v345, 0.0
      %v366 = vmax.f32 %v346, 0.0
      %v367 = vmax.f32 %v347, 0.0
      %v368 = vmax.f32 %v348, 0.0
      %v369 = vmax.f32 %v349, 0.0
      %v370 = vmax.f32 %v350, 0.0
      %v371 = vmax.f32 %v351, 0.0
      %v372 = vmax.f32 %v352, 0.0
      %v373 = vmax.f32 %v353, 0.0
      %v374 = vmax.f32 %v354, 0.0
      %v375 = vmax.f32 %v355, 0.0
      %v376 = vmax.f32 %v356, 0.0
      %v377 = vmax.f32 %v357, 0.0
      %v378 = vld [vmem:[%s1] sm:$0xff]
      %v379 = vld [vmem:[%s1 + $0x8] sm:$0xff]
      %v380 = vld [vmem:[%s1 + $0x10] sm:$0xff]
      %v381 = vld [vmem:[%s1 + $0x18] sm:$0xff]
      %v382 = vld [vmem:[%s1 + $0x20] sm:$0xff]
      %v383 = vld [vmem:[%s1 + $0x28] sm:$0xff]
      %v384 = vld [vmem:[%s1 + $0x30] sm:$0xff]
      %v385 = vld [vmem:[%s1 + $0x38] sm:$0xff]
      %v386 = vld [vmem:[%s1 + $0x40] sm:$0xff]
      %v387 = vld [vmem:[%s1 + $0x48] sm:$0xff]
      %v388 = vld [vmem:[%s1 + $0x50] sm:$0xff]
      %v389 = vld [vmem:[%s1 + $0x58] sm:$0xff]
      %v390 = vld [vmem:[%s1 + $0x60] sm:$0xff]
      %v391 = vld [vmem:[%s1 + $0x68] sm:$0xff]
      %v392 = vld [vmem:[%s1 + $0x70] sm:$0xff]
      %v393 = vld [vmem:[%s1 + $0x78] sm:$0xff]
      %v394 = vld [vmem:[%s1 + $0x80] sm:$0xff]
      %v395 = vld [vmem:[%s1 + $0x88] sm:$0xff]
      %v396 = vld [vmem:[%s1 + $0x90] sm:$0xff]
      %v397 = vld [vmem:[%s1 + $0x98] sm:$0xff]
      %399 = vset.pattern.permute.xlu0 0
      %400 = vperm.xlu0 %399, %v378
      %v401 = vpop.permute.xlu0 %400
      %404 = vset.pattern.permute.xlu0 0
      %405 = vperm.xlu0 %404, %v379
      %v406 = vpop.permute.xlu0 %405
      %409 = vset.pattern.permute.xlu0 0
      %410 = vperm.xlu0 %409, %v380
      %v411 = vpop.permute.xlu0 %410
      %414 = vset.pattern.permute.xlu0 0
      %415 = vperm.xlu0 %414, %v381
      %v416 = vpop.permute.xlu0 %415
      %419 = vset.pattern.permute.xlu0 0
      %420 = vperm.xlu0 %419, %v382
      %v421 = vpop.permute.xlu0 %420
      %424 = vset.pattern.permute.xlu0 0
      %425 = vperm.xlu0 %424, %v383
      %v426 = vpop.permute.xlu0 %425
      %429 = vset.pattern.permute.xlu0 0
      %430 = vperm.xlu0 %429, %v384
      %v431 = vpop.permute.xlu0 %430
      %434 = vset.pattern.permute.xlu0 0
      %435 = vperm.xlu0 %434, %v385
      %v436 = vpop.permute.xlu0 %435
      %439 = vset.pattern.permute.xlu0 0
      %440 = vperm.xlu0 %439, %v386
      %v441 = vpop.permute.xlu0 %440
      %444 = vset.pattern.permute.xlu0 0
      %445 = vperm.xlu0 %444, %v387
      %v446 = vpop.permute.xlu0 %445
      %449 = vset.pattern.permute.xlu0 0
      %450 = vperm.xlu0 %449, %v388
      %v451 = vpop.permute.xlu0 %450
      %454 = vset.pattern.permute.xlu0 0
      %455 = vperm.xlu0 %454, %v389
      %v456 = vpop.permute.xlu0 %455
      %459 = vset.pattern.permute.xlu0 0
      %460 = vperm.xlu0 %459, %v390
      %v461 = vpop.permute.xlu0 %460
      %464 = vset.pattern.permute.xlu0 0
      %465 = vperm.xlu0 %464, %v391
      %v466 = vpop.permute.xlu0 %465
      %469 = vset.pattern.permute.xlu0 0
      %470 = vperm.xlu0 %469, %v392
      %v471 = vpop.permute.xlu0 %470
      %474 = vset.pattern.permute.xlu0 0
      %475 = vperm.xlu0 %474, %v393
      %v476 = vpop.permute.xlu0 %475
      %479 = vset.pattern.permute.xlu0 0
      %480 = vperm.xlu0 %479, %v394
      %v481 = vpop.permute.xlu0 %480
      %484 = vset.pattern.permute.xlu0 0
      %485 = vperm.xlu0 %484, %v395
      %v486 = vpop.permute.xlu0 %485
      %489 = vset.pattern.permute.xlu0 0
      %490 = vperm.xlu0 %489, %v396
      %v491 = vpop.permute.xlu0 %490
      %494 = vset.pattern.permute.xlu0 0
      %495 = vperm.xlu0 %494, %v397
      %v496 = vpop.permute.xlu0 %495
      %v498 = vmul.f32 %v358, %v401
      %v499 = vmul.f32 %v359, %v406
      %v500 = vmul.f32 %v360, %v411
      %v501 = vmul.f32 %v361, %v416
      %v502 = vmul.f32 %v362, %v421
      %v503 = vmul.f32 %v363, %v426
      %v504 = vmul.f32 %v364, %v431
      %v505 = vmul.f32 %v365, %v436
      %v506 = vmul.f32 %v366, %v441
      %v507 = vmul.f32 %v367, %v446
      %v508 = vmul.f32 %v368, %v451
      %v509 = vmul.f32 %v369, %v456
      %v510 = vmul.f32 %v370, %v461
      %v511 = vmul.f32 %v371, %v466
      %v512 = vmul.f32 %v372, %v471
      %v513 = vmul.f32 %v373, %v476
      %v514 = vmul.f32 %v374, %v481
      %v515 = vmul.f32 %v375, %v486
      %v516 = vmul.f32 %v376, %v491
      %v517 = vmul.f32 %v377, %v496
      %v518 = vpack.c.bf16 %v499, %v498
      %v519 = vpack.c.bf16 %v501, %v500
      %v520 = vpack.c.bf16 %v503, %v502
      %v521 = vpack.c.bf16 %v505, %v504
      %v522 = vpack.c.bf16 %v507, %v506
      %v523 = vpack.c.bf16 %v509, %v508
      %v524 = vpack.c.bf16 %v511, %v510
      %v525 = vpack.c.bf16 %v513, %v512
      %v526 = vpack.c.bf16 %v515, %v514
      %v527 = vpack.c.bf16 %v517, %v516
      %528 = vst [vmem:[#allocation2] sm:$0xff] %v518
      %529 = vst [vmem:[#allocation2 + $0x8] sm:$0xff] %v519
      %530 = vst [vmem:[#allocation2 + $0x10] sm:$0xff] %v520
      %531 = vst [vmem:[#allocation2 + $0x18] sm:$0xff] %v521
      %532 = vst [vmem:[#allocation2 + $0x20] sm:$0xff] %v522
      %533 = vst [vmem:[#allocation2 + $0x28] sm:$0xff] %v523
      %534 = vst [vmem:[#allocation2 + $0x30] sm:$0xff] %v524
      %535 = vst [vmem:[#allocation2 + $0x38] sm:$0xff] %v525
      %536 = vst [vmem:[#allocation2 + $0x40] sm:$0xff] %v526
      %537 = vst [vmem:[#allocation2 + $0x48] sm:$0xff] %v527
      %v538 = vld [vmem:[#allocation2] sm:$0xff]
      %v539 = vld [vmem:[#allocation2 + $0x8] sm:$0xff]
      %v540 = vld [vmem:[#allocation2 + $0x10] sm:$0xff]
      %v541 = vld [vmem:[#allocation2 + $0x18] sm:$0xff]
      %v542 = vld [vmem:[#allocation2 + $0x20] sm:$0xff]
      %v543 = vld [vmem:[#allocation2 + $0x28] sm:$0xff]
      %v544 = vld [vmem:[#allocation2 + $0x30] sm:$0xff]
      %v545 = vld [vmem:[#allocation2 + $0x38] sm:$0xf]
      %v546 = vld [vmem:[%s2] sm:$0xf]
      %v547 = vld [vmem:[%s2 + $0x4] sm:$0xf]
      %v548 = vld [vmem:[%s2 + $0x8] sm:$0xf]
      %v549 = vld [vmem:[%s2 + $0xc] sm:$0xf]
      %v550 = vld [vmem:[%s2 + $0x10] sm:$0xf]
      %v551 = vld [vmem:[%s2 + $0x14] sm:$0xf]
      %v552 = vld [vmem:[%s2 + $0x18] sm:$0xf]
      %v553 = vld [vmem:[%s2 + $0x1c] sm:$0xf]
      %v554 = vld [vmem:[%s2 + $0x20] sm:$0xf]
      %v555 = vld [vmem:[%s2 + $0x24] sm:$0xf]
      %v556 = vld [vmem:[%s2 + $0x28] sm:$0xf]
      %v557 = vld [vmem:[%s2 + $0x2c] sm:$0xf]
      %v558 = vld [vmem:[%s2 + $0x30] sm:$0xf]
      %v559 = vld [vmem:[%s2 + $0x34] sm:$0xf]
      %v560 = vld [vmem:[%s2 + $0x38] sm:$0xf]
      %v561 = vld [vmem:[%s2 + $0x3c] sm:$0xf]
      %v562 = vld [vmem:[#allocation2 + $0x38] sm:$0x1f]
      %s563 = scalar_lea.vmem %s2, 64
      %v564 = vld [vmem:[%s563] sm:$0xf]
      %v565 = vld [vmem:[%s563 + $0x4] sm:$0xf]
      %v566 = vld [vmem:[%s563 + $0x8] sm:$0xf]
      %v567 = vld [vmem:[%s563 + $0xc] sm:$0xf]
      %v568 = vld [vmem:[%s563 + $0x10] sm:$0xf]
      %v569 = vld [vmem:[%s563 + $0x14] sm:$0xf]
      %v570 = vld [vmem:[%s563 + $0x18] sm:$0xf]
      %v571 = vld [vmem:[%s563 + $0x1c] sm:$0xf]
      %v572 = vld [vmem:[%s563 + $0x20] sm:$0xf]
      %v573 = vld [vmem:[%s563 + $0x24] sm:$0xf]
      %v574 = vld [vmem:[%s563 + $0x28] sm:$0xf]
      %v575 = vld [vmem:[%s563 + $0x2c] sm:$0xf]
      %v576 = vld [vmem:[%s563 + $0x30] sm:$0xf]
      %v577 = vld [vmem:[%s563 + $0x34] sm:$0xf]
      %v578 = vld [vmem:[%s563 + $0x38] sm:$0xf]
      %v579 = vld [vmem:[%s563 + $0x3c] sm:$0xf]
      %vm580 = vsmask.f32 7424
      %v582 = vshrl.u32 %v538, 16
      %v584 = vshll.u32 %v538, 16
      %v586 = vrot.slane %v584, 1
      %v587 = vor.u32 %v582, %v586
      %v589 = vshll.u32 %v539, 16
      %v591 = vrot.slane %v589, 1
      %v592 = vsel %vm580, %v587, %v591
      %v593 = vshrl.u32 %v539, 16
      %v595 = vor.u32 %v593, %v591
      %v597 = vshll.u32 %v540, 16
      %v599 = vrot.slane %v597, 1
      %v600 = vsel %vm580, %v595, %v599
      %v601 = vshrl.u32 %v540, 16
      %v603 = vor.u32 %v601, %v599
      %v605 = vshll.u32 %v541, 16
      %v607 = vrot.slane %v605, 1
      %v608 = vsel %vm580, %v603, %v607
      %v609 = vshrl.u32 %v541, 16
      %v611 = vor.u32 %v609, %v607
      %v613 = vshll.u32 %v542, 16
      %v615 = vrot.slane %v613, 1
      %v616 = vsel %vm580, %v611, %v615
      %v617 = vshrl.u32 %v542, 16
      %v619 = vor.u32 %v617, %v615
      %v621 = vshll.u32 %v543, 16
      %v623 = vrot.slane %v621, 1
      %v624 = vsel %vm580, %v619, %v623
      %v625 = vshrl.u32 %v543, 16
      %v627 = vor.u32 %v625, %v623
      %v629 = vshll.u32 %v544, 16
      %v631 = vrot.slane %v629, 1
      %v632 = vsel %vm580, %v627, %v631
      %v633 = vshrl.u32 %v544, 16
      %v635 = vor.u32 %v633, %v631
      %v637 = vshll.u32 %v562, 16
      %v639 = vrot.slane %v637, 1
      %v640 = vsel %vm580, %v635, %v639
      %v641 = vshrl.u32 %v562, 16
      %v643 = vor.u32 %v641, %v639
      %v668 = vunpack.c.l.b16 %v564
      %v669 = vunpack.c.l.b16 %v565
      %v670 = vunpack.c.l.b16 %v566
      %v671 = vunpack.c.l.b16 %v567
      %v672 = vunpack.c.l.b16 %v568
      %v673 = vunpack.c.l.b16 %v569
      %v674 = vunpack.c.l.b16 %v570
      %v675 = vunpack.c.l.b16 %v571
      %v676 = vunpack.c.l.b16 %v572
      %v677 = vunpack.c.l.b16 %v573
      %v678 = vunpack.c.l.b16 %v574
      %v679 = vunpack.c.l.b16 %v575
      %v680 = vunpack.c.l.b16 %v576
      %v681 = vunpack.c.l.b16 %v577
      %v682 = vunpack.c.l.b16 %v578
      %v683 = vunpack.c.l.b16 %v579
      %v684 = vpack.c.b16 %v669, %v668
      %v685 = vpack.c.b16 %v671, %v670
      %v686 = vpack.c.b16 %v673, %v672
      %v687 = vpack.c.b16 %v675, %v674
      %v688 = vpack.c.b16 %v677, %v676
      %v689 = vpack.c.b16 %v679, %v678
      %v690 = vpack.c.b16 %v681, %v680
      %v691 = vpack.c.b16 %v683, %v682
      %700 = vmatprep.subr.bf16.mxu0 0
      %701 = vmatpush1.bf16.msra.mxu0 %v684
      %702 = vmatprep.subr.bf16.mxu0 0
      %703 = vmatpush1.bf16.msra.mxu0 %v685
      %704 = vmatprep.subr.bf16.mxu0 0
      %705 = vmatpush1.bf16.msra.mxu0 %v686
      %706 = vmatprep.subr.bf16.mxu0 0
      %707 = vmatpush1.bf16.msra.mxu0 %v687
      %708 = vmatprep.subr.bf16.mxu0 0
      %709 = vmatpush1.bf16.msra.mxu0 %v688
      %710 = vmatprep.subr.bf16.mxu0 0
      %711 = vmatpush1.bf16.msra.mxu0 %v689
      %712 = vmatprep.subr.bf16.mxu0 0
      %713 = vmatpush1.bf16.msra.mxu0 %v690
      %714 = vmatprep.subr.bf16.mxu0 0
      %715 = vmatpush1.bf16.msra.mxu0 %v691
      %716 = vmatprep.subr.bf16.mxu0 0
      %717 = vmatpush1.bf16.msra.mxu0 0
      %718 = vmatprep.subr.bf16.mxu0 0
      %719 = vmatpush1.bf16.msra.mxu0 0
      %720 = vmatprep.subr.bf16.mxu0 0
      %721 = vmatpush1.bf16.msra.mxu0 0
      %722 = vmatprep.subr.bf16.mxu0 0
      %723 = vmatpush1.bf16.msra.mxu0 0
      %724 = vmatprep.subr.bf16.mxu0 0
      %725 = vmatpush1.bf16.msra.mxu0 0
      %726 = vmatprep.subr.bf16.mxu0 0
      %727 = vmatpush1.bf16.msra.mxu0 0
      %728 = vmatprep.subr.bf16.mxu0 0
      %729 = vmatpush1.bf16.msra.mxu0 0
      %730 = vmatprep.subr.bf16.mxu0 0
      %731 = vmatpush1.bf16.msra.mxu0 0
      %732 = vmatprep.mubr.bf16.mxu0 0
      %733 = vmatmul.mubr.bf16.gmra.mrb[0].mxu0 %v592
      %v734 = vpop.f32.mrb[0].mxu0
      %v735 = vadd.f32 0.0, %v734
      %v736 = vpop.f32.mrb[0].mxu0
      %v737 = vpop.f32.mrb[0].mxu0
      %v738 = vadd.f32 0.0, %v737
      %v739 = vpop.f32.mrb[0].mxu0
      %740 = vmatprep.mubr.bf16.mxu0 0
      %741 = vmatmul.mubr.bf16.gmra.mrb[0].mxu0 %v600
      %v742 = vpop.f32.mrb[0].mxu0
      %v743 = vadd.f32 0.0, %v742
      %v744 = vpop.f32.mrb[0].mxu0
      %v745 = vpop.f32.mrb[0].mxu0
      %v746 = vadd.f32 0.0, %v745
      %v747 = vpop.f32.mrb[0].mxu0
      %748 = vmatprep.mubr.bf16.mxu0 0
      %749 = vmatmul.mubr.bf16.gmra.mrb[0].mxu0 %v608
      %v750 = vpop.f32.mrb[0].mxu0
      %v751 = vadd.f32 0.0, %v750
      %v752 = vpop.f32.mrb[0].mxu0
      %v753 = vpop.f32.mrb[0].mxu0
      %v754 = vadd.f32 0.0, %v753
      %v755 = vpop.f32.mrb[0].mxu0
      %756 = vmatprep.mubr.bf16.mxu0 0
      %757 = vmatmul.mubr.bf16.gmra.mrb[0].mxu0 %v616
      %v758 = vpop.f32.mrb[0].mxu0
      %v759 = vadd.f32 0.0, %v758
      %v760 = vpop.f32.mrb[0].mxu0
      %v761 = vpop.f32.mrb[0].mxu0
      %v762 = vadd.f32 0.0, %v761
      %v763 = vpop.f32.mrb[0].mxu0
      %764 = vmatprep.mubr.bf16.mxu0 0
      %765 = vmatmul.mubr.bf16.gmra.mrb[0].mxu0 %v624
      %v766 = vpop.f32.mrb[0].mxu0
      %v767 = vadd.f32 0.0, %v766
      %v768 = vpop.f32.mrb[0].mxu0
      %v769 = vpop.f32.mrb[0].mxu0
      %v770 = vadd.f32 0.0, %v769
      %v771 = vpop.f32.mrb[0].mxu0
      %772 = vmatprep.mubr.bf16.mxu0 0
      %773 = vmatmul.mubr.bf16.gmra.mrb[0].mxu0 %v632
      %v774 = vpop.f32.mrb[0].mxu0
      %v775 = vadd.f32 0.0, %v774
      %v776 = vpop.f32.mrb[0].mxu0
      %v777 = vpop.f32.mrb[0].mxu0
      %v778 = vadd.f32 0.0, %v777
      %v779 = vpop.f32.mrb[0].mxu0
      %780 = vmatprep.mubr.bf16.mxu0 0
      %781 = vmatmul.mubr.bf16.gmra.mrb[0].mxu0 %v640
      %v782 = vpop.f32.mrb[0].mxu0
      %v783 = vadd.f32 0.0, %v782
      %v784 = vpop.f32.mrb[0].mxu0
      %v785 = vpop.f32.mrb[0].mxu0
      %v786 = vadd.f32 0.0, %v785
      %v787 = vpop.f32.mrb[0].mxu0
      %788 = vmatprep.mubr.bf16.mxu0 0
      %789 = vmatmul.mubr.bf16.gmra.mrb[0].mxu0 %v643
      %v790 = vpop.f32.mrb[0].mxu0
      %v791 = vadd.f32 0.0, %v790
      %v792 = vpop.f32.mrb[0].mxu0
      %v793 = vpop.f32.mrb[0].mxu0
      %v794 = vpop.f32.mrb[0].mxu0
      %795 = vdwg.mxu0
      %v812 = vunpack.c.l.b16 %v546
      %v813 = vunpack.c.l.b16 %v547
      %v814 = vunpack.c.l.b16 %v548
      %v815 = vunpack.c.l.b16 %v549
      %v816 = vunpack.c.l.b16 %v550
      %v817 = vunpack.c.l.b16 %v551
      %v818 = vunpack.c.l.b16 %v552
      %v819 = vunpack.c.l.b16 %v553
      %v820 = vunpack.c.l.b16 %v554
      %v821 = vunpack.c.l.b16 %v555
      %v822 = vunpack.c.l.b16 %v556
      %v823 = vunpack.c.l.b16 %v557
      %v824 = vunpack.c.l.b16 %v558
      %v825 = vunpack.c.l.b16 %v559
      %v826 = vunpack.c.l.b16 %v560
      %v827 = vunpack.c.l.b16 %v561
      %v828 = vpack.c.b16 %v813, %v812
      %v829 = vpack.c.b16 %v815, %v814
      %v830 = vpack.c.b16 %v817, %v816
      %v831 = vpack.c.b16 %v819, %v818
      %v832 = vpack.c.b16 %v821, %v820
      %v833 = vpack.c.b16 %v823, %v822
      %v834 = vpack.c.b16 %v825, %v824
      %v835 = vpack.c.b16 %v827, %v826
      %844 = vmatprep.subr.bf16.mxu0 0
      %845 = vmatpush1.bf16.msra.mxu0 %v828
      %846 = vmatprep.subr.bf16.mxu0 0
      %847 = vmatpush1.bf16.msra.mxu0 %v829
      %848 = vmatprep.subr.bf16.mxu0 0
      %849 = vmatpush1.bf16.msra.mxu0 %v830
      %850 = vmatprep.subr.bf16.mxu0 0
      %851 = vmatpush1.bf16.msra.mxu0 %v831
      %852 = vmatprep.subr.bf16.mxu0 0
      %853 = vmatpush1.bf16.msra.mxu0 %v832
      %854 = vmatprep.subr.bf16.mxu0 0
      %855 = vmatpush1.bf16.msra.mxu0 %v833
      %856 = vmatprep.subr.bf16.mxu0 0
      %857 = vmatpush1.bf16.msra.mxu0 %v834
      %858 = vmatprep.subr.bf16.mxu0 0
      %859 = vmatpush1.bf16.msra.mxu0 %v835
      %860 = vmatprep.subr.bf16.mxu0 0
      %861 = vmatpush1.bf16.msra.mxu0 0
      %862 = vmatprep.subr.bf16.mxu0 0
      %863 = vmatpush1.bf16.msra.mxu0 0
      %864 = vmatprep.subr.bf16.mxu0 0
      %865 = vmatpush1.bf16.msra.mxu0 0
      %866 = vmatprep.subr.bf16.mxu0 0
      %867 = vmatpush1.bf16.msra.mxu0 0
      %868 = vmatprep.subr.bf16.mxu0 0
      %869 = vmatpush1.bf16.msra.mxu0 0
      %870 = vmatprep.subr.bf16.mxu0 0
      %871 = vmatpush1.bf16.msra.mxu0 0
      %872 = vmatprep.subr.bf16.mxu0 0
      %873 = vmatpush1.bf16.msra.mxu0 0
      %874 = vmatprep.subr.bf16.mxu0 0
      %875 = vmatpush1.bf16.msra.mxu0 0
      %876 = vmatprep.mubr.bf16.mxu0 0
      %877 = vmatmul.mubr.bf16.gmra.mrb[0].mxu0 %v538
      %v878 = vpop.f32.mrb[0].mxu0
      %v879 = vadd.f32 %v735, %v878
      %v880 = vpop.f32.mrb[0].mxu0
      %v881 = vpop.f32.mrb[0].mxu0
      %v882 = vadd.f32 %v738, %v881
      %v883 = vpop.f32.mrb[0].mxu0
      %884 = vmatprep.mubr.bf16.mxu0 0
      %885 = vmatmul.mubr.bf16.gmra.mrb[0].mxu0 %v539
      %v886 = vpop.f32.mrb[0].mxu0
      %v887 = vadd.f32 %v743, %v886
      %v888 = vpop.f32.mrb[0].mxu0
      %v889 = vpop.f32.mrb[0].mxu0
      %v890 = vadd.f32 %v746, %v889
      %v891 = vpop.f32.mrb[0].mxu0
      %892 = vmatprep.mubr.bf16.mxu0 0
      %893 = vmatmul.mubr.bf16.gmra.mrb[0].mxu0 %v540
      %v894 = vpop.f32.mrb[0].mxu0
      %v895 = vadd.f32 %v751, %v894
      %v896 = vpop.f32.mrb[0].mxu0
      %v897 = vpop.f32.mrb[0].mxu0
      %v898 = vadd.f32 %v754, %v897
      %v899 = vpop.f32.mrb[0].mxu0
      %900 = vmatprep.mubr.bf16.mxu0 0
      %901 = vmatmul.mubr.bf16.gmra.mrb[0].mxu0 %v541
      %v902 = vpop.f32.mrb[0].mxu0
      %v903 = vadd.f32 %v759, %v902
      %v904 = vpop.f32.mrb[0].mxu0
      %v905 = vpop.f32.mrb[0].mxu0
      %v906 = vadd.f32 %v762, %v905
      %v907 = vpop.f32.mrb[0].mxu0
      %908 = vmatprep.mubr.bf16.mxu0 0
      %909 = vmatmul.mubr.bf16.gmra.mrb[0].mxu0 %v542
      %v910 = vpop.f32.mrb[0].mxu0
      %v911 = vadd.f32 %v767, %v910
      %v912 = vpop.f32.mrb[0].mxu0
      %v913 = vpop.f32.mrb[0].mxu0
      %v914 = vadd.f32 %v770, %v913
      %v915 = vpop.f32.mrb[0].mxu0
      %916 = vmatprep.mubr.bf16.mxu0 0
      %917 = vmatmul.mubr.bf16.gmra.mrb[0].mxu0 %v543
      %v918 = vpop.f32.mrb[0].mxu0
      %v919 = vadd.f32 %v775, %v918
      %v920 = vpop.f32.mrb[0].mxu0
      %v921 = vpop.f32.mrb[0].mxu0
      %v922 = vadd.f32 %v778, %v921
      %v923 = vpop.f32.mrb[0].mxu0
      %924 = vmatprep.mubr.bf16.mxu0 0
      %925 = vmatmul.mubr.bf16.gmra.mrb[0].mxu0 %v544
      %v926 = vpop.f32.mrb[0].mxu0
      %v927 = vadd.f32 %v783, %v926
      %v928 = vpop.f32.mrb[0].mxu0
      %v929 = vpop.f32.mrb[0].mxu0
      %v930 = vadd.f32 %v786, %v929
      %v931 = vpop.f32.mrb[0].mxu0
      %932 = vmatprep.mubr.bf16.mxu0 0
      %933 = vmatmul.mubr.bf16.gmra.mrb[0].mxu0 %v545
      %v934 = vpop.f32.mrb[0].mxu0
      %v935 = vadd.f32 %v791, %v934
      %v936 = vpop.f32.mrb[0].mxu0
      %v937 = vpop.f32.mrb[0].mxu0
      %v938 = vpop.f32.mrb[0].mxu0
      %939 = vdwg.mxu0
      %v940 = vld [vmem:[#allocation2] sm:$0xfe]
      %s941 = scalar_lea.vmem %s2, 128
      %v942 = vld [vmem:[%s941] sm:$0xf]
      %v943 = vld [vmem:[%s941 + $0x4] sm:$0xf]
      %v944 = vld [vmem:[%s941 + $0x8] sm:$0xf]
      %v945 = vld [vmem:[%s941 + $0xc] sm:$0xf]
      %v946 = vld [vmem:[%s941 + $0x10] sm:$0xf]
      %v947 = vld [vmem:[%s941 + $0x14] sm:$0xf]
      %v948 = vld [vmem:[%s941 + $0x18] sm:$0xf]
      %v949 = vld [vmem:[%s941 + $0x1c] sm:$0xf]
      %v950 = vld [vmem:[%s941 + $0x20] sm:$0xf]
      %v951 = vld [vmem:[%s941 + $0x24] sm:$0xf]
      %v952 = vld [vmem:[%s941 + $0x28] sm:$0xf]
      %v953 = vld [vmem:[%s941 + $0x2c] sm:$0xf]
      %v954 = vld [vmem:[%s941 + $0x30] sm:$0xf]
      %v955 = vld [vmem:[%s941 + $0x34] sm:$0xf]
      %v956 = vld [vmem:[%s941 + $0x38] sm:$0xf]
      %v957 = vld [vmem:[%s941 + $0x3c] sm:$0xf]
      %vm966 = vcmask 1046528
      %v967 = vrot.slane %v940, 1
      %v968 = vrot.slane %v539, 1
      %v969 = vsel %vm966, %v967, %v968
      %v970 = vrot.slane %v540, 1
      %v971 = vsel %vm966, %v968, %v970
      %v972 = vrot.slane %v541, 1
      %v973 = vsel %vm966, %v970, %v972
      %v974 = vrot.slane %v542, 1
      %v975 = vsel %vm966, %v972, %v974
      %v976 = vrot.slane %v543, 1
      %v977 = vsel %vm966, %v974, %v976
      %v978 = vrot.slane %v544, 1
      %v979 = vsel %vm966, %v976, %v978
      %v980 = vrot.slane %v562, 1
      %v981 = vsel %vm966, %v978, %v980
      %v1006 = vunpack.c.l.b16 %v942
      %v1007 = vunpack.c.l.b16 %v943
      %v1008 = vunpack.c.l.b16 %v944
      %v1009 = vunpack.c.l.b16 %v945
      %v1010 = vunpack.c.l.b16 %v946
      %v1011 = vunpack.c.l.b16 %v947
      %v1012 = vunpack.c.l.b16 %v948
      %v1013 = vunpack.c.l.b16 %v949
      %v1014 = vunpack.c.l.b16 %v950
      %v1015 = vunpack.c.l.b16 %v951
      %v1016 = vunpack.c.l.b16 %v952
      %v1017 = vunpack.c.l.b16 %v953
      %v1018 = vunpack.c.l.b16 %v954
      %v1019 = vunpack.c.l.b16 %v955
      %v1020 = vunpack.c.l.b16 %v956
      %v1021 = vunpack.c.l.b16 %v957
      %v1022 = vpack.c.b16 %v1007, %v1006
      %v1023 = vpack.c.b16 %v1009, %v1008
      %v1024 = vpack.c.b16 %v1011, %v1010
      %v1025 = vpack.c.b16 %v1013, %v1012
      %v1026 = vpack.c.b16 %v1015, %v1014
      %v1027 = vpack.c.b16 %v1017, %v1016
      %v1028 = vpack.c.b16 %v1019, %v1018
      %v1029 = vpack.c.b16 %v1021, %v1020
      %1038 = vmatprep.subr.bf16.mxu0 0
      %1039 = vmatpush1.bf16.msra.mxu0 %v1022
      %1040 = vmatprep.subr.bf16.mxu0 0
      %1041 = vmatpush1.bf16.msra.mxu0 %v1023
      %1042 = vmatprep.subr.bf16.mxu0 0
      %1043 = vmatpush1.bf16.msra.mxu0 %v1024
      %1044 = vmatprep.subr.bf16.mxu0 0
      %1045 = vmatpush1.bf16.msra.mxu0 %v1025
      %1046 = vmatprep.subr.bf16.mxu0 0
      %1047 = vmatpush1.bf16.msra.mxu0 %v1026
      %1048 = vmatprep.subr.bf16.mxu0 0
      %1049 = vmatpush1.bf16.msra.mxu0 %v1027
      %1050 = vmatprep.subr.bf16.mxu0 0
      %1051 = vmatpush1.bf16.msra.mxu0 %v1028
      %1052 = vmatprep.subr.bf16.mxu0 0
      %1053 = vmatpush1.bf16.msra.mxu0 %v1029
      %1054 = vmatprep.subr.bf16.mxu0 0
      %1055 = vmatpush1.bf16.msra.mxu0 0
      %1056 = vmatprep.subr.bf16.mxu0 0
      %1057 = vmatpush1.bf16.msra.mxu0 0
      %1058 = vmatprep.subr.bf16.mxu0 0
      %1059 = vmatpush1.bf16.msra.mxu0 0
      %1060 = vmatprep.subr.bf16.mxu0 0
      %1061 = vmatpush1.bf16.msra.mxu0 0
      %1062 = vmatprep.subr.bf16.mxu0 0
      %1063 = vmatpush1.bf16.msra.mxu0 0
      %1064 = vmatprep.subr.bf16.mxu0 0
      %1065 = vmatpush1.bf16.msra.mxu0 0
      %1066 = vmatprep.subr.bf16.mxu0 0
      %1067 = vmatpush1.bf16.msra.mxu0 0
      %1068 = vmatprep.subr.bf16.mxu0 0
      %1069 = vmatpush1.bf16.msra.mxu0 0
      %1070 = vmatprep.mubr.bf16.mxu0 0
      %1071 = vmatmul.mubr.bf16.gmra.mrb[0].mxu0 %v969
      %v1072 = vpop.f32.mrb[0].mxu0
      %v1073 = vadd.f32 0.0, %v1072
      %v1074 = vpop.f32.mrb[0].mxu0
      %v1075 = vpop.f32.mrb[0].mxu0
      %v1076 = vadd.f32 0.0, %v1075
      %v1077 = vpop.f32.mrb[0].mxu0
      %1078 = vmatprep.mubr.bf16.mxu0 0
      %1079 = vmatmul.mubr.bf16.gmra.mrb[0].mxu0 %v971
      %v1080 = vpop.f32.mrb[0].mxu0
      %v1081 = vadd.f32 0.0, %v1080
      %v1082 = vpop.f32.mrb[0].mxu0
      %v1083 = vpop.f32.mrb[0].mxu0
      %v1084 = vadd.f32 0.0, %v1083
      %v1085 = vpop.f32.mrb[0].mxu0
      %1086 = vmatprep.mubr.bf16.mxu0 0
      %1087 = vmatmul.mubr.bf16.gmra.mrb[0].mxu0 %v973
      %v1088 = vpop.f32.mrb[0].mxu0
      %v1089 = vadd.f32 0.0, %v1088
      %v1090 = vpop.f32.mrb[0].mxu0
      %v1091 = vpop.f32.mrb[0].mxu0
      %v1092 = vadd.f32 0.0, %v1091
      %v1093 = vpop.f32.mrb[0].mxu0
      %1094 = vmatprep.mubr.bf16.mxu0 0
      %1095 = vmatmul.mubr.bf16.gmra.mrb[0].mxu0 %v975
      %v1096 = vpop.f32.mrb[0].mxu0
      %v1097 = vadd.f32 0.0, %v1096
      %v1098 = vpop.f32.mrb[0].mxu0
      %v1099 = vpop.f32.mrb[0].mxu0
      %v1100 = vadd.f32 0.0, %v1099
      %v1101 = vpop.f32.mrb[0].mxu0
      %1102 = vmatprep.mubr.bf16.mxu0 0
      %1103 = vmatmul.mubr.bf16.gmra.mrb[0].mxu0 %v977
      %v1104 = vpop.f32.mrb[0].mxu0
      %v1105 = vadd.f32 0.0, %v1104
      %v1106 = vpop.f32.mrb[0].mxu0
      %v1107 = vpop.f32.mrb[0].mxu0
      %v1108 = vadd.f32 0.0, %v1107
      %v1109 = vpop.f32.mrb[0].mxu0
      %1110 = vmatprep.mubr.bf16.mxu0 0
      %1111 = vmatmul.mubr.bf16.gmra.mrb[0].mxu0 %v979
      %v1112 = vpop.f32.mrb[0].mxu0
      %v1113 = vadd.f32 0.0, %v1112
      %v1114 = vpop.f32.mrb[0].mxu0
      %v1115 = vpop.f32.mrb[0].mxu0
      %v1116 = vadd.f32 0.0, %v1115
      %v1117 = vpop.f32.mrb[0].mxu0
      %1118 = vmatprep.mubr.bf16.mxu0 0
      %1119 = vmatmul.mubr.bf16.gmra.mrb[0].mxu0 %v981
      %v1120 = vpop.f32.mrb[0].mxu0
      %v1121 = vadd.f32 0.0, %v1120
      %v1122 = vpop.f32.mrb[0].mxu0
      %v1123 = vpop.f32.mrb[0].mxu0
      %v1124 = vadd.f32 0.0, %v1123
      %v1125 = vpop.f32.mrb[0].mxu0
      %1126 = vmatprep.mubr.bf16.mxu0 0
      %1127 = vmatmul.mubr.bf16.gmra.mrb[0].mxu0 %v980
      %v1128 = vpop.f32.mrb[0].mxu0
      %v1129 = vadd.f32 0.0, %v1128
      %v1130 = vpop.f32.mrb[0].mxu0
      %v1131 = vpop.f32.mrb[0].mxu0
      %v1132 = vpop.f32.mrb[0].mxu0
      %1133 = vdwg.mxu0
      %v1134 = vadd.f32 %v879, %v1073
      %v1135 = vadd.f32 %v882, %v1076
      %v1136 = vadd.f32 %v887, %v1081
      %v1137 = vadd.f32 %v890, %v1084
      %v1138 = vadd.f32 %v895, %v1089
      %v1139 = vadd.f32 %v898, %v1092
      %v1140 = vadd.f32 %v903, %v1097
      %v1141 = vadd.f32 %v906, %v1100
      %v1142 = vadd.f32 %v911, %v1105
      %v1143 = vadd.f32 %v914, %v1108
      %v1144 = vadd.f32 %v919, %v1113
      %v1145 = vadd.f32 %v922, %v1116
      %v1146 = vadd.f32 %v927, %v1121
      %v1147 = vadd.f32 %v930, %v1124
      %v1148 = vadd.f32 %v935, %v1129
      %v1149 = vld [vmem:[#allocation2 + $0x8] sm:$0xff]
      %v1150 = vld [vmem:[#allocation2 + $0x10] sm:$0xff]
      %v1151 = vld [vmem:[#allocation2 + $0x18] sm:$0xff]
      %v1152 = vld [vmem:[#allocation2 + $0x20] sm:$0xff]
      %v1153 = vld [vmem:[#allocation2 + $0x28] sm:$0xff]
      %v1154 = vld [vmem:[#allocation2 + $0x30] sm:$0xff]
      %v1155 = vld [vmem:[#allocation2 + $0x38] sm:$0xff]
      %v1156 = vld [vmem:[#allocation2 + $0x40] sm:$0xf]
      %s1157 = scalar_lea.vmem %s2, 192
      %v1158 = vld [vmem:[%s1157] sm:$0xf]
      %v1159 = vld [vmem:[%s1157 + $0x4] sm:$0xf]
      %v1160 = vld [vmem:[%s1157 + $0x8] sm:$0xf]
      %v1161 = vld [vmem:[%s1157 + $0xc] sm:$0xf]
      %v1162 = vld [vmem:[%s1157 + $0x10] sm:$0xf]
      %v1163 = vld [vmem:[%s1157 + $0x14] sm:$0xf]
      %v1164 = vld [vmem:[%s1157 + $0x18] sm:$0xf]
      %v1165 = vld [vmem:[%s1157 + $0x1c] sm:$0xf]
      %v1166 = vld [vmem:[%s1157 + $0x20] sm:$0xf]
      %v1167 = vld [vmem:[%s1157 + $0x24] sm:$0xf]
      %v1168 = vld [vmem:[%s1157 + $0x28] sm:$0xf]
      %v1169 = vld [vmem:[%s1157 + $0x2c] sm:$0xf]
      %v1170 = vld [vmem:[%s1157 + $0x30] sm:$0xf]
      %v1171 = vld [vmem:[%s1157 + $0x34] sm:$0xf]
      %v1172 = vld [vmem:[%s1157 + $0x38] sm:$0xf]
      %v1173 = vld [vmem:[%s1157 + $0x3c] sm:$0xf]
      %v1190 = vunpack.c.l.b16 %v1158
      %v1191 = vunpack.c.l.b16 %v1159
      %v1192 = vunpack.c.l.b16 %v1160
      %v1193 = vunpack.c.l.b16 %v1161
      %v1194 = vunpack.c.l.b16 %v1162
      %v1195 = vunpack.c.l.b16 %v1163
      %v1196 = vunpack.c.l.b16 %v1164
      %v1197 = vunpack.c.l.b16 %v1165
      %v1198 = vunpack.c.l.b16 %v1166
      %v1199 = vunpack.c.l.b16 %v1167
      %v1200 = vunpack.c.l.b16 %v1168
      %v1201 = vunpack.c.l.b16 %v1169
      %v1202 = vunpack.c.l.b16 %v1170
      %v1203 = vunpack.c.l.b16 %v1171
      %v1204 = vunpack.c.l.b16 %v1172
      %v1205 = vunpack.c.l.b16 %v1173
      %v1206 = vpack.c.b16 %v1191, %v1190
      %v1207 = vpack.c.b16 %v1193, %v1192
      %v1208 = vpack.c.b16 %v1195, %v1194
      %v1209 = vpack.c.b16 %v1197, %v1196
      %v1210 = vpack.c.b16 %v1199, %v1198
      %v1211 = vpack.c.b16 %v1201, %v1200
      %v1212 = vpack.c.b16 %v1203, %v1202
      %v1213 = vpack.c.b16 %v1205, %v1204
      %1222 = vmatprep.subr.bf16.mxu0 0
      %1223 = vmatpush1.bf16.msra.mxu0 %v1206
      %1224 = vmatprep.subr.bf16.mxu0 0
      %1225 = vmatpush1.bf16.msra.mxu0 %v1207
      %1226 = vmatprep.subr.bf16.mxu0 0
      %1227 = vmatpush1.bf16.msra.mxu0 %v1208
      %1228 = vmatprep.subr.bf16.mxu0 0
      %1229 = vmatpush1.bf16.msra.mxu0 %v1209
      %1230 = vmatprep.subr.bf16.mxu0 0
      %1231 = vmatpush1.bf16.msra.mxu0 %v1210
      %1232 = vmatprep.subr.bf16.mxu0 0
      %1233 = vmatpush1.bf16.msra.mxu0 %v1211
      %1234 = vmatprep.subr.bf16.mxu0 0
      %1235 = vmatpush1.bf16.msra.mxu0 %v1212
      %1236 = vmatprep.subr.bf16.mxu0 0
      %1237 = vmatpush1.bf16.msra.mxu0 %v1213
      %1238 = vmatprep.subr.bf16.mxu0 0
      %1239 = vmatpush1.bf16.msra.mxu0 0
      %1240 = vmatprep.subr.bf16.mxu0 0
      %1241 = vmatpush1.bf16.msra.mxu0 0
      %1242 = vmatprep.subr.bf16.mxu0 0
      %1243 = vmatpush1.bf16.msra.mxu0 0
      %1244 = vmatprep.subr.bf16.mxu0 0
      %1245 = vmatpush1.bf16.msra.mxu0 0
      %1246 = vmatprep.subr.bf16.mxu0 0
      %1247 = vmatpush1.bf16.msra.mxu0 0
      %1248 = vmatprep.subr.bf16.mxu0 0
      %1249 = vmatpush1.bf16.msra.mxu0 0
      %1250 = vmatprep.subr.bf16.mxu0 0
      %1251 = vmatpush1.bf16.msra.mxu0 0
      %1252 = vmatprep.subr.bf16.mxu0 0
      %1253 = vmatpush1.bf16.msra.mxu0 0
      %1254 = vmatprep.mubr.bf16.mxu0 0
      %1255 = vmatmul.mubr.bf16.gmra.mrb[0].mxu0 %v1149
      %v1256 = vpop.f32.mrb[0].mxu0
      %v1257 = vadd.f32 0.0, %v1256
      %v1258 = vpop.f32.mrb[0].mxu0
      %v1259 = vpop.f32.mrb[0].mxu0
      %v1260 = vadd.f32 0.0, %v1259
      %v1261 = vpop.f32.mrb[0].mxu0
      %1262 = vmatprep.mubr.bf16.mxu0 0
      %1263 = vmatmul.mubr.bf16.gmra.mrb[0].mxu0 %v1150
      %v1264 = vpop.f32.mrb[0].mxu0
      %v1265 = vadd.f32 0.0, %v1264
      %v1266 = vpop.f32.mrb[0].mxu0
      %v1267 = vpop.f32.mrb[0].mxu0
      %v1268 = vadd.f32 0.0, %v1267
      %v1269 = vpop.f32.mrb[0].mxu0
      %1270 = vmatprep.mubr.bf16.mxu0 0
      %1271 = vmatmul.mubr.bf16.gmra.mrb[0].mxu0 %v1151
      %v1272 = vpop.f32.mrb[0].mxu0
      %v1273 = vadd.f32 0.0, %v1272
      %v1274 = vpop.f32.mrb[0].mxu0
      %v1275 = vpop.f32.mrb[0].mxu0
      %v1276 = vadd.f32 0.0, %v1275
      %v1277 = vpop.f32.mrb[0].mxu0
      %1278 = vmatprep.mubr.bf16.mxu0 0
      %1279 = vmatmul.mubr.bf16.gmra.mrb[0].mxu0 %v1152
      %v1280 = vpop.f32.mrb[0].mxu0
      %v1281 = vadd.f32 0.0, %v1280
      %v1282 = vpop.f32.mrb[0].mxu0
      %v1283 = vpop.f32.mrb[0].mxu0
      %v1284 = vadd.f32 0.0, %v1283
      %v1285 = vpop.f32.mrb[0].mxu0
      %1286 = vmatprep.mubr.bf16.mxu0 0
      %1287 = vmatmul.mubr.bf16.gmra.mrb[0].mxu0 %v1153
      %v1288 = vpop.f32.mrb[0].mxu0
      %v1289 = vadd.f32 0.0, %v1288
      %v1290 = vpop.f32.mrb[0].mxu0
      %v1291 = vpop.f32.mrb[0].mxu0
      %v1292 = vadd.f32 0.0, %v1291
      %v1293 = vpop.f32.mrb[0].mxu0
      %1294 = vmatprep.mubr.bf16.mxu0 0
      %1295 = vmatmul.mubr.bf16.gmra.mrb[0].mxu0 %v1154
      %v1296 = vpop.f32.mrb[0].mxu0
      %v1297 = vadd.f32 0.0, %v1296
      %v1298 = vpop.f32.mrb[0].mxu0
      %v1299 = vpop.f32.mrb[0].mxu0
      %v1300 = vadd.f32 0.0, %v1299
      %v1301 = vpop.f32.mrb[0].mxu0
      %1302 = vmatprep.mubr.bf16.mxu0 0
      %1303 = vmatmul.mubr.bf16.gmra.mrb[0].mxu0 %v1155
      %v1304 = vpop.f32.mrb[0].mxu0
      %v1305 = vadd.f32 0.0, %v1304
      %v1306 = vpop.f32.mrb[0].mxu0
      %v1307 = vpop.f32.mrb[0].mxu0
      %v1308 = vadd.f32 0.0, %v1307
      %v1309 = vpop.f32.mrb[0].mxu0
      %1310 = vmatprep.mubr.bf16.mxu0 0
      %1311 = vmatmul.mubr.bf16.gmra.mrb[0].mxu0 %v1156
      %v1312 = vpop.f32.mrb[0].mxu0
      %v1313 = vadd.f32 0.0, %v1312
      %v1314 = vpop.f32.mrb[0].mxu0
      %v1315 = vpop.f32.mrb[0].mxu0
      %v1316 = vpop.f32.mrb[0].mxu0
      %1317 = vdwg.mxu0
      %v1318 = vadd.f32 %v1134, %v1257
      %v1319 = vadd.f32 %v1135, %v1260
      %v1320 = vadd.f32 %v1136, %v1265
      %v1321 = vadd.f32 %v1137, %v1268
      %v1322 = vadd.f32 %v1138, %v1273
      %v1323 = vadd.f32 %v1139, %v1276
      %v1324 = vadd.f32 %v1140, %v1281
      %v1325 = vadd.f32 %v1141, %v1284
      %v1326 = vadd.f32 %v1142, %v1289
      %v1327 = vadd.f32 %v1143, %v1292
      %v1328 = vadd.f32 %v1144, %v1297
      %v1329 = vadd.f32 %v1145, %v1300
      %v1330 = vadd.f32 %v1146, %v1305
      %v1331 = vadd.f32 %v1147, %v1308
      %v1332 = vadd.f32 %v1148, %v1313
      %v1333 = vld [vmem:[#allocation2 + $0x40] sm:$0x1f]
      %s1334 = scalar_lea.vmem %s2, 256
      %v1335 = vld [vmem:[%s1334] sm:$0xf]
      %v1336 = vld [vmem:[%s1334 + $0x4] sm:$0xf]
      %v1337 = vld [vmem:[%s1334 + $0x8] sm:$0xf]
      %v1338 = vld [vmem:[%s1334 + $0xc] sm:$0xf]
      %v1339 = vld [vmem:[%s1334 + $0x10] sm:$0xf]
      %v1340 = vld [vmem:[%s1334 + $0x14] sm:$0xf]
      %v1341 = vld [vmem:[%s1334 + $0x18] sm:$0xf]
      %v1342 = vld [vmem:[%s1334 + $0x1c] sm:$0xf]
      %v1343 = vld [vmem:[%s1334 + $0x20] sm:$0xf]
      %v1344 = vld [vmem:[%s1334 + $0x24] sm:$0xf]
      %v1345 = vld [vmem:[%s1334 + $0x28] sm:$0xf]
      %v1346 = vld [vmem:[%s1334 + $0x2c] sm:$0xf]
      %v1347 = vld [vmem:[%s1334 + $0x30] sm:$0xf]
      %v1348 = vld [vmem:[%s1334 + $0x34] sm:$0xf]
      %v1349 = vld [vmem:[%s1334 + $0x38] sm:$0xf]
      %v1350 = vld [vmem:[%s1334 + $0x3c] sm:$0xf]
      %v1352 = vshrl.u32 %v1149, 16
      %v1354 = vshll.u32 %v1149, 16
      %v1356 = vrot.slane %v1354, 1
      %v1357 = vor.u32 %v1352, %v1356
      %v1359 = vshll.u32 %v1150, 16
      %v1361 = vrot.slane %v1359, 1
      %v1362 = vsel %vm580, %v1357, %v1361
      %v1363 = vshrl.u32 %v1150, 16
      %v1365 = vor.u32 %v1363, %v1361
      %v1367 = vshll.u32 %v1151, 16
      %v1369 = vrot.slane %v1367, 1
      %v1370 = vsel %vm580, %v1365, %v1369
      %v1371 = vshrl.u32 %v1151, 16
      %v1373 = vor.u32 %v1371, %v1369
      %v1375 = vshll.u32 %v1152, 16
      %v1377 = vrot.slane %v1375, 1
      %v1378 = vsel %vm580, %v1373, %v1377
      %v1379 = vshrl.u32 %v1152, 16
      %v1381 = vor.u32 %v1379, %v1377
      %v1383 = vshll.u32 %v1153, 16
      %v1385 = vrot.slane %v1383, 1
      %v1386 = vsel %vm580, %v1381, %v1385
      %v1387 = vshrl.u32 %v1153, 16
      %v1389 = vor.u32 %v1387, %v1385
      %v1391 = vshll.u32 %v1154, 16
      %v1393 = vrot.slane %v1391, 1
      %v1394 = vsel %vm580, %v1389, %v1393
      %v1395 = vshrl.u32 %v1154, 16
      %v1397 = vor.u32 %v1395, %v1393
      %v1399 = vshll.u32 %v1155, 16
      %v1401 = vrot.slane %v1399, 1
      %v1402 = vsel %vm580, %v1397, %v1401
      %v1403 = vshrl.u32 %v1155, 16
      %v1405 = vor.u32 %v1403, %v1401
      %v1407 = vshll.u32 %v1333, 16
      %v1409 = vrot.slane %v1407, 1
      %v1410 = vsel %vm580, %v1405, %v1409
      %v1411 = vshrl.u32 %v1333, 16
      %v1413 = vor.u32 %v1411, %v1409
      %v1438 = vunpack.c.l.b16 %v1335
      %v1439 = vunpack.c.l.b16 %v1336
      %v1440 = vunpack.c.l.b16 %v1337
      %v1441 = vunpack.c.l.b16 %v1338
      %v1442 = vunpack.c.l.b16 %v1339
      %v1443 = vunpack.c.l.b16 %v1340
      %v1444 = vunpack.c.l.b16 %v1341
      %v1445 = vunpack.c.l.b16 %v1342
      %v1446 = vunpack.c.l.b16 %v1343
      %v1447 = vunpack.c.l.b16 %v1344
      %v1448 = vunpack.c.l.b16 %v1345
      %v1449 = vunpack.c.l.b16 %v1346
      %v1450 = vunpack.c.l.b16 %v1347
      %v1451 = vunpack.c.l.b16 %v1348
      %v1452 = vunpack.c.l.b16 %v1349
      %v1453 = vunpack.c.l.b16 %v1350
      %v1454 = vpack.c.b16 %v1439, %v1438
      %v1455 = vpack.c.b16 %v1441, %v1440
      %v1456 = vpack.c.b16 %v1443, %v1442
      %v1457 = vpack.c.b16 %v1445, %v1444
      %v1458 = vpack.c.b16 %v1447, %v1446
      %v1459 = vpack.c.b16 %v1449, %v1448
      %v1460 = vpack.c.b16 %v1451, %v1450
      %v1461 = vpack.c.b16 %v1453, %v1452
      %1470 = vmatprep.subr.bf16.mxu0 0
      %1471 = vmatpush1.bf16.msra.mxu0 %v1454
      %1472 = vmatprep.subr.bf16.mxu0 0
      %1473 = vmatpush1.bf16.msra.mxu0 %v1455
      %1474 = vmatprep.subr.bf16.mxu0 0
      %1475 = vmatpush1.bf16.msra.mxu0 %v1456
      %1476 = vmatprep.subr.bf16.mxu0 0
      %1477 = vmatpush1.bf16.msra.mxu0 %v1457
      %1478 = vmatprep.subr.bf16.mxu0 0
      %1479 = vmatpush1.bf16.msra.mxu0 %v1458
      %1480 = vmatprep.subr.bf16.mxu0 0
      %1481 = vmatpush1.bf16.msra.mxu0 %v1459
      %1482 = vmatprep.subr.bf16.mxu0 0
      %1483 = vmatpush1.bf16.msra.mxu0 %v1460
      %1484 = vmatprep.subr.bf16.mxu0 0
      %1485 = vmatpush1.bf16.msra.mxu0 %v1461
      %1486 = vmatprep.subr.bf16.mxu0 0
      %1487 = vmatpush1.bf16.msra.mxu0 0
      %1488 = vmatprep.subr.bf16.mxu0 0
      %1489 = vmatpush1.bf16.msra.mxu0 0
      %1490 = vmatprep.subr.bf16.mxu0 0
      %1491 = vmatpush1.bf16.msra.mxu0 0
      %1492 = vmatprep.subr.bf16.mxu0 0
      %1493 = vmatpush1.bf16.msra.mxu0 0
      %1494 = vmatprep.subr.bf16.mxu0 0
      %1495 = vmatpush1.bf16.msra.mxu0 0
      %1496 = vmatprep.subr.bf16.mxu0 0
      %1497 = vmatpush1.bf16.msra.mxu0 0
      %1498 = vmatprep.subr.bf16.mxu0 0
      %1499 = vmatpush1.bf16.msra.mxu0 0
      %1500 = vmatprep.subr.bf16.mxu0 0
      %1501 = vmatpush1.bf16.msra.mxu0 0
      %1502 = vmatprep.mubr.bf16.mxu0 0
      %1503 = vmatmul.mubr.bf16.gmra.mrb[0].mxu0 %v1362
      %v1504 = vpop.f32.mrb[0].mxu0
      %v1505 = vadd.f32 0.0, %v1504
      %v1506 = vpop.f32.mrb[0].mxu0
      %v1507 = vpop.f32.mrb[0].mxu0
      %v1508 = vadd.f32 0.0, %v1507
      %v1509 = vpop.f32.mrb[0].mxu0
      %1510 = vmatprep.mubr.bf16.mxu0 0
      %1511 = vmatmul.mubr.bf16.gmra.mrb[0].mxu0 %v1370
      %v1512 = vpop.f32.mrb[0].mxu0
      %v1513 = vadd.f32 0.0, %v1512
      %v1514 = vpop.f32.mrb[0].mxu0
      %v1515 = vpop.f32.mrb[0].mxu0
      %v1516 = vadd.f32 0.0, %v1515
      %v1517 = vpop.f32.mrb[0].mxu0
      %1518 = vmatprep.mubr.bf16.mxu0 0
      %1519 = vmatmul.mubr.bf16.gmra.mrb[0].mxu0 %v1378
      %v1520 = vpop.f32.mrb[0].mxu0
      %v1521 = vadd.f32 0.0, %v1520
      %v1522 = vpop.f32.mrb[0].mxu0
      %v1523 = vpop.f32.mrb[0].mxu0
      %v1524 = vadd.f32 0.0, %v1523
      %v1525 = vpop.f32.mrb[0].mxu0
      %1526 = vmatprep.mubr.bf16.mxu0 0
      %1527 = vmatmul.mubr.bf16.gmra.mrb[0].mxu0 %v1386
      %v1528 = vpop.f32.mrb[0].mxu0
      %v1529 = vadd.f32 0.0, %v1528
      %v1530 = vpop.f32.mrb[0].mxu0
      %v1531 = vpop.f32.mrb[0].mxu0
      %v1532 = vadd.f32 0.0, %v1531
      %v1533 = vpop.f32.mrb[0].mxu0
      %1534 = vmatprep.mubr.bf16.mxu0 0
      %1535 = vmatmul.mubr.bf16.gmra.mrb[0].mxu0 %v1394
      %v1536 = vpop.f32.mrb[0].mxu0
      %v1537 = vadd.f32 0.0, %v1536
      %v1538 = vpop.f32.mrb[0].mxu0
      %v1539 = vpop.f32.mrb[0].mxu0
      %v1540 = vadd.f32 0.0, %v1539
      %v1541 = vpop.f32.mrb[0].mxu0
      %1542 = vmatprep.mubr.bf16.mxu0 0
      %1543 = vmatmul.mubr.bf16.gmra.mrb[0].mxu0 %v1402
      %v1544 = vpop.f32.mrb[0].mxu0
      %v1545 = vadd.f32 0.0, %v1544
      %v1546 = vpop.f32.mrb[0].mxu0
      %v1547 = vpop.f32.mrb[0].mxu0
      %v1548 = vadd.f32 0.0, %v1547
      %v1549 = vpop.f32.mrb[0].mxu0
      %1550 = vmatprep.mubr.bf16.mxu0 0
      %1551 = vmatmul.mubr.bf16.gmra.mrb[0].mxu0 %v1410
      %v1552 = vpop.f32.mrb[0].mxu0
      %v1553 = vadd.f32 0.0, %v1552
      %v1554 = vpop.f32.mrb[0].mxu0
      %v1555 = vpop.f32.mrb[0].mxu0
      %v1556 = vadd.f32 0.0, %v1555
      %v1557 = vpop.f32.mrb[0].mxu0
      %1558 = vmatprep.mubr.bf16.mxu0 0
      %1559 = vmatmul.mubr.bf16.gmra.mrb[0].mxu0 %v1413
      %v1560 = vpop.f32.mrb[0].mxu0
      %v1561 = vadd.f32 0.0, %v1560
      %v1562 = vpop.f32.mrb[0].mxu0
      %v1563 = vpop.f32.mrb[0].mxu0
      %v1564 = vpop.f32.mrb[0].mxu0
      %1565 = vdwg.mxu0
      %v1566 = vadd.f32 %v1318, %v1505
      %v1567 = vadd.f32 %v1319, %v1508
      %v1568 = vadd.f32 %v1320, %v1513
      %v1569 = vadd.f32 %v1321, %v1516
      %v1570 = vadd.f32 %v1322, %v1521
      %v1571 = vadd.f32 %v1323, %v1524
      %v1572 = vadd.f32 %v1324, %v1529
      %v1573 = vadd.f32 %v1325, %v1532
      %v1574 = vadd.f32 %v1326, %v1537
      %v1575 = vadd.f32 %v1327, %v1540
      %v1576 = vadd.f32 %v1328, %v1545
      %v1577 = vadd.f32 %v1329, %v1548
      %v1578 = vadd.f32 %v1330, %v1553
      %v1579 = vadd.f32 %v1331, %v1556
      %v1580 = vadd.f32 %v1332, %v1561
      %v1581 = vld [vmem:[#allocation2 + $0x8] sm:$0xfe]
      %s1582 = scalar_lea.vmem %s2, 320
      %v1583 = vld [vmem:[%s1582] sm:$0xf]
      %v1584 = vld [vmem:[%s1582 + $0x4] sm:$0xf]
      %v1585 = vld [vmem:[%s1582 + $0x8] sm:$0xf]
      %v1586 = vld [vmem:[%s1582 + $0xc] sm:$0xf]
      %v1587 = vld [vmem:[%s1582 + $0x10] sm:$0xf]
      %v1588 = vld [vmem:[%s1582 + $0x14] sm:$0xf]
      %v1589 = vld [vmem:[%s1582 + $0x18] sm:$0xf]
      %v1590 = vld [vmem:[%s1582 + $0x1c] sm:$0xf]
      %v1591 = vld [vmem:[%s1582 + $0x20] sm:$0xf]
      %v1592 = vld [vmem:[%s1582 + $0x24] sm:$0xf]
      %v1593 = vld [vmem:[%s1582 + $0x28] sm:$0xf]
      %v1594 = vld [vmem:[%s1582 + $0x2c] sm:$0xf]
      %v1595 = vld [vmem:[%s1582 + $0x30] sm:$0xf]
      %v1596 = vld [vmem:[%s1582 + $0x34] sm:$0xf]
      %v1597 = vld [vmem:[%s1582 + $0x38] sm:$0xf]
      %v1598 = vld [vmem:[%s1582 + $0x3c] sm:$0xf]
      %v1607 = vrot.slane %v1581, 1
      %v1608 = vrot.slane %v1150, 1
      %v1609 = vsel %vm966, %v1607, %v1608
      %v1610 = vrot.slane %v1151, 1
      %v1611 = vsel %vm966, %v1608, %v1610
      %v1612 = vrot.slane %v1152, 1
      %v1613 = vsel %vm966, %v1610, %v1612
      %v1614 = vrot.slane %v1153, 1
      %v1615 = vsel %vm966, %v1612, %v1614
      %v1616 = vrot.slane %v1154, 1
      %v1617 = vsel %vm966, %v1614, %v1616
      %v1618 = vrot.slane %v1155, 1
      %v1619 = vsel %vm966, %v1616, %v1618
      %v1620 = vrot.slane %v1333, 1
      %v1621 = vsel %vm966, %v1618, %v1620
      %v1646 = vunpack.c.l.b16 %v1583
      %v1647 = vunpack.c.l.b16 %v1584
      %v1648 = vunpack.c.l.b16 %v1585
      %v1649 = vunpack.c.l.b16 %v1586
      %v1650 = vunpack.c.l.b16 %v1587
      %v1651 = vunpack.c.l.b16 %v1588
      %v1652 = vunpack.c.l.b16 %v1589
      %v1653 = vunpack.c.l.b16 %v1590
      %v1654 = vunpack.c.l.b16 %v1591
      %v1655 = vunpack.c.l.b16 %v1592
      %v1656 = vunpack.c.l.b16 %v1593
      %v1657 = vunpack.c.l.b16 %v1594
      %v1658 = vunpack.c.l.b16 %v1595
      %v1659 = vunpack.c.l.b16 %v1596
      %v1660 = vunpack.c.l.b16 %v1597
      %v1661 = vunpack.c.l.b16 %v1598
      %v1662 = vpack.c.b16 %v1647, %v1646
      %v1663 = vpack.c.b16 %v1649, %v1648
      %v1664 = vpack.c.b16 %v1651, %v1650
      %v1665 = vpack.c.b16 %v1653, %v1652
      %v1666 = vpack.c.b16 %v1655, %v1654
      %v1667 = vpack.c.b16 %v1657, %v1656
      %v1668 = vpack.c.b16 %v1659, %v1658
      %v1669 = vpack.c.b16 %v1661, %v1660
      %1678 = vmatprep.subr.bf16.mxu0 0
      %1679 = vmatpush1.bf16.msra.mxu0 %v1662
      %1680 = vmatprep.subr.bf16.mxu0 0
      %1681 = vmatpush1.bf16.msra.mxu0 %v1663
      %1682 = vmatprep.subr.bf16.mxu0 0
      %1683 = vmatpush1.bf16.msra.mxu0 %v1664
      %1684 = vmatprep.subr.bf16.mxu0 0
      %1685 = vmatpush1.bf16.msra.mxu0 %v1665
      %1686 = vmatprep.subr.bf16.mxu0 0
      %1687 = vmatpush1.bf16.msra.mxu0 %v1666
      %1688 = vmatprep.subr.bf16.mxu0 0
      %1689 = vmatpush1.bf16.msra.mxu0 %v1667
      %1690 = vmatprep.subr.bf16.mxu0 0
      %1691 = vmatpush1.bf16.msra.mxu0 %v1668
      %1692 = vmatprep.subr.bf16.mxu0 0
      %1693 = vmatpush1.bf16.msra.mxu0 %v1669
      %1694 = vmatprep.subr.bf16.mxu0 0
      %1695 = vmatpush1.bf16.msra.mxu0 0
      %1696 = vmatprep.subr.bf16.mxu0 0
      %1697 = vmatpush1.bf16.msra.mxu0 0
      %1698 = vmatprep.subr.bf16.mxu0 0
      %1699 = vmatpush1.bf16.msra.mxu0 0
      %1700 = vmatprep.subr.bf16.mxu0 0
      %1701 = vmatpush1.bf16.msra.mxu0 0
      %1702 = vmatprep.subr.bf16.mxu0 0
      %1703 = vmatpush1.bf16.msra.mxu0 0
      %1704 = vmatprep.subr.bf16.mxu0 0
      %1705 = vmatpush1.bf16.msra.mxu0 0
      %1706 = vmatprep.subr.bf16.mxu0 0
      %1707 = vmatpush1.bf16.msra.mxu0 0
      %1708 = vmatprep.subr.bf16.mxu0 0
      %1709 = vmatpush1.bf16.msra.mxu0 0
      %1710 = vmatprep.mubr.bf16.mxu0 0
      %1711 = vmatmul.mubr.bf16.gmra.mrb[0].mxu0 %v1609
      %v1712 = vpop.f32.mrb[0].mxu0
      %v1713 = vadd.f32 0.0, %v1712
      %v1714 = vpop.f32.mrb[0].mxu0
      %v1715 = vpop.f32.mrb[0].mxu0
      %v1716 = vadd.f32 0.0, %v1715
      %v1717 = vpop.f32.mrb[0].mxu0
      %1718 = vmatprep.mubr.bf16.mxu0 0
      %1719 = vmatmul.mubr.bf16.gmra.mrb[0].mxu0 %v1611
      %v1720 = vpop.f32.mrb[0].mxu0
      %v1721 = vadd.f32 0.0, %v1720
      %v1722 = vpop.f32.mrb[0].mxu0
      %v1723 = vpop.f32.mrb[0].mxu0
      %v1724 = vadd.f32 0.0, %v1723
      %v1725 = vpop.f32.mrb[0].mxu0
      %1726 = vmatprep.mubr.bf16.mxu0 0
      %1727 = vmatmul.mubr.bf16.gmra.mrb[0].mxu0 %v1613
      %v1728 = vpop.f32.mrb[0].mxu0
      %v1729 = vadd.f32 0.0, %v1728
      %v1730 = vpop.f32.mrb[0].mxu0
      %v1731 = vpop.f32.mrb[0].mxu0
      %v1732 = vadd.f32 0.0, %v1731
      %v1733 = vpop.f32.mrb[0].mxu0
      %1734 = vmatprep.mubr.bf16.mxu0 0
      %1735 = vmatmul.mubr.bf16.gmra.mrb[0].mxu0 %v1615
      %v1736 = vpop.f32.mrb[0].mxu0
      %v1737 = vadd.f32 0.0, %v1736
      %v1738 = vpop.f32.mrb[0].mxu0
      %v1739 = vpop.f32.mrb[0].mxu0
      %v1740 = vadd.f32 0.0, %v1739
      %v1741 = vpop.f32.mrb[0].mxu0
      %1742 = vmatprep.mubr.bf16.mxu0 0
      %1743 = vmatmul.mubr.bf16.gmra.mrb[0].mxu0 %v1617
      %v1744 = vpop.f32.mrb[0].mxu0
      %v1745 = vadd.f32 0.0, %v1744
      %v1746 = vpop.f32.mrb[0].mxu0
      %v1747 = vpop.f32.mrb[0].mxu0
      %v1748 = vadd.f32 0.0, %v1747
      %v1749 = vpop.f32.mrb[0].mxu0
      %1750 = vmatprep.mubr.bf16.mxu0 0
      %1751 = vmatmul.mubr.bf16.gmra.mrb[0].mxu0 %v1619
      %v1752 = vpop.f32.mrb[0].mxu0
      %v1753 = vadd.f32 0.0, %v1752
      %v1754 = vpop.f32.mrb[0].mxu0
      %v1755 = vpop.f32.mrb[0].mxu0
      %v1756 = vadd.f32 0.0, %v1755
      %v1757 = vpop.f32.mrb[0].mxu0
      %1758 = vmatprep.mubr.bf16.mxu0 0
      %1759 = vmatmul.mubr.bf16.gmra.mrb[0].mxu0 %v1621
      %v1760 = vpop.f32.mrb[0].mxu0
      %v1761 = vadd.f32 0.0, %v1760
      %v1762 = vpop.f32.mrb[0].mxu0
      %v1763 = vpop.f32.mrb[0].mxu0
      %v1764 = vadd.f32 0.0, %v1763
      %v1765 = vpop.f32.mrb[0].mxu0
      %1766 = vmatprep.mubr.bf16.mxu0 0
      %1767 = vmatmul.mubr.bf16.gmra.mrb[0].mxu0 %v1620
      %v1768 = vpop.f32.mrb[0].mxu0
      %v1769 = vadd.f32 0.0, %v1768
      %v1770 = vpop.f32.mrb[0].mxu0
      %v1771 = vpop.f32.mrb[0].mxu0
      %v1772 = vpop.f32.mrb[0].mxu0
      %1773 = vdwg.mxu0
      %v1774 = vadd.f32 %v1566, %v1713
      %v1775 = vadd.f32 %v1567, %v1716
      %v1776 = vadd.f32 %v1568, %v1721
      %v1777 = vadd.f32 %v1569, %v1724
      %v1778 = vadd.f32 %v1570, %v1729
      %v1779 = vadd.f32 %v1571, %v1732
      %v1780 = vadd.f32 %v1572, %v1737
      %v1781 = vadd.f32 %v1573, %v1740
      %v1782 = vadd.f32 %v1574, %v1745
      %v1783 = vadd.f32 %v1575, %v1748
      %v1784 = vadd.f32 %v1576, %v1753
      %v1785 = vadd.f32 %v1577, %v1756
      %v1786 = vadd.f32 %v1578, %v1761
      %v1787 = vadd.f32 %v1579, %v1764
      %v1788 = vadd.f32 %v1580, %v1769
      %v1789 = vld [vmem:[#allocation2 + $0x10] sm:$0xff]
      %v1790 = vld [vmem:[#allocation2 + $0x18] sm:$0xff]
      %v1791 = vld [vmem:[#allocation2 + $0x20] sm:$0xff]
      %v1792 = vld [vmem:[#allocation2 + $0x28] sm:$0xff]
      %v1793 = vld [vmem:[#allocation2 + $0x30] sm:$0xff]
      %v1794 = vld [vmem:[#allocation2 + $0x38] sm:$0xff]
      %v1795 = vld [vmem:[#allocation2 + $0x40] sm:$0xff]
      %v1796 = vld [vmem:[#allocation2 + $0x48] sm:$0xf]
      %s1797 = scalar_lea.vmem %s2, 384
      %v1798 = vld [vmem:[%s1797] sm:$0xf]
      %v1799 = vld [vmem:[%s1797 + $0x4] sm:$0xf]
      %v1800 = vld [vmem:[%s1797 + $0x8] sm:$0xf]
      %v1801 = vld [vmem:[%s1797 + $0xc] sm:$0xf]
      %v1802 = vld [vmem:[%s1797 + $0x10] sm:$0xf]
      %v1803 = vld [vmem:[%s1797 + $0x14] sm:$0xf]
      %v1804 = vld [vmem:[%s1797 + $0x18] sm:$0xf]
      %v1805 = vld [vmem:[%s1797 + $0x1c] sm:$0xf]
      %v1806 = vld [vmem:[%s1797 + $0x20] sm:$0xf]
      %v1807 = vld [vmem:[%s1797 + $0x24] sm:$0xf]
      %v1808 = vld [vmem:[%s1797 + $0x28] sm:$0xf]
      %v1809 = vld [vmem:[%s1797 + $0x2c] sm:$0xf]
      %v1810 = vld [vmem:[%s1797 + $0x30] sm:$0xf]
      %v1811 = vld [vmem:[%s1797 + $0x34] sm:$0xf]
      %v1812 = vld [vmem:[%s1797 + $0x38] sm:$0xf]
      %v1813 = vld [vmem:[%s1797 + $0x3c] sm:$0xf]
      %v1830 = vunpack.c.l.b16 %v1798
      %v1831 = vunpack.c.l.b16 %v1799
      %v1832 = vunpack.c.l.b16 %v1800
      %v1833 = vunpack.c.l.b16 %v1801
      %v1834 = vunpack.c.l.b16 %v1802
      %v1835 = vunpack.c.l.b16 %v1803
      %v1836 = vunpack.c.l.b16 %v1804
      %v1837 = vunpack.c.l.b16 %v1805
      %v1838 = vunpack.c.l.b16 %v1806
      %v1839 = vunpack.c.l.b16 %v1807
      %v1840 = vunpack.c.l.b16 %v1808
      %v1841 = vunpack.c.l.b16 %v1809
      %v1842 = vunpack.c.l.b16 %v1810
      %v1843 = vunpack.c.l.b16 %v1811
      %v1844 = vunpack.c.l.b16 %v1812
      %v1845 = vunpack.c.l.b16 %v1813
      %v1846 = vpack.c.b16 %v1831, %v1830
      %v1847 = vpack.c.b16 %v1833, %v1832
      %v1848 = vpack.c.b16 %v1835, %v1834
      %v1849 = vpack.c.b16 %v1837, %v1836
      %v1850 = vpack.c.b16 %v1839, %v1838
      %v1851 = vpack.c.b16 %v1841, %v1840
      %v1852 = vpack.c.b16 %v1843, %v1842
      %v1853 = vpack.c.b16 %v1845, %v1844
      %1862 = vmatprep.subr.bf16.mxu0 0
      %1863 = vmatpush1.bf16.msra.mxu0 %v1846
      %1864 = vmatprep.subr.bf16.mxu0 0
      %1865 = vmatpush1.bf16.msra.mxu0 %v1847
      %1866 = vmatprep.subr.bf16.mxu0 0
      %1867 = vmatpush1.bf16.msra.mxu0 %v1848
      %1868 = vmatprep.subr.bf16.mxu0 0
      %1869 = vmatpush1.bf16.msra.mxu0 %v1849
      %1870 = vmatprep.subr.bf16.mxu0 0
      %1871 = vmatpush1.bf16.msra.mxu0 %v1850
      %1872 = vmatprep.subr.bf16.mxu0 0
      %1873 = vmatpush1.bf16.msra.mxu0 %v1851
      %1874 = vmatprep.subr.bf16.mxu0 0
      %1875 = vmatpush1.bf16.msra.mxu0 %v1852
      %1876 = vmatprep.subr.bf16.mxu0 0
      %1877 = vmatpush1.bf16.msra.mxu0 %v1853
      %1878 = vmatprep.subr.bf16.mxu0 0
      %1879 = vmatpush1.bf16.msra.mxu0 0
      %1880 = vmatprep.subr.bf16.mxu0 0
      %1881 = vmatpush1.bf16.msra.mxu0 0
      %1882 = vmatprep.subr.bf16.mxu0 0
      %1883 = vmatpush1.bf16.msra.mxu0 0
      %1884 = vmatprep.subr.bf16.mxu0 0
      %1885 = vmatpush1.bf16.msra.mxu0 0
      %1886 = vmatprep.subr.bf16.mxu0 0
      %1887 = vmatpush1.bf16.msra.mxu0 0
      %1888 = vmatprep.subr.bf16.mxu0 0
      %1889 = vmatpush1.bf16.msra.mxu0 0
      %1890 = vmatprep.subr.bf16.mxu0 0
      %1891 = vmatpush1.bf16.msra.mxu0 0
      %1892 = vmatprep.subr.bf16.mxu0 0
      %1893 = vmatpush1.bf16.msra.mxu0 0
      %1894 = vmatprep.mubr.bf16.mxu0 0
      %1895 = vmatmul.mubr.bf16.gmra.mrb[0].mxu0 %v1789
      %v1896 = vpop.f32.mrb[0].mxu0
      %v1897 = vadd.f32 0.0, %v1896
      %v1898 = vpop.f32.mrb[0].mxu0
      %v1899 = vpop.f32.mrb[0].mxu0
      %v1900 = vadd.f32 0.0, %v1899
      %v1901 = vpop.f32.mrb[0].mxu0
      %1902 = vmatprep.mubr.bf16.mxu0 0
      %1903 = vmatmul.mubr.bf16.gmra.mrb[0].mxu0 %v1790
      %v1904 = vpop.f32.mrb[0].mxu0
      %v1905 = vadd.f32 0.0, %v1904
      %v1906 = vpop.f32.mrb[0].mxu0
      %v1907 = vpop.f32.mrb[0].mxu0
      %v1908 = vadd.f32 0.0, %v1907
      %v1909 = vpop.f32.mrb[0].mxu0
      %1910 = vmatprep.mubr.bf16.mxu0 0
      %1911 = vmatmul.mubr.bf16.gmra.mrb[0].mxu0 %v1791
      %v1912 = vpop.f32.mrb[0].mxu0
      %v1913 = vadd.f32 0.0, %v1912
      %v1914 = vpop.f32.mrb[0].mxu0
      %v1915 = vpop.f32.mrb[0].mxu0
      %v1916 = vadd.f32 0.0, %v1915
      %v1917 = vpop.f32.mrb[0].mxu0
      %1918 = vmatprep.mubr.bf16.mxu0 0
      %1919 = vmatmul.mubr.bf16.gmra.mrb[0].mxu0 %v1792
      %v1920 = vpop.f32.mrb[0].mxu0
      %v1921 = vadd.f32 0.0, %v1920
      %v1922 = vpop.f32.mrb[0].mxu0
      %v1923 = vpop.f32.mrb[0].mxu0
      %v1924 = vadd.f32 0.0, %v1923
      %v1925 = vpop.f32.mrb[0].mxu0
      %1926 = vmatprep.mubr.bf16.mxu0 0
      %1927 = vmatmul.mubr.bf16.gmra.mrb[0].mxu0 %v1793
      %v1928 = vpop.f32.mrb[0].mxu0
      %v1929 = vadd.f32 0.0, %v1928
      %v1930 = vpop.f32.mrb[0].mxu0
      %v1931 = vpop.f32.mrb[0].mxu0
      %v1932 = vadd.f32 0.0, %v1931
      %v1933 = vpop.f32.mrb[0].mxu0
      %1934 = vmatprep.mubr.bf16.mxu0 0
      %1935 = vmatmul.mubr.bf16.gmra.mrb[0].mxu0 %v1794
      %v1936 = vpop.f32.mrb[0].mxu0
      %v1937 = vadd.f32 0.0, %v1936
      %v1938 = vpop.f32.mrb[0].mxu0
      %v1939 = vpop.f32.mrb[0].mxu0
      %v1940 = vadd.f32 0.0, %v1939
      %v1941 = vpop.f32.mrb[0].mxu0
      %1942 = vmatprep.mubr.bf16.mxu0 0
      %1943 = vmatmul.mubr.bf16.gmra.mrb[0].mxu0 %v1795
      %v1944 = vpop.f32.mrb[0].mxu0
      %v1945 = vadd.f32 0.0, %v1944
      %v1946 = vpop.f32.mrb[0].mxu0
      %v1947 = vpop.f32.mrb[0].mxu0
      %v1948 = vadd.f32 0.0, %v1947
      %v1949 = vpop.f32.mrb[0].mxu0
      %1950 = vmatprep.mubr.bf16.mxu0 0
      %1951 = vmatmul.mubr.bf16.gmra.mrb[0].mxu0 %v1796
      %v1952 = vpop.f32.mrb[0].mxu0
      %v1953 = vadd.f32 0.0, %v1952
      %v1954 = vpop.f32.mrb[0].mxu0
      %v1955 = vpop.f32.mrb[0].mxu0
      %v1956 = vpop.f32.mrb[0].mxu0
      %1957 = vdwg.mxu0
      %v1958 = vadd.f32 %v1774, %v1897
      %v1959 = vadd.f32 %v1775, %v1900
      %v1960 = vadd.f32 %v1776, %v1905
      %v1961 = vadd.f32 %v1777, %v1908
      %v1962 = vadd.f32 %v1778, %v1913
      %v1963 = vadd.f32 %v1779, %v1916
      %v1964 = vadd.f32 %v1780, %v1921
      %v1965 = vadd.f32 %v1781, %v1924
      %v1966 = vadd.f32 %v1782, %v1929
      %v1967 = vadd.f32 %v1783, %v1932
      %v1968 = vadd.f32 %v1784, %v1937
      %v1969 = vadd.f32 %v1785, %v1940
      %v1970 = vadd.f32 %v1786, %v1945
      %v1971 = vadd.f32 %v1787, %v1948
      %v1972 = vadd.f32 %v1788, %v1953
      %v1973 = vld [vmem:[#allocation2 + $0x48] sm:$0x1f]
      %s1974 = scalar_lea.vmem %s2, 448
      %v1975 = vld [vmem:[%s1974] sm:$0xf]
      %v1976 = vld [vmem:[%s1974 + $0x4] sm:$0xf]
      %v1977 = vld [vmem:[%s1974 + $0x8] sm:$0xf]
      %v1978 = vld [vmem:[%s1974 + $0xc] sm:$0xf]
      %v1979 = vld [vmem:[%s1974 + $0x10] sm:$0xf]
      %v1980 = vld [vmem:[%s1974 + $0x14] sm:$0xf]
      %v1981 = vld [vmem:[%s1974 + $0x18] sm:$0xf]
      %v1982 = vld [vmem:[%s1974 + $0x1c] sm:$0xf]
      %v1983 = vld [vmem:[%s1974 + $0x20] sm:$0xf]
      %v1984 = vld [vmem:[%s1974 + $0x24] sm:$0xf]
      %v1985 = vld [vmem:[%s1974 + $0x28] sm:$0xf]
      %v1986 = vld [vmem:[%s1974 + $0x2c] sm:$0xf]
      %v1987 = vld [vmem:[%s1974 + $0x30] sm:$0xf]
      %v1988 = vld [vmem:[%s1974 + $0x34] sm:$0xf]
      %v1989 = vld [vmem:[%s1974 + $0x38] sm:$0xf]
      %v1990 = vld [vmem:[%s1974 + $0x3c] sm:$0xf]
      %v1992 = vshrl.u32 %v1789, 16
      %v1994 = vshll.u32 %v1789, 16
      %v1996 = vrot.slane %v1994, 1
      %v1997 = vor.u32 %v1992, %v1996
      %v1999 = vshll.u32 %v1790, 16
      %v2001 = vrot.slane %v1999, 1
      %v2002 = vsel %vm580, %v1997, %v2001
      %v2003 = vshrl.u32 %v1790, 16
      %v2005 = vor.u32 %v2003, %v2001
      %v2007 = vshll.u32 %v1791, 16
      %v2009 = vrot.slane %v2007, 1
      %v2010 = vsel %vm580, %v2005, %v2009
      %v2011 = vshrl.u32 %v1791, 16
      %v2013 = vor.u32 %v2011, %v2009
      %v2015 = vshll.u32 %v1792, 16
      %v2017 = vrot.slane %v2015, 1
      %v2018 = vsel %vm580, %v2013, %v2017
      %v2019 = vshrl.u32 %v1792, 16
      %v2021 = vor.u32 %v2019, %v2017
      %v2023 = vshll.u32 %v1793, 16
      %v2025 = vrot.slane %v2023, 1
      %v2026 = vsel %vm580, %v2021, %v2025
      %v2027 = vshrl.u32 %v1793, 16
      %v2029 = vor.u32 %v2027, %v2025
      %v2031 = vshll.u32 %v1794, 16
      %v2033 = vrot.slane %v2031, 1
      %v2034 = vsel %vm580, %v2029, %v2033
      %v2035 = vshrl.u32 %v1794, 16
      %v2037 = vor.u32 %v2035, %v2033
      %v2039 = vshll.u32 %v1795, 16
      %v2041 = vrot.slane %v2039, 1
      %v2042 = vsel %vm580, %v2037, %v2041
      %v2043 = vshrl.u32 %v1795, 16
      %v2045 = vor.u32 %v2043, %v2041
      %v2047 = vshll.u32 %v1973, 16
      %v2049 = vrot.slane %v2047, 1
      %v2050 = vsel %vm580, %v2045, %v2049
      %v2051 = vshrl.u32 %v1973, 16
      %v2053 = vor.u32 %v2051, %v2049
      %v2078 = vunpack.c.l.b16 %v1975
      %v2079 = vunpack.c.l.b16 %v1976
      %v2080 = vunpack.c.l.b16 %v1977
      %v2081 = vunpack.c.l.b16 %v1978
      %v2082 = vunpack.c.l.b16 %v1979
      %v2083 = vunpack.c.l.b16 %v1980
      %v2084 = vunpack.c.l.b16 %v1981
      %v2085 = vunpack.c.l.b16 %v1982
      %v2086 = vunpack.c.l.b16 %v1983
      %v2087 = vunpack.c.l.b16 %v1984
      %v2088 = vunpack.c.l.b16 %v1985
      %v2089 = vunpack.c.l.b16 %v1986
      %v2090 = vunpack.c.l.b16 %v1987
      %v2091 = vunpack.c.l.b16 %v1988
      %v2092 = vunpack.c.l.b16 %v1989
      %v2093 = vunpack.c.l.b16 %v1990
      %v2094 = vpack.c.b16 %v2079, %v2078
      %v2095 = vpack.c.b16 %v2081, %v2080
      %v2096 = vpack.c.b16 %v2083, %v2082
      %v2097 = vpack.c.b16 %v2085, %v2084
      %v2098 = vpack.c.b16 %v2087, %v2086
      %v2099 = vpack.c.b16 %v2089, %v2088
      %v2100 = vpack.c.b16 %v2091, %v2090
      %v2101 = vpack.c.b16 %v2093, %v2092
      %2110 = vmatprep.subr.bf16.mxu0 0
      %2111 = vmatpush1.bf16.msra.mxu0 %v2094
      %2112 = vmatprep.subr.bf16.mxu0 0
      %2113 = vmatpush1.bf16.msra.mxu0 %v2095
      %2114 = vmatprep.subr.bf16.mxu0 0
      %2115 = vmatpush1.bf16.msra.mxu0 %v2096
      %2116 = vmatprep.subr.bf16.mxu0 0
      %2117 = vmatpush1.bf16.msra.mxu0 %v2097
      %2118 = vmatprep.subr.bf16.mxu0 0
      %2119 = vmatpush1.bf16.msra.mxu0 %v2098
      %2120 = vmatprep.subr.bf16.mxu0 0
      %2121 = vmatpush1.bf16.msra.mxu0 %v2099
      %2122 = vmatprep.subr.bf16.mxu0 0
      %2123 = vmatpush1.bf16.msra.mxu0 %v2100
      %2124 = vmatprep.subr.bf16.mxu0 0
      %2125 = vmatpush1.bf16.msra.mxu0 %v2101
      %2126 = vmatprep.subr.bf16.mxu0 0
      %2127 = vmatpush1.bf16.msra.mxu0 0
      %2128 = vmatprep.subr.bf16.mxu0 0
      %2129 = vmatpush1.bf16.msra.mxu0 0
      %2130 = vmatprep.subr.bf16.mxu0 0
      %2131 = vmatpush1.bf16.msra.mxu0 0
      %2132 = vmatprep.subr.bf16.mxu0 0
      %2133 = vmatpush1.bf16.msra.mxu0 0
      %2134 = vmatprep.subr.bf16.mxu0 0
      %2135 = vmatpush1.bf16.msra.mxu0 0
      %2136 = vmatprep.subr.bf16.mxu0 0
      %2137 = vmatpush1.bf16.msra.mxu0 0
      %2138 = vmatprep.subr.bf16.mxu0 0
      %2139 = vmatpush1.bf16.msra.mxu0 0
      %2140 = vmatprep.subr.bf16.mxu0 0
      %2141 = vmatpush1.bf16.msra.mxu0 0
      %2142 = vmatprep.mubr.bf16.mxu0 0
      %2143 = vmatmul.mubr.bf16.gmra.mrb[0].mxu0 %v2002
      %v2144 = vpop.f32.mrb[0].mxu0
      %v2145 = vadd.f32 0.0, %v2144
      %v2146 = vpop.f32.mrb[0].mxu0
      %v2147 = vpop.f32.mrb[0].mxu0
      %v2148 = vadd.f32 0.0, %v2147
      %v2149 = vpop.f32.mrb[0].mxu0
      %2150 = vmatprep.mubr.bf16.mxu0 0
      %2151 = vmatmul.mubr.bf16.gmra.mrb[0].mxu0 %v2010
      %v2152 = vpop.f32.mrb[0].mxu0
      %v2153 = vadd.f32 0.0, %v2152
      %v2154 = vpop.f32.mrb[0].mxu0
      %v2155 = vpop.f32.mrb[0].mxu0
      %v2156 = vadd.f32 0.0, %v2155
      %v2157 = vpop.f32.mrb[0].mxu0
      %2158 = vmatprep.mubr.bf16.mxu0 0
      %2159 = vmatmul.mubr.bf16.gmra.mrb[0].mxu0 %v2018
      %v2160 = vpop.f32.mrb[0].mxu0
      %v2161 = vadd.f32 0.0, %v2160
      %v2162 = vpop.f32.mrb[0].mxu0
      %v2163 = vpop.f32.mrb[0].mxu0
      %v2164 = vadd.f32 0.0, %v2163
      %v2165 = vpop.f32.mrb[0].mxu0
      %2166 = vmatprep.mubr.bf16.mxu0 0
      %2167 = vmatmul.mubr.bf16.gmra.mrb[0].mxu0 %v2026
      %v2168 = vpop.f32.mrb[0].mxu0
      %v2169 = vadd.f32 0.0, %v2168
      %v2170 = vpop.f32.mrb[0].mxu0
      %v2171 = vpop.f32.mrb[0].mxu0
      %v2172 = vadd.f32 0.0, %v2171
      %v2173 = vpop.f32.mrb[0].mxu0
      %2174 = vmatprep.mubr.bf16.mxu0 0
      %2175 = vmatmul.mubr.bf16.gmra.mrb[0].mxu0 %v2034
      %v2176 = vpop.f32.mrb[0].mxu0
      %v2177 = vadd.f32 0.0, %v2176
      %v2178 = vpop.f32.mrb[0].mxu0
      %v2179 = vpop.f32.mrb[0].mxu0
      %v2180 = vadd.f32 0.0, %v2179
      %v2181 = vpop.f32.mrb[0].mxu0
      %2182 = vmatprep.mubr.bf16.mxu0 0
      %2183 = vmatmul.mubr.bf16.gmra.mrb[0].mxu0 %v2042
      %v2184 = vpop.f32.mrb[0].mxu0
      %v2185 = vadd.f32 0.0, %v2184
      %v2186 = vpop.f32.mrb[0].mxu0
      %v2187 = vpop.f32.mrb[0].mxu0
      %v2188 = vadd.f32 0.0, %v2187
      %v2189 = vpop.f32.mrb[0].mxu0
      %2190 = vmatprep.mubr.bf16.mxu0 0
      %2191 = vmatmul.mubr.bf16.gmra.mrb[0].mxu0 %v2050
      %v2192 = vpop.f32.mrb[0].mxu0
      %v2193 = vadd.f32 0.0, %v2192
      %v2194 = vpop.f32.mrb[0].mxu0
      %v2195 = vpop.f32.mrb[0].mxu0
      %v2196 = vadd.f32 0.0, %v2195
      %v2197 = vpop.f32.mrb[0].mxu0
      %2198 = vmatprep.mubr.bf16.mxu0 0
      %2199 = vmatmul.mubr.bf16.gmra.mrb[0].mxu0 %v2053
      %v2200 = vpop.f32.mrb[0].mxu0
      %v2201 = vadd.f32 0.0, %v2200
      %v2202 = vpop.f32.mrb[0].mxu0
      %v2203 = vpop.f32.mrb[0].mxu0
      %v2204 = vpop.f32.mrb[0].mxu0
      %2205 = vdwg.mxu0
      %v2206 = vadd.f32 %v1958, %v2145
      %v2207 = vadd.f32 %v1959, %v2148
      %v2208 = vadd.f32 %v1960, %v2153
      %v2209 = vadd.f32 %v1961, %v2156
      %v2210 = vadd.f32 %v1962, %v2161
      %v2211 = vadd.f32 %v1963, %v2164
      %v2212 = vadd.f32 %v1964, %v2169
      %v2213 = vadd.f32 %v1965, %v2172
      %v2214 = vadd.f32 %v1966, %v2177
      %v2215 = vadd.f32 %v1967, %v2180
      %v2216 = vadd.f32 %v1968, %v2185
      %v2217 = vadd.f32 %v1969, %v2188
      %v2218 = vadd.f32 %v1970, %v2193
      %v2219 = vadd.f32 %v1971, %v2196
      %v2220 = vadd.f32 %v1972, %v2201
      %v2221 = vld [vmem:[#allocation2 + $0x10] sm:$0xfe]
      %s2222 = scalar_lea.vmem %s2, 512
      %v2223 = vld [vmem:[%s2222] sm:$0xf]
      %v2224 = vld [vmem:[%s2222 + $0x4] sm:$0xf]
      %v2225 = vld [vmem:[%s2222 + $0x8] sm:$0xf]
      %v2226 = vld [vmem:[%s2222 + $0xc] sm:$0xf]
      %v2227 = vld [vmem:[%s2222 + $0x10] sm:$0xf]
      %v2228 = vld [vmem:[%s2222 + $0x14] sm:$0xf]
      %v2229 = vld [vmem:[%s2222 + $0x18] sm:$0xf]
      %v2230 = vld [vmem:[%s2222 + $0x1c] sm:$0xf]
      %v2231 = vld [vmem:[%s2222 + $0x20] sm:$0xf]
      %v2232 = vld [vmem:[%s2222 + $0x24] sm:$0xf]
      %v2233 = vld [vmem:[%s2222 + $0x28] sm:$0xf]
      %v2234 = vld [vmem:[%s2222 + $0x2c] sm:$0xf]
      %v2235 = vld [vmem:[%s2222 + $0x30] sm:$0xf]
      %v2236 = vld [vmem:[%s2222 + $0x34] sm:$0xf]
      %v2237 = vld [vmem:[%s2222 + $0x38] sm:$0xf]
      %v2238 = vld [vmem:[%s2222 + $0x3c] sm:$0xf]
      %v2247 = vrot.slane %v2221, 1
      %v2248 = vrot.slane %v1790, 1
      %v2249 = vsel %vm966, %v2247, %v2248
      %v2250 = vrot.slane %v1791, 1
      %v2251 = vsel %vm966, %v2248, %v2250
      %v2252 = vrot.slane %v1792, 1
      %v2253 = vsel %vm966, %v2250, %v2252
      %v2254 = vrot.slane %v1793, 1
      %v2255 = vsel %vm966, %v2252, %v2254
      %v2256 = vrot.slane %v1794, 1
      %v2257 = vsel %vm966, %v2254, %v2256
      %v2258 = vrot.slane %v1795, 1
      %v2259 = vsel %vm966, %v2256, %v2258
      %v2260 = vrot.slane %v1973, 1
      %v2261 = vsel %vm966, %v2258, %v2260
      %v2286 = vunpack.c.l.b16 %v2223
      %v2287 = vunpack.c.l.b16 %v2224
      %v2288 = vunpack.c.l.b16 %v2225
      %v2289 = vunpack.c.l.b16 %v2226
      %v2290 = vunpack.c.l.b16 %v2227
      %v2291 = vunpack.c.l.b16 %v2228
      %v2292 = vunpack.c.l.b16 %v2229
      %v2293 = vunpack.c.l.b16 %v2230
      %v2294 = vunpack.c.l.b16 %v2231
      %v2295 = vunpack.c.l.b16 %v2232
      %v2296 = vunpack.c.l.b16 %v2233
      %v2297 = vunpack.c.l.b16 %v2234
      %v2298 = vunpack.c.l.b16 %v2235
      %v2299 = vunpack.c.l.b16 %v2236
      %v2300 = vunpack.c.l.b16 %v2237
      %v2301 = vunpack.c.l.b16 %v2238
      %v2302 = vpack.c.b16 %v2287, %v2286
      %v2303 = vpack.c.b16 %v2289, %v2288
      %v2304 = vpack.c.b16 %v2291, %v2290
      %v2305 = vpack.c.b16 %v2293, %v2292
      %v2306 = vpack.c.b16 %v2295, %v2294
      %v2307 = vpack.c.b16 %v2297, %v2296
      %v2308 = vpack.c.b16 %v2299, %v2298
      %v2309 = vpack.c.b16 %v2301, %v2300
      %2318 = vmatprep.subr.bf16.mxu0 0
      %2319 = vmatpush1.bf16.msra.mxu0 %v2302
      %2320 = vmatprep.subr.bf16.mxu0 0
      %2321 = vmatpush1.bf16.msra.mxu0 %v2303
      %2322 = vmatprep.subr.bf16.mxu0 0
      %2323 = vmatpush1.bf16.msra.mxu0 %v2304
      %2324 = vmatprep.subr.bf16.mxu0 0
      %2325 = vmatpush1.bf16.msra.mxu0 %v2305
      %2326 = vmatprep.subr.bf16.mxu0 0
      %2327 = vmatpush1.bf16.msra.mxu0 %v2306
      %2328 = vmatprep.subr.bf16.mxu0 0
      %2329 = vmatpush1.bf16.msra.mxu0 %v2307
      %2330 = vmatprep.subr.bf16.mxu0 0
      %2331 = vmatpush1.bf16.msra.mxu0 %v2308
      %2332 = vmatprep.subr.bf16.mxu0 0
      %2333 = vmatpush1.bf16.msra.mxu0 %v2309
      %2334 = vmatprep.subr.bf16.mxu0 0
      %2335 = vmatpush1.bf16.msra.mxu0 0
      %2336 = vmatprep.subr.bf16.mxu0 0
      %2337 = vmatpush1.bf16.msra.mxu0 0
      %2338 = vmatprep.subr.bf16.mxu0 0
      %2339 = vmatpush1.bf16.msra.mxu0 0
      %2340 = vmatprep.subr.bf16.mxu0 0
      %2341 = vmatpush1.bf16.msra.mxu0 0
      %2342 = vmatprep.subr.bf16.mxu0 0
      %2343 = vmatpush1.bf16.msra.mxu0 0
      %2344 = vmatprep.subr.bf16.mxu0 0
      %2345 = vmatpush1.bf16.msra.mxu0 0
      %2346 = vmatprep.subr.bf16.mxu0 0
      %2347 = vmatpush1.bf16.msra.mxu0 0
      %2348 = vmatprep.subr.bf16.mxu0 0
      %2349 = vmatpush1.bf16.msra.mxu0 0
      %2350 = vmatprep.mubr.bf16.mxu0 0
      %2351 = vmatmul.mubr.bf16.gmra.mrb[0].mxu0 %v2249
      %v2352 = vpop.f32.mrb[0].mxu0
      %v2353 = vadd.f32 0.0, %v2352
      %v2354 = vpop.f32.mrb[0].mxu0
      %v2355 = vpop.f32.mrb[0].mxu0
      %v2356 = vadd.f32 0.0, %v2355
      %v2357 = vpop.f32.mrb[0].mxu0
      %2358 = vmatprep.mubr.bf16.mxu0 0
      %2359 = vmatmul.mubr.bf16.gmra.mrb[0].mxu0 %v2251
      %v2360 = vpop.f32.mrb[0].mxu0
      %v2361 = vadd.f32 0.0, %v2360
      %v2362 = vpop.f32.mrb[0].mxu0
      %v2363 = vpop.f32.mrb[0].mxu0
      %v2364 = vadd.f32 0.0, %v2363
      %v2365 = vpop.f32.mrb[0].mxu0
      %2366 = vmatprep.mubr.bf16.mxu0 0
      %2367 = vmatmul.mubr.bf16.gmra.mrb[0].mxu0 %v2253
      %v2368 = vpop.f32.mrb[0].mxu0
      %v2369 = vadd.f32 0.0, %v2368
      %v2370 = vpop.f32.mrb[0].mxu0
      %v2371 = vpop.f32.mrb[0].mxu0
      %v2372 = vadd.f32 0.0, %v2371
      %v2373 = vpop.f32.mrb[0].mxu0
      %2374 = vmatprep.mubr.bf16.mxu0 0
      %2375 = vmatmul.mubr.bf16.gmra.mrb[0].mxu0 %v2255
      %v2376 = vpop.f32.mrb[0].mxu0
      %v2377 = vadd.f32 0.0, %v2376
      %v2378 = vpop.f32.mrb[0].mxu0
      %v2379 = vpop.f32.mrb[0].mxu0
      %v2380 = vadd.f32 0.0, %v2379
      %v2381 = vpop.f32.mrb[0].mxu0
      %2382 = vmatprep.mubr.bf16.mxu0 0
      %2383 = vmatmul.mubr.bf16.gmra.mrb[0].mxu0 %v2257
      %v2384 = vpop.f32.mrb[0].mxu0
      %v2385 = vadd.f32 0.0, %v2384
      %v2386 = vpop.f32.mrb[0].mxu0
      %v2387 = vpop.f32.mrb[0].mxu0
      %v2388 = vadd.f32 0.0, %v2387
      %v2389 = vpop.f32.mrb[0].mxu0
      %2390 = vmatprep.mubr.bf16.mxu0 0
      %2391 = vmatmul.mubr.bf16.gmra.mrb[0].mxu0 %v2259
      %v2392 = vpop.f32.mrb[0].mxu0
      %v2393 = vadd.f32 0.0, %v2392
      %v2394 = vpop.f32.mrb[0].mxu0
      %v2395 = vpop.f32.mrb[0].mxu0
      %v2396 = vadd.f32 0.0, %v2395
      %v2397 = vpop.f32.mrb[0].mxu0
      %2398 = vmatprep.mubr.bf16.mxu0 0
      %2399 = vmatmul.mubr.bf16.gmra.mrb[0].mxu0 %v2261
      %v2400 = vpop.f32.mrb[0].mxu0
      %v2401 = vadd.f32 0.0, %v2400
      %v2402 = vpop.f32.mrb[0].mxu0
      %v2403 = vpop.f32.mrb[0].mxu0
      %v2404 = vadd.f32 0.0, %v2403
      %v2405 = vpop.f32.mrb[0].mxu0
      %2406 = vmatprep.mubr.bf16.mxu0 0
      %2407 = vmatmul.mubr.bf16.gmra.mrb[0].mxu0 %v2260
      %v2408 = vpop.f32.mrb[0].mxu0
      %v2409 = vadd.f32 0.0, %v2408
      %v2410 = vpop.f32.mrb[0].mxu0
      %v2411 = vpop.f32.mrb[0].mxu0
      %v2412 = vpop.f32.mrb[0].mxu0
      %2413 = vdwg.mxu0
      %v2414 = vadd.f32 %v2206, %v2353
      %v2415 = vadd.f32 %v2207, %v2356
      %v2416 = vadd.f32 %v2208, %v2361
      %v2417 = vadd.f32 %v2209, %v2364
      %v2418 = vadd.f32 %v2210, %v2369
      %v2419 = vadd.f32 %v2211, %v2372
      %v2420 = vadd.f32 %v2212, %v2377
      %v2421 = vadd.f32 %v2213, %v2380
      %v2422 = vadd.f32 %v2214, %v2385
      %v2423 = vadd.f32 %v2215, %v2388
      %v2424 = vadd.f32 %v2216, %v2393
      %v2425 = vadd.f32 %v2217, %v2396
      %v2426 = vadd.f32 %v2218, %v2401
      %v2427 = vadd.f32 %v2219, %v2404
      %v2428 = vadd.f32 %v2220, %v2409
      %v2429 = vld [vmem:[%s1 + $0x11] sm:$0xff]
      %v2430 = vld [vmem:[%s1 + $0x19] sm:$0xff]
      %v2431 = vld [vmem:[%s1 + $0x21] sm:$0xff]
      %v2432 = vld [vmem:[%s1 + $0x29] sm:$0xff]
      %v2433 = vld [vmem:[%s1 + $0x31] sm:$0xff]
      %v2434 = vld [vmem:[%s1 + $0x39] sm:$0xff]
      %v2435 = vld [vmem:[%s1 + $0x41] sm:$0xff]
      %v2436 = vld [vmem:[%s1 + $0x49] sm:$0xff]
      %v2437 = vld [vmem:[%s1 + $0x51] sm:$0xff]
      %v2438 = vld [vmem:[%s1 + $0x59] sm:$0xff]
      %v2439 = vld [vmem:[%s1 + $0x61] sm:$0xff]
      %v2440 = vld [vmem:[%s1 + $0x69] sm:$0xff]
      %v2441 = vld [vmem:[%s1 + $0x71] sm:$0xff]
      %v2442 = vld [vmem:[%s1 + $0x79] sm:$0xff]
      %v2443 = vld [vmem:[%s1 + $0x81] sm:$0xff]
      %2445 = vset.pattern.permute.xlu0 0
      %2446 = vperm.xlu0 %2445, %v2429
      %v2447 = vpop.permute.xlu0 %2446
      %2450 = vset.pattern.permute.xlu0 0
      %2451 = vperm.xlu0 %2450, %v2430
      %v2452 = vpop.permute.xlu0 %2451
      %2455 = vset.pattern.permute.xlu0 0
      %2456 = vperm.xlu0 %2455, %v2431
      %v2457 = vpop.permute.xlu0 %2456
      %2460 = vset.pattern.permute.xlu0 0
      %2461 = vperm.xlu0 %2460, %v2432
      %v2462 = vpop.permute.xlu0 %2461
      %2465 = vset.pattern.permute.xlu0 0
      %2466 = vperm.xlu0 %2465, %v2433
      %v2467 = vpop.permute.xlu0 %2466
      %2470 = vset.pattern.permute.xlu0 0
      %2471 = vperm.xlu0 %2470, %v2434
      %v2472 = vpop.permute.xlu0 %2471
      %2475 = vset.pattern.permute.xlu0 0
      %2476 = vperm.xlu0 %2475, %v2435
      %v2477 = vpop.permute.xlu0 %2476
      %2480 = vset.pattern.permute.xlu0 0
      %2481 = vperm.xlu0 %2480, %v2436
      %v2482 = vpop.permute.xlu0 %2481
      %2485 = vset.pattern.permute.xlu0 0
      %2486 = vperm.xlu0 %2485, %v2437
      %v2487 = vpop.permute.xlu0 %2486
      %2490 = vset.pattern.permute.xlu0 0
      %2491 = vperm.xlu0 %2490, %v2438
      %v2492 = vpop.permute.xlu0 %2491
      %2495 = vset.pattern.permute.xlu0 0
      %2496 = vperm.xlu0 %2495, %v2439
      %v2497 = vpop.permute.xlu0 %2496
      %2500 = vset.pattern.permute.xlu0 0
      %2501 = vperm.xlu0 %2500, %v2440
      %v2502 = vpop.permute.xlu0 %2501
      %2505 = vset.pattern.permute.xlu0 0
      %2506 = vperm.xlu0 %2505, %v2441
      %v2507 = vpop.permute.xlu0 %2506
      %2510 = vset.pattern.permute.xlu0 0
      %2511 = vperm.xlu0 %2510, %v2442
      %v2512 = vpop.permute.xlu0 %2511
      %2515 = vset.pattern.permute.xlu0 0
      %2516 = vperm.xlu0 %2515, %v2443
      %v2517 = vpop.permute.xlu0 %2516
      %v2519 = vmul.f32 %v2414, %v2447
      %v2520 = vmul.f32 %v2415, %v2452
      %v2521 = vmul.f32 %v2416, %v2457
      %v2522 = vmul.f32 %v2417, %v2462
      %v2523 = vmul.f32 %v2418, %v2467
      %v2524 = vmul.f32 %v2419, %v2472
      %v2525 = vmul.f32 %v2420, %v2477
      %v2526 = vmul.f32 %v2421, %v2482
      %v2527 = vmul.f32 %v2422, %v2487
      %v2528 = vmul.f32 %v2423, %v2492
      %v2529 = vmul.f32 %v2424, %v2497
      %v2530 = vmul.f32 %v2425, %v2502
      %v2531 = vmul.f32 %v2426, %v2507
      %v2532 = vmul.f32 %v2427, %v2512
      %v2533 = vmul.f32 %v2428, %v2517
      %v2534 = vpack.c.bf16 %v2520, %v2519
      %v2535 = vpack.c.bf16 %v2522, %v2521
      %v2536 = vpack.c.bf16 %v2524, %v2523
      %v2537 = vpack.c.bf16 %v2526, %v2525
      %v2538 = vpack.c.bf16 %v2528, %v2527
      %v2539 = vpack.c.bf16 %v2530, %v2529
      %v2540 = vpack.c.bf16 %v2532, %v2531
      %v2541 = vpack.c.bf16 %v2533, %v2533
      %v2550 = vunpack.c.l.b16 %v2534
      %v2551 = vunpack.c.h.b16 %v2534
      %v2552 = vunpack.c.l.b16 %v2535
      %v2553 = vunpack.c.h.b16 %v2535
      %v2554 = vunpack.c.l.b16 %v2536
      %v2555 = vunpack.c.h.b16 %v2536
      %v2556 = vunpack.c.l.b16 %v2537
      %v2557 = vunpack.c.h.b16 %v2537
      %v2558 = vunpack.c.l.b16 %v2538
      %v2559 = vunpack.c.h.b16 %v2538
      %v2560 = vunpack.c.l.b16 %v2539
      %v2561 = vunpack.c.h.b16 %v2539
      %v2562 = vunpack.c.l.b16 %v2540
      %v2563 = vunpack.c.h.b16 %v2540
      %v2564 = vunpack.c.l.b16 %v2541
      %v2565 = vpack.c.b16 %v2550, %v2550
      %v2566 = vpack.c.b16 %v2551, %v2551
      %v2567 = vpack.c.b16 %v2552, %v2552
      %v2568 = vpack.c.b16 %v2553, %v2553
      %v2569 = vpack.c.b16 %v2554, %v2554
      %v2570 = vpack.c.b16 %v2555, %v2555
      %v2571 = vpack.c.b16 %v2556, %v2556
      %v2572 = vpack.c.b16 %v2557, %v2557
      %v2573 = vpack.c.b16 %v2558, %v2558
      %v2574 = vpack.c.b16 %v2559, %v2559
      %v2575 = vpack.c.b16 %v2560, %v2560
      %v2576 = vpack.c.b16 %v2561, %v2561
      %v2577 = vpack.c.b16 %v2562, %v2562
      %v2578 = vpack.c.b16 %v2563, %v2563
      %v2579 = vpack.c.b16 %v2564, %v2564
      %2595 = vst [vmem:[%s258] sm:$0xf] %v2565
      %2596 = vst [vmem:[%s258 + $0x4] sm:$0xf] %v2566
      %2597 = vst [vmem:[%s258 + $0x8] sm:$0xf] %v2567
      %2598 = vst [vmem:[%s258 + $0xc] sm:$0xf] %v2568
      %2599 = vst [vmem:[%s258 + $0x10] sm:$0xf] %v2569
      %2600 = vst [vmem:[%s258 + $0x14] sm:$0xf] %v2570
      %2601 = vst [vmem:[%s258 + $0x18] sm:$0xf] %v2571
      %2602 = vst [vmem:[%s258 + $0x1c] sm:$0xf] %v2572
      %2603 = vst [vmem:[%s258 + $0x20] sm:$0xf] %v2573
      %2604 = vst [vmem:[%s258 + $0x24] sm:$0xf] %v2574
      %2605 = vst [vmem:[%s258 + $0x28] sm:$0xf] %v2575
      %2606 = vst [vmem:[%s258 + $0x2c] sm:$0xf] %v2576
      %2607 = vst [vmem:[%s258 + $0x30] sm:$0xf] %v2577
      %2608 = vst [vmem:[%s258 + $0x34] sm:$0xf] %v2578
      %2609 = vst [vmem:[%s258 + $0x38] sm:$0xf] %v2579
      %v2610 = vadd.f32 %v2519, %v2520
      %v2611 = vadd.f32 %v2610, %v2521
      %v2612 = vadd.f32 %v2611, %v2522
      %v2613 = vadd.f32 %v2612, %v2523
      %v2614 = vadd.f32 %v2613, %v2524
      %v2615 = vadd.f32 %v2614, %v2525
      %v2616 = vadd.f32 %v2615, %v2526
      %v2617 = vadd.f32 %v2616, %v2527
      %v2618 = vadd.f32 %v2617, %v2528
      %v2619 = vadd.f32 %v2618, %v2529
      %v2620 = vadd.f32 %v2619, %v2530
      %v2621 = vadd.f32 %v2620, %v2531
      %v2622 = vadd.f32 %v2621, %v2532
      %v2623 = vadd.f32 %v2622, %v2533
      %v2624 = vrot.slane %v2623, 4
      %v2625 = vadd.f32 %v2623, %v2624
      %v2626 = vrot.slane %v2625, 2
      %v2627 = vadd.f32 %v2625, %v2626
      %v2628 = vrot.slane %v2627, 1
      %v2629 = vadd.f32 %v2627, %v2628
      %2630 = vst [vmem:[%s262] sm:$0x1] %v2629
      %v2631 = vmul.f32 %v2519, %v2414
      %v2632 = vmul.f32 %v2520, %v2415
      %v2633 = vmul.f32 %v2521, %v2416
      %v2634 = vmul.f32 %v2522, %v2417
      %v2635 = vmul.f32 %v2523, %v2418
      %v2636 = vmul.f32 %v2524, %v2419
      %v2637 = vmul.f32 %v2525, %v2420
      %v2638 = vmul.f32 %v2526, %v2421
      %v2639 = vmul.f32 %v2527, %v2422
      %v2640 = vmul.f32 %v2528, %v2423
      %v2641 = vmul.f32 %v2529, %v2424
      %v2642 = vmul.f32 %v2530, %v2425
      %v2643 = vmul.f32 %v2531, %v2426
      %v2644 = vmul.f32 %v2532, %v2427
      %v2645 = vmul.f32 %v2533, %v2428
      %v2646 = vadd.f32 %v2631, %v2632
      %v2647 = vadd.f32 %v2646, %v2633
      %v2648 = vadd.f32 %v2647, %v2634
      %v2649 = vadd.f32 %v2648, %v2635
      %v2650 = vadd.f32 %v2649, %v2636
      %v2651 = vadd.f32 %v2650, %v2637
      %v2652 = vadd.f32 %v2651, %v2638
      %v2653 = vadd.f32 %v2652, %v2639
      %v2654 = vadd.f32 %v2653, %v2640
      %v2655 = vadd.f32 %v2654, %v2641
      %v2656 = vadd.f32 %v2655, %v2642
      %v2657 = vadd.f32 %v2656, %v2643
      %v2658 = vadd.f32 %v2657, %v2644
      %v2659 = vadd.f32 %v2658, %v2645
      %v2660 = vrot.slane %v2659, 4
      %v2661 = vadd.f32 %v2659, %v2660
      %v2662 = vrot.slane %v2661, 2
      %v2663 = vadd.f32 %v2661, %v2662
      %v2664 = vrot.slane %v2663, 1
      %v2665 = vadd.f32 %v2663, %v2664
      %2666 = vst [vmem:[%s262 + $0x1] sm:$0x1] %v2665
      %p2667 = scmp.lt.s32.totalorder %s18, 1
      %s2668 = scalar_select %p2667, %s18, 1
      %s2669 = smul.addr %s2668, 15
      %s2670 = smul.addr %s2669, 4
      %s2671 = scalar_lea.vmem %s5, %s2670
      %p2672 = scmp.lt.s32.totalorder %s18, 1
      %s2673 = scalar_select %p2672, %s18, 1
      %s2674 = smul.addr %s2673, 2
      %s2675 = scalar_lea.vmem %s6, %s2674
      // Predicated region
      $region41: #{basic_block_forward.4} parent=39 // pred_check
        %p2676 = pneg %p146
      $region42: #{basic_block_forward.4} parent=39 // pred_check_branch
        %2678 = sbr.rel (%p2676) target = $region44
      $region43: #{basic_block_forward.4} parent=39 // pred_region
        _
      $region44: #{basic_block_forward.4} parent=39 // pred_fallthru
        _
      // Predicated region
      $region45: #{basic_block_forward.4} parent=39 // pred_check
        %p2679 = pneg %p172
      $region46: #{basic_block_forward.4} parent=39 // pred_check_branch
        %2681 = sbr.rel (%p2679) target = $region48
      $region47: #{basic_block_forward.4} parent=39 // pred_region
        _
      $region48: #{basic_block_forward.4} parent=39 // pred_fallthru
        _
    $region40: #{basic_block_forward.4} parent=5 // pred_fallthru
      _
    %p2682 = scmp.le.s32.totalorder 2, %s13
    // Predicated region
    $region49: #{basic_block_forward.4} parent=5 // pred_check
      %p2683 = pneg %p2682
    $region50: #{basic_block_forward.4} parent=5 // pred_check_branch
      %2685 = sbr.rel (%p2683) target = $region52
    $region51: #{basic_block_forward.4} parent=5 // pred_region
      %s2686 = ssub.s32 %s13, 2
      // Predicated region
      $region53: #{basic_block_forward.4} parent=51 // pred_check
        %p2687 = pneg %p152
      $region54: #{basic_block_forward.4} parent=51 // pred_check_branch
        %2689 = sbr.rel (%p2687) target = $region56
      $region55: #{basic_block_forward.4} parent=51 // pred_region
        %p2690 = scmp.lt.s32.totalorder %s19, 1
        %s2691 = scalar_select %p2690, %s19, 1
        %s2692 = smul.addr %s2691, 15
        %s2693 = smul.addr %s2692, 4
        %s2694 = scalar_lea.vmem %s5, %s2693
      $region56: #{basic_block_forward.4} parent=51 // pred_fallthru
        _
      // Predicated region
      $region57: #{basic_block_forward.4} parent=51 // pred_check
        %p2695 = pneg %p178
      $region58: #{basic_block_forward.4} parent=51 // pred_check_branch
        %2697 = sbr.rel (%p2695) target = $region60
      $region59: #{basic_block_forward.4} parent=51 // pred_region
        %p2698 = scmp.lt.s32.totalorder %s19, 1
        %s2699 = scalar_select %p2698, %s19, 1
        %s2700 = smul.addr %s2699, 2
        %s2701 = scalar_lea.vmem %s6, %s2700
      $region60: #{basic_block_forward.4} parent=51 // pred_fallthru
        _
    $region52: #{basic_block_forward.4} parent=5 // pred_fallthru
      _
  $region6: #{basic_block_forward.4} parent=0 // loop_footer
    %s17 = sadd.s32 1, %s13
  $region7: #{basic_block_forward.4} parent=0 // loop_footer_branch
    %12 = sbr.rel target = $region3
  $region8: #{basic_block_forward.4} parent=0 // loop_exit
    _

</llo_original>
